<compile_context>
chip_gen: v7x
topology: tpu7x:2x2x1
jax: 0.10.0
libtpu: 0.0.40
codegen_flags: <defaults>
</compile_context>

<pallas_src>
import numpy as np
import jax
import jax.numpy as jnp
from jax import lax
from jax.experimental import pallas as pl
from jax.experimental.pallas import tpu as pltpu  # noqa: F401  (TPU backend)

# ---- model hyper-parameters (the `args` dict of the PyTorch module) -----------
D_MODEL = 32
NHEAD = 4
HEAD_DIM = D_MODEL // NHEAD
DIM_FF = 64
ADAPTER_DIM = 16
LN_EPS = 1e-5
NEG_INF = -1e9

SEQ = 8                # target sequence length
SEQ_MEM = 16           # memory (encoder) sequence length
BATCH = 2


# =============================== fused Pallas kernel ===========================

def _fused_decoder_kernel(x_ref, mem_ref, smask_ref, cmask_ref,
                          wqkv_ref, attn_b_ref, wo_ref,
                          ff_w1_ref, ff_b1_ref, ff_w2_ref, ff_b2_ref,
                          ad_w1_ref, ad_b1_ref, ad_w2_ref, adln_ref,
                          out_ref):
    """Entire decoder layer (with adapters) on the (B*S, D) row-slab."""
    f32 = jnp.float32
    bf16 = jnp.bfloat16

    x = x_ref[...]                       # (R,  D) f32,  R  = B*S
    mem16 = mem_ref[...].astype(bf16)    # (Rm, D) bf16, Rm = B*Sm
    smask = smask_ref[...]               # (R, R)  additive causal + batch mask
    cmask = cmask_ref[...]               # (R, Rm) additive batch mask

    def attention(a, q_in16, kv_in16, mask):
        # one matmul each for q/k/v over the whole slab; 1/sqrt(head_dim) is
        # already folded into the q weights & bias.
        q = jnp.dot(q_in16, wqkv_ref[a, 0], preferred_element_type=f32) + attn_b_ref[a, 0]
        k = jnp.dot(kv_in16, wqkv_ref[a, 1], preferred_element_type=f32) + attn_b_ref[a, 1]
        v = jnp.dot(kv_in16, wqkv_ref[a, 2], preferred_element_type=f32) + attn_b_ref[a, 2]
        q16, k16, v16 = q.astype(bf16), k.astype(bf16), v.astype(bf16)

        o = None
        for h in range(NHEAD):                        # static unroll over heads
            sl = slice(h * HEAD_DIM, (h + 1) * HEAD_DIM)
            qh, kh, vh = q16[:, sl], k16[:, sl], v16[:, sl]
            # transposed-RHS contraction: no explicit kh.T relayout
            s = lax.dot_general(qh, kh, (((1,), (1,)), ((), ())),
                                preferred_element_type=f32) + mask
            s = s - jnp.max(s, axis=-1, keepdims=True)
            p = jnp.exp(s)
            p = p * pl.reciprocal(jnp.sum(p, axis=-1, keepdims=True), approx=True)
            ph = jnp.dot(p.astype(bf16), vh, preferred_element_type=f32)
            # per-head out-projection accumulated in f32 (no lane concat)
            contrib = jnp.dot(ph.astype(bf16), wo_ref[a, h], preferred_element_type=f32)
            o = contrib if o is None else o + contrib
        return o + attn_b_ref[a, 3]

    def adapter_ln(i, x_in, z):
        """LayerNorm(x + Adapter_i(z)); Adapter(z) = relu(z W1^T + b1) W2^T + b2 + z."""
        z16 = z.astype(bf16)
        h = jnp.maximum(
            jnp.dot(z16, ad_w1_ref[i], preferred_element_type=f32) + ad_b1_ref[i], 0.0)
        adapter = (jnp.dot(h.astype(bf16), ad_w2_ref[i], preferred_element_type=f32)
                   + adln_ref[i, 0] + z)
        s = x_in + adapter
        mu = jnp.mean(s, axis=-1, keepdims=True)
        var = jnp.mean((s - mu) ** 2, axis=-1, keepdims=True)
        return (s - mu) * lax.rsqrt(var + LN_EPS) * adln_ref[i, 1] + adln_ref[i, 2]

    # ---- x = norm1(x + Adapter1(self_attn(x)))  (causal + batch mask) --------
    x16 = x.astype(bf16)
    sa = attention(0, x16, x16, smask)
    x = adapter_ln(0, x, sa)
    # ---- x = norm2(x + Adapter2(cross_attn(x, memory)))  (batch mask only) ---
    ca = attention(1, x.astype(bf16), mem16, cmask)
    x = adapter_ln(1, x, ca)
    # ---- x = norm3(x + Adapter3(FFN(x))) --------------------------------------
    x16 = x.astype(bf16)
    hmid = jnp.maximum(
        jnp.dot(x16, ff_w1_ref[...], preferred_element_type=f32) + ff_b1_ref[...], 0.0)
    ff = jnp.dot(hmid.astype(bf16), ff_w2_ref[...], preferred_element_type=f32) + ff_b2_ref[...]
    x = adapter_ln(2, x, ff)

    out_ref[...] = x                     # single dense (B*S, D) store


# ============================== wrapper / pallas_call ==========================

@jax.jit
def pallas_forward(prep, x_sbd, memory_sbd, tgt_mask):
    """Fused forward; inputs/outputs in PyTorch (S, B, D) layout."""
    S, B, D = x_sbd.shape
    Sm = memory_sbd.shape[0]
    # fold batch into the row (sublane) dimension: row r = s*B + b (free reshape)
    x2d = x_sbd.reshape(S * B, D)
    mem2d = memory_sbd.reshape(Sm * B, D)

    bx = jnp.arange(S * B) % B
    sx = jnp.arange(S * B) // B
    bm = jnp.arange(Sm * B) % B
    # block-"diagonal" additive masks kill cross-batch attention (built outside kernel)
    self_mask = jnp.where(bx[:, None] == bx[None, :],
                          tgt_mask[sx[:, None], sx[None, :]], NEG_INF).astype(jnp.float32)
    cross_mask = jnp.where(bx[:, None] == bm[None, :], 0.0, NEG_INF).astype(jnp.float32)

    out2d = pl.pallas_call(
        _fused_decoder_kernel,
        out_shape=jax.ShapeDtypeStruct((S * B, D), jnp.float32),
        # grid-less: whole working set (<100 KB) lives in VMEM in one step.
        # TODO(synk): at non-toy sizes add a row-tiled grid with
        # dimension_semantics=("parallel",) so v7x's second TensorCore is used.
    )(x2d, mem2d, self_mask, cross_mask,
      prep["attn_wqkv"], prep["attn_b"], prep["attn_wo"],
      prep["ff_w1T"], prep["ff_b1"], prep["ff_w2T"], prep["ff_b2"],
      prep["ad_w1T"], prep["ad_b1"], prep["ad_w2T"], prep["adln"])
    return out2d.reshape(S, B, D)


# ================================ parameters ===================================

def init_params(key):
    keys = iter(jax.random.split(key, 128))

    def linear(out_dim, in_dim):
        bound = 1.0 / (in_dim ** 0.5)
        w = jax.random.uniform(next(keys), (out_dim, in_dim), jnp.float32, -bound, bound)
        b = jax.random.uniform(next(keys), (out_dim,), jnp.float32, -bound, bound)
        return w, b

    p = {}
    for prefix in ("sa", "ca"):
        for name in ("q", "k", "v", "o"):
            w, b = linear(D_MODEL, D_MODEL)
            p[f"{prefix}_w{name}"], p[f"{prefix}_b{name}"] = w, b
    p["ff_w1"], p["ff_b1"] = linear(DIM_FF, D_MODEL)
    p["ff_w2"], p["ff_b2"] = linear(D_MODEL, DIM_FF)
    for i in (1, 2, 3):
        p[f"ad{i}_w1"], p[f"ad{i}_b1"] = linear(ADAPTER_DIM, D_MODEL)
        p[f"ad{i}_w2"], p[f"ad{i}_b2"] = linear(D_MODEL, ADAPTER_DIM)
    for i in (1, 2, 3):
        p[f"ln{i}_g"] = 1.0 + 0.1 * jax.random.normal(next(keys), (D_MODEL,), jnp.float32)
        p[f"ln{i}_b"] = 0.1 * jax.random.normal(next(keys), (D_MODEL,), jnp.float32)
    return p


def prepare_pallas_params(p):
    """Pre-transpose / pack / cast weights ONCE (hoisted out of the hot path)."""
    scale = 1.0 / (HEAD_DIM ** 0.5)

    def attn_pack(prefix):
        wq = (p[f"{prefix}_wq"] * scale).T                       # scale folded into q
        wk = p[f"{prefix}_wk"].T
        wv = p[f"{prefix}_wv"].T
        wqkv = jnp.stack([wq, wk, wv])                           # (3, D, D)
        b = jnp.stack([p[f"{prefix}_bq"] * scale, p[f"{prefix}_bk"],
                       p[f"{prefix}_bv"], p[f"{prefix}_bo"]])[:, None, :]   # (4, 1, D)
        woH = p[f"{prefix}_wo"].T.reshape(NHEAD, HEAD_DIM, D_MODEL)          # (H, Hd, D)
        return wqkv, b, woH

    sa_wqkv, sa_b, sa_wo = attn_pack("sa")
    ca_wqkv, ca_b, ca_wo = attn_pack("ca")
    adln = jnp.stack([jnp.stack([p[f"ad{i}_b2"], p[f"ln{i}_g"], p[f"ln{i}_b"]])[:, None, :]
                      for i in (1, 2, 3)])                       # (3, 3, 1, D)
    return {
        "attn_wqkv": jnp.stack([sa_wqkv, ca_wqkv]).astype(jnp.bfloat16),   # (2,3,D,D)
        "attn_b": jnp.stack([sa_b, ca_b]).astype(jnp.float32),             # (2,4,1,D)
        "attn_wo": jnp.stack([sa_wo, ca_wo]).astype(jnp.bfloat16),         # (2,H,Hd,D)
        "ff_w1T": p["ff_w1"].T.astype(jnp.bfloat16),                       # (D, FF)
        "ff_b1": p["ff_b1"][None, :],                                      # (1, FF)
        "ff_w2T": p["ff_w2"].T.astype(jnp.bfloat16),                       # (FF, D)
        "ff_b2": p["ff_b2"][None, :],                                      # (1, D)
        "ad_w1T": jnp.stack([p[f"ad{i}_w1"].T for i in (1, 2, 3)]).astype(jnp.bfloat16),  # (3,D,A)
        "ad_b1": jnp.stack([p[f"ad{i}_b1"][None, :] for i in (1, 2, 3)]),  # (3,1,A)
        "ad_w2T": jnp.stack([p[f"ad{i}_w2"].T for i in (1, 2, 3)]).astype(jnp.bfloat16),  # (3,A,D)
        "adln": adln,                                                       # (3,3,1,D)
    }


# ============================ pure-JAX f32 reference ===========================

def reference_forward(p, x_sbd, memory_sbd, tgt_mask):
    x = jnp.transpose(x_sbd, (1, 0, 2))
    mem = jnp.transpose(memory_sbd, (1, 0, 2))

    def mha(prefix, xq, xkv, mask):
        B, Sq, D = xq.shape
        Skv = xkv.shape[1]
        q = xq @ p[f"{prefix}_wq"].T + p[f"{prefix}_bq"]
        k = xkv @ p[f"{prefix}_wk"].T + p[f"{prefix}_bk"]
        v = xkv @ p[f"{prefix}_wv"].T + p[f"{prefix}_bv"]
        q = q.reshape(B, Sq, NHEAD, HEAD_DIM).transpose(0, 2, 1, 3)
        k = k.reshape(B, Skv, NHEAD, HEAD_DIM).transpose(0, 2, 1, 3)
        v = v.reshape(B, Skv, NHEAD, HEAD_DIM).transpose(0, 2, 1, 3)
        s = jnp.einsum("bhqd,bhkd->bhqk", q, k) / (HEAD_DIM ** 0.5) + mask
        a = jax.nn.softmax(s, axis=-1)
        o = jnp.einsum("bhqk,bhkd->bhqd", a, v).transpose(0, 2, 1, 3).reshape(B, Sq, D)
        return o @ p[f"{prefix}_wo"].T + p[f"{prefix}_bo"]

    def adapter(i, z):
        h = jax.nn.relu(z @ p[f"ad{i}_w1"].T + p[f"ad{i}_b1"])
        return h @ p[f"ad{i}_w2"].T + p[f"ad{i}_b2"] + z

    def ln(i, s):
        mu = jnp.mean(s, axis=-1, keepdims=True)
        var = jnp.mean((s - mu) ** 2, axis=-1, keepdims=True)
        return (s - mu) / jnp.sqrt(var + LN_EPS) * p[f"ln{i}_g"] + p[f"ln{i}_b"]

    x = ln(1, x + adapter(1, mha("sa", x, x, tgt_mask)))
    x = ln(2, x + adapter(2, mha("ca", x, mem, 0.0)))
    ff = jax.nn.relu(x @ p["ff_w1"].T + p["ff_b1"]) @ p["ff_w2"].T + p["ff_b2"]
    x = ln(3, x + adapter(3, ff))
    return jnp.transpose(x, (1, 0, 2))


# ==================================== main =====================================

if __name__ == "__main__":
    key = jax.random.PRNGKey(0)
    kp, kx, km = jax.random.split(key, 3)

    params = init_params(kp)
    prep = prepare_pallas_params(params)   # weights transposed/packed/bf16-cast once

    # PyTorch layout (batch_first=False): (S, B, D)
    x = jax.random.normal(kx, (SEQ, BATCH, D_MODEL), jnp.float32)
    memory = jax.random.normal(km, (SEQ_MEM, BATCH, D_MODEL), jnp.float32)
    # additive causal mask (float): 0 on/below diagonal, -1e9 above
    idx = jnp.arange(SEQ)
    tgt_mask = jnp.where(idx[None, :] > idx[:, None], NEG_INF, 0.0).astype(jnp.float32)

    out = pallas_forward(prep, x, memory, tgt_mask)
    out = jax.block_until_ready(out)

    assert out.shape == (SEQ, BATCH, D_MODEL)
    assert bool(jnp.all(jnp.isfinite(out)))

    ref = reference_forward(params, x, memory, tgt_mask)
    # bf16 MXU operands + approx reciprocal -> slightly looser than exact-f32 check
    np.testing.assert_allclose(np.asarray(out), np.asarray(ref), rtol=3e-2, atol=3e-2)

    print("KERNEL_OK")
</pallas_src>

<mosaic_0001>
module attributes {stable_mosaic.version = 11 : i64} {
  func.func @_fused_decoder_kernel(%arg0: memref<16x32xf32, #tpu.memory_space<vmem>>, %arg1: memref<32x32xf32, #tpu.memory_space<vmem>>, %arg2: memref<16x16xf32, #tpu.memory_space<vmem>>, %arg3: memref<16x32xf32, #tpu.memory_space<vmem>>, %arg4: memref<2x3x32x32xbf16, #tpu.memory_space<vmem>>, %arg5: memref<2x4x1x32xf32, #tpu.memory_space<vmem>>, %arg6: memref<2x4x8x32xbf16, #tpu.memory_space<vmem>>, %arg7: memref<32x64xbf16, #tpu.memory_space<vmem>>, %arg8: memref<1x64xf32, #tpu.memory_space<vmem>>, %arg9: memref<64x32xbf16, #tpu.memory_space<vmem>>, %arg10: memref<1x32xf32, #tpu.memory_space<vmem>>, %arg11: memref<3x32x16xbf16, #tpu.memory_space<vmem>>, %arg12: memref<3x1x16xf32, #tpu.memory_space<vmem>>, %arg13: memref<3x16x32xbf16, #tpu.memory_space<vmem>>, %arg14: memref<3x3x1x32xf32, #tpu.memory_space<vmem>>, %arg15: memref<16x32xf32, #tpu.memory_space<vmem>>) attributes {dimension_semantics = [], scalar_prefetch = 0 : i64, scratch_operands = 0 : i64, tpu.core_type = #tpu.core_type<tc>} {
    %c0 = arith.constant 0 : index
    %c0_0 = arith.constant 0 : index
    %0 = vector.load %arg0[%c0, %c0_0] : memref<16x32xf32, #tpu.memory_space<vmem>>, vector<16x32xf32>
    %c0_1 = arith.constant 0 : index
    %c0_2 = arith.constant 0 : index
    %1 = vector.load %arg1[%c0_1, %c0_2] : memref<32x32xf32, #tpu.memory_space<vmem>>, vector<32x32xf32>
    %2 = arith.truncf %1 : vector<32x32xf32> to vector<32x32xbf16>
    %c0_3 = arith.constant 0 : index
    %c0_4 = arith.constant 0 : index
    %3 = vector.load %arg2[%c0_3, %c0_4] : memref<16x16xf32, #tpu.memory_space<vmem>>, vector<16x16xf32>
    %c0_5 = arith.constant 0 : index
    %c0_6 = arith.constant 0 : index
    %4 = vector.load %arg3[%c0_5, %c0_6] : memref<16x32xf32, #tpu.memory_space<vmem>>, vector<16x32xf32>
    %5 = arith.truncf %0 : vector<16x32xf32> to vector<16x32xbf16>
    %c0_7 = arith.constant 0 : index
    %c0_8 = arith.constant 0 : index
    %c0_9 = arith.constant 0 : index
    %c0_10 = arith.constant 0 : index
    %6 = vector.load %arg4[%c0_7, %c0_8, %c0_9, %c0_10] : memref<2x3x32x32xbf16, #tpu.memory_space<vmem>>, vector<1x1x32x32xbf16>
    %7 = vector.shape_cast %6 : vector<1x1x32x32xbf16> to vector<32x32xbf16>
    %cst = arith.constant dense<0.000000e+00> : vector<16x32xf32>
    %8 = tpu.matmul %5, %7, %cst {dimension_numbers = #tpu.dot_dimension_numbers<[1], [0], [0], [1], [0, 0, 1, 1], [], []>} : vector<16x32xbf16>, vector<32x32xbf16>, vector<16x32xf32> -> vector<16x32xf32>
    %c0_11 = arith.constant 0 : index
    %c0_12 = arith.constant 0 : index
    %c0_13 = arith.constant 0 : index
    %c0_14 = arith.constant 0 : index
    %9 = vector.load %arg5[%c0_11, %c0_12, %c0_13, %c0_14] : memref<2x4x1x32xf32, #tpu.memory_space<vmem>>, vector<1x1x1x32xf32>
    %10 = vector.shape_cast %9 : vector<1x1x1x32xf32> to vector<1x32xf32>
    %11 = vector.broadcast %10 : vector<1x32xf32> to vector<16x32xf32>
    %12 = arith.addf %8, %11 : vector<16x32xf32>
    %c0_15 = arith.constant 0 : index
    %c1 = arith.constant 1 : index
    %c0_16 = arith.constant 0 : index
    %c0_17 = arith.constant 0 : index
    %13 = vector.load %arg4[%c0_15, %c1, %c0_16, %c0_17] : memref<2x3x32x32xbf16, #tpu.memory_space<vmem>>, vector<1x1x32x32xbf16>
    %14 = vector.shape_cast %13 : vector<1x1x32x32xbf16> to vector<32x32xbf16>
    %cst_18 = arith.constant dense<0.000000e+00> : vector<16x32xf32>
    %15 = tpu.matmul %5, %14, %cst_18 {dimension_numbers = #tpu.dot_dimension_numbers<[1], [0], [0], [1], [0, 0, 1, 1], [], []>} : vector<16x32xbf16>, vector<32x32xbf16>, vector<16x32xf32> -> vector<16x32xf32>
    %c0_19 = arith.constant 0 : index
    %c1_20 = arith.constant 1 : index
    %c0_21 = arith.constant 0 : index
    %c0_22 = arith.constant 0 : index
    %16 = vector.load %arg5[%c0_19, %c1_20, %c0_21, %c0_22] : memref<2x4x1x32xf32, #tpu.memory_space<vmem>>, vector<1x1x1x32xf32>
    %17 = vector.shape_cast %16 : vector<1x1x1x32xf32> to vector<1x32xf32>
    %18 = vector.broadcast %17 : vector<1x32xf32> to vector<16x32xf32>
    %19 = arith.addf %15, %18 : vector<16x32xf32>
    %c0_23 = arith.constant 0 : index
    %c2 = arith.constant 2 : index
    %c0_24 = arith.constant 0 : index
    %c0_25 = arith.constant 0 : index
    %20 = vector.load %arg4[%c0_23, %c2, %c0_24, %c0_25] : memref<2x3x32x32xbf16, #tpu.memory_space<vmem>>, vector<1x1x32x32xbf16>
    %21 = vector.shape_cast %20 : vector<1x1x32x32xbf16> to vector<32x32xbf16>
    %cst_26 = arith.constant dense<0.000000e+00> : vector<16x32xf32>
    %22 = tpu.matmul %5, %21, %cst_26 {dimension_numbers = #tpu.dot_dimension_numbers<[1], [0], [0], [1], [0, 0, 1, 1], [], []>} : vector<16x32xbf16>, vector<32x32xbf16>, vector<16x32xf32> -> vector<16x32xf32>
    %c0_27 = arith.constant 0 : index
    %c2_28 = arith.constant 2 : index
    %c0_29 = arith.constant 0 : index
    %c0_30 = arith.constant 0 : index
    %23 = vector.load %arg5[%c0_27, %c2_28, %c0_29, %c0_30] : memref<2x4x1x32xf32, #tpu.memory_space<vmem>>, vector<1x1x1x32xf32>
    %24 = vector.shape_cast %23 : vector<1x1x1x32xf32> to vector<1x32xf32>
    %25 = vector.broadcast %24 : vector<1x32xf32> to vector<16x32xf32>
    %26 = arith.addf %22, %25 : vector<16x32xf32>
    %27 = arith.truncf %12 : vector<16x32xf32> to vector<16x32xbf16>
    %28 = arith.truncf %19 : vector<16x32xf32> to vector<16x32xbf16>
    %29 = arith.truncf %26 : vector<16x32xf32> to vector<16x32xbf16>
    %30 = vector.extract_strided_slice %27 {offsets = [0, 0], sizes = [16, 8], strides = [1, 1]} : vector<16x32xbf16> to vector<16x8xbf16>
    %31 = vector.extract_strided_slice %28 {offsets = [0, 0], sizes = [16, 8], strides = [1, 1]} : vector<16x32xbf16> to vector<16x8xbf16>
    %32 = vector.extract_strided_slice %29 {offsets = [0, 0], sizes = [16, 8], strides = [1, 1]} : vector<16x32xbf16> to vector<16x8xbf16>
    %cst_31 = arith.constant dense<0.000000e+00> : vector<16x16xf32>
    %33 = tpu.matmul %30, %31, %cst_31 {dimension_numbers = #tpu.dot_dimension_numbers<[1], [1], [0], [0], [0, 0, 1, 0], [], []>} : vector<16x8xbf16>, vector<16x8xbf16>, vector<16x16xf32> -> vector<16x16xf32>
    %34 = arith.addf %33, %3 : vector<16x16xf32>
    %cst_32 = arith.constant dense<0xFF800000> : vector<16xf32>
    %35 = vector.multi_reduction <maximumf>, %34, %cst_32 [1] : vector<16x16xf32> to vector<16xf32>
    %36 = vector.shape_cast %35 : vector<16xf32> to vector<16x1xf32>
    %37 = vector.broadcast %36 : vector<16x1xf32> to vector<16x16xf32>
    %38 = arith.subf %34, %37 : vector<16x16xf32>
    %39 = math.exp %38 : vector<16x16xf32>
    %cst_33 = arith.constant dense<0.000000e+00> : vector<16xf32>
    %40 = vector.multi_reduction <add>, %39, %cst_33 [1] : vector<16x16xf32> to vector<16xf32>
    %41 = vector.shape_cast %40 : vector<16xf32> to vector<16x1xf32>
    %42 = tpu.reciprocal %41 {approx = true} : vector<16x1xf32> -> vector<16x1xf32>
    %43 = vector.broadcast %42 : vector<16x1xf32> to vector<16x16xf32>
    %44 = arith.mulf %39, %43 : vector<16x16xf32>
    %45 = arith.truncf %44 : vector<16x16xf32> to vector<16x16xbf16>
    %cst_34 = arith.constant dense<0.000000e+00> : vector<16x8xf32>
    %46 = tpu.matmul %45, %32, %cst_34 {dimension_numbers = #tpu.dot_dimension_numbers<[1], [0], [0], [1], [0, 0, 1, 1], [], []>} : vector<16x16xbf16>, vector<16x8xbf16>, vector<16x8xf32> -> vector<16x8xf32>
    %47 = arith.truncf %46 : vector<16x8xf32> to vector<16x8xbf16>
    %c0_35 = arith.constant 0 : index
    %c0_36 = arith.constant 0 : index
    %c0_37 = arith.constant 0 : index
    %c0_38 = arith.constant 0 : index
    %48 = vector.load %arg6[%c0_35, %c0_36, %c0_37, %c0_38] : memref<2x4x8x32xbf16, #tpu.memory_space<vmem>>, vector<1x1x8x32xbf16>
    %49 = vector.shape_cast %48 : vector<1x1x8x32xbf16> to vector<8x32xbf16>
    %cst_39 = arith.constant dense<0.000000e+00> : vector<16x32xf32>
    %50 = tpu.matmul %47, %49, %cst_39 {dimension_numbers = #tpu.dot_dimension_numbers<[1], [0], [0], [1], [0, 0, 1, 1], [], []>} : vector<16x8xbf16>, vector<8x32xbf16>, vector<16x32xf32> -> vector<16x32xf32>
    %51 = vector.extract_strided_slice %27 {offsets = [0, 8], sizes = [16, 8], strides = [1, 1]} : vector<16x32xbf16> to vector<16x8xbf16>
    %52 = vector.extract_strided_slice %28 {offsets = [0, 8], sizes = [16, 8], strides = [1, 1]} : vector<16x32xbf16> to vector<16x8xbf16>
    %53 = vector.extract_strided_slice %29 {offsets = [0, 8], sizes = [16, 8], strides = [1, 1]} : vector<16x32xbf16> to vector<16x8xbf16>
    %cst_40 = arith.constant dense<0.000000e+00> : vector<16x16xf32>
    %54 = tpu.matmul %51, %52, %cst_40 {dimension_numbers = #tpu.dot_dimension_numbers<[1], [1], [0], [0], [0, 0, 1, 0], [], []>} : vector<16x8xbf16>, vector<16x8xbf16>, vector<16x16xf32> -> vector<16x16xf32>
    %55 = arith.addf %54, %3 : vector<16x16xf32>
    %cst_41 = arith.constant dense<0xFF800000> : vector<16xf32>
    %56 = vector.multi_reduction <maximumf>, %55, %cst_41 [1] : vector<16x16xf32> to vector<16xf32>
    %57 = vector.shape_cast %56 : vector<16xf32> to vector<16x1xf32>
    %58 = vector.broadcast %57 : vector<16x1xf32> to vector<16x16xf32>
    %59 = arith.subf %55, %58 : vector<16x16xf32>
    %60 = math.exp %59 : vector<16x16xf32>
    %cst_42 = arith.constant dense<0.000000e+00> : vector<16xf32>
    %61 = vector.multi_reduction <add>, %60, %cst_42 [1] : vector<16x16xf32> to vector<16xf32>
    %62 = vector.shape_cast %61 : vector<16xf32> to vector<16x1xf32>
    %63 = tpu.reciprocal %62 {approx = true} : vector<16x1xf32> -> vector<16x1xf32>
    %64 = vector.broadcast %63 : vector<16x1xf32> to vector<16x16xf32>
    %65 = arith.mulf %60, %64 : vector<16x16xf32>
    %66 = arith.truncf %65 : vector<16x16xf32> to vector<16x16xbf16>
    %cst_43 = arith.constant dense<0.000000e+00> : vector<16x8xf32>
    %67 = tpu.matmul %66, %53, %cst_43 {dimension_numbers = #tpu.dot_dimension_numbers<[1], [0], [0], [1], [0, 0, 1, 1], [], []>} : vector<16x16xbf16>, vector<16x8xbf16>, vector<16x8xf32> -> vector<16x8xf32>
    %68 = arith.truncf %67 : vector<16x8xf32> to vector<16x8xbf16>
    %c0_44 = arith.constant 0 : index
    %c1_45 = arith.constant 1 : index
    %c0_46 = arith.constant 0 : index
    %c0_47 = arith.constant 0 : index
    %69 = vector.load %arg6[%c0_44, %c1_45, %c0_46, %c0_47] : memref<2x4x8x32xbf16, #tpu.memory_space<vmem>>, vector<1x1x8x32xbf16>
    %70 = vector.shape_cast %69 : vector<1x1x8x32xbf16> to vector<8x32xbf16>
    %cst_48 = arith.constant dense<0.000000e+00> : vector<16x32xf32>
    %71 = tpu.matmul %68, %70, %cst_48 {dimension_numbers = #tpu.dot_dimension_numbers<[1], [0], [0], [1], [0, 0, 1, 1], [], []>} : vector<16x8xbf16>, vector<8x32xbf16>, vector<16x32xf32> -> vector<16x32xf32>
    %72 = arith.addf %50, %71 : vector<16x32xf32>
    %73 = vector.extract_strided_slice %27 {offsets = [0, 16], sizes = [16, 8], strides = [1, 1]} : vector<16x32xbf16> to vector<16x8xbf16>
    %74 = vector.extract_strided_slice %28 {offsets = [0, 16], sizes = [16, 8], strides = [1, 1]} : vector<16x32xbf16> to vector<16x8xbf16>
    %75 = vector.extract_strided_slice %29 {offsets = [0, 16], sizes = [16, 8], strides = [1, 1]} : vector<16x32xbf16> to vector<16x8xbf16>
    %cst_49 = arith.constant dense<0.000000e+00> : vector<16x16xf32>
    %76 = tpu.matmul %73, %74, %cst_49 {dimension_numbers = #tpu.dot_dimension_numbers<[1], [1], [0], [0], [0, 0, 1, 0], [], []>} : vector<16x8xbf16>, vector<16x8xbf16>, vector<16x16xf32> -> vector<16x16xf32>
    %77 = arith.addf %76, %3 : vector<16x16xf32>
    %cst_50 = arith.constant dense<0xFF800000> : vector<16xf32>
    %78 = vector.multi_reduction <maximumf>, %77, %cst_50 [1] : vector<16x16xf32> to vector<16xf32>
    %79 = vector.shape_cast %78 : vector<16xf32> to vector<16x1xf32>
    %80 = vector.broadcast %79 : vector<16x1xf32> to vector<16x16xf32>
    %81 = arith.subf %77, %80 : vector<16x16xf32>
    %82 = math.exp %81 : vector<16x16xf32>
    %cst_51 = arith.constant dense<0.000000e+00> : vector<16xf32>
    %83 = vector.multi_reduction <add>, %82, %cst_51 [1] : vector<16x16xf32> to vector<16xf32>
    %84 = vector.shape_cast %83 : vector<16xf32> to vector<16x1xf32>
    %85 = tpu.reciprocal %84 {approx = true} : vector<16x1xf32> -> vector<16x1xf32>
    %86 = vector.broadcast %85 : vector<16x1xf32> to vector<16x16xf32>
    %87 = arith.mulf %82, %86 : vector<16x16xf32>
    %88 = arith.truncf %87 : vector<16x16xf32> to vector<16x16xbf16>
    %cst_52 = arith.constant dense<0.000000e+00> : vector<16x8xf32>
    %89 = tpu.matmul %88, %75, %cst_52 {dimension_numbers = #tpu.dot_dimension_numbers<[1], [0], [0], [1], [0, 0, 1, 1], [], []>} : vector<16x16xbf16>, vector<16x8xbf16>, vector<16x8xf32> -> vector<16x8xf32>
    %90 = arith.truncf %89 : vector<16x8xf32> to vector<16x8xbf16>
    %c0_53 = arith.constant 0 : index
    %c2_54 = arith.constant 2 : index
    %c0_55 = arith.constant 0 : index
    %c0_56 = arith.constant 0 : index
    %91 = vector.load %arg6[%c0_53, %c2_54, %c0_55, %c0_56] : memref<2x4x8x32xbf16, #tpu.memory_space<vmem>>, vector<1x1x8x32xbf16>
    %92 = vector.shape_cast %91 : vector<1x1x8x32xbf16> to vector<8x32xbf16>
    %cst_57 = arith.constant dense<0.000000e+00> : vector<16x32xf32>
    %93 = tpu.matmul %90, %92, %cst_57 {dimension_numbers = #tpu.dot_dimension_numbers<[1], [0], [0], [1], [0, 0, 1, 1], [], []>} : vector<16x8xbf16>, vector<8x32xbf16>, vector<16x32xf32> -> vector<16x32xf32>
    %94 = arith.addf %72, %93 : vector<16x32xf32>
    %95 = vector.extract_strided_slice %27 {offsets = [0, 24], sizes = [16, 8], strides = [1, 1]} : vector<16x32xbf16> to vector<16x8xbf16>
    %96 = vector.extract_strided_slice %28 {offsets = [0, 24], sizes = [16, 8], strides = [1, 1]} : vector<16x32xbf16> to vector<16x8xbf16>
    %97 = vector.extract_strided_slice %29 {offsets = [0, 24], sizes = [16, 8], strides = [1, 1]} : vector<16x32xbf16> to vector<16x8xbf16>
    %cst_58 = arith.constant dense<0.000000e+00> : vector<16x16xf32>
    %98 = tpu.matmul %95, %96, %cst_58 {dimension_numbers = #tpu.dot_dimension_numbers<[1], [1], [0], [0], [0, 0, 1, 0], [], []>} : vector<16x8xbf16>, vector<16x8xbf16>, vector<16x16xf32> -> vector<16x16xf32>
    %99 = arith.addf %98, %3 : vector<16x16xf32>
    %cst_59 = arith.constant dense<0xFF800000> : vector<16xf32>
    %100 = vector.multi_reduction <maximumf>, %99, %cst_59 [1] : vector<16x16xf32> to vector<16xf32>
    %101 = vector.shape_cast %100 : vector<16xf32> to vector<16x1xf32>
    %102 = vector.broadcast %101 : vector<16x1xf32> to vector<16x16xf32>
    %103 = arith.subf %99, %102 : vector<16x16xf32>
    %104 = math.exp %103 : vector<16x16xf32>
    %cst_60 = arith.constant dense<0.000000e+00> : vector<16xf32>
    %105 = vector.multi_reduction <add>, %104, %cst_60 [1] : vector<16x16xf32> to vector<16xf32>
    %106 = vector.shape_cast %105 : vector<16xf32> to vector<16x1xf32>
    %107 = tpu.reciprocal %106 {approx = true} : vector<16x1xf32> -> vector<16x1xf32>
    %108 = vector.broadcast %107 : vector<16x1xf32> to vector<16x16xf32>
    %109 = arith.mulf %104, %108 : vector<16x16xf32>
    %110 = arith.truncf %109 : vector<16x16xf32> to vector<16x16xbf16>
    %cst_61 = arith.constant dense<0.000000e+00> : vector<16x8xf32>
    %111 = tpu.matmul %110, %97, %cst_61 {dimension_numbers = #tpu.dot_dimension_numbers<[1], [0], [0], [1], [0, 0, 1, 1], [], []>} : vector<16x16xbf16>, vector<16x8xbf16>, vector<16x8xf32> -> vector<16x8xf32>
    %112 = arith.truncf %111 : vector<16x8xf32> to vector<16x8xbf16>
    %c0_62 = arith.constant 0 : index
    %c3 = arith.constant 3 : index
    %c0_63 = arith.constant 0 : index
    %c0_64 = arith.constant 0 : index
    %113 = vector.load %arg6[%c0_62, %c3, %c0_63, %c0_64] : memref<2x4x8x32xbf16, #tpu.memory_space<vmem>>, vector<1x1x8x32xbf16>
    %114 = vector.shape_cast %113 : vector<1x1x8x32xbf16> to vector<8x32xbf16>
    %cst_65 = arith.constant dense<0.000000e+00> : vector<16x32xf32>
    %115 = tpu.matmul %112, %114, %cst_65 {dimension_numbers = #tpu.dot_dimension_numbers<[1], [0], [0], [1], [0, 0, 1, 1], [], []>} : vector<16x8xbf16>, vector<8x32xbf16>, vector<16x32xf32> -> vector<16x32xf32>
    %116 = arith.addf %94, %115 : vector<16x32xf32>
    %c0_66 = arith.constant 0 : index
    %c3_67 = arith.constant 3 : index
    %c0_68 = arith.constant 0 : index
    %c0_69 = arith.constant 0 : index
    %117 = vector.load %arg5[%c0_66, %c3_67, %c0_68, %c0_69] : memref<2x4x1x32xf32, #tpu.memory_space<vmem>>, vector<1x1x1x32xf32>
    %118 = vector.shape_cast %117 : vector<1x1x1x32xf32> to vector<1x32xf32>
    %119 = vector.broadcast %118 : vector<1x32xf32> to vector<16x32xf32>
    %120 = arith.addf %116, %119 : vector<16x32xf32>
    %121 = arith.truncf %120 : vector<16x32xf32> to vector<16x32xbf16>
    %c0_70 = arith.constant 0 : index
    %c0_71 = arith.constant 0 : index
    %c0_72 = arith.constant 0 : index
    %122 = vector.load %arg11[%c0_70, %c0_71, %c0_72] : memref<3x32x16xbf16, #tpu.memory_space<vmem>>, vector<1x32x16xbf16>
    %123 = vector.shape_cast %122 : vector<1x32x16xbf16> to vector<32x16xbf16>
    %cst_73 = arith.constant dense<0.000000e+00> : vector<16x16xf32>
    %124 = tpu.matmul %121, %123, %cst_73 {dimension_numbers = #tpu.dot_dimension_numbers<[1], [0], [0], [1], [0, 0, 1, 1], [], []>} : vector<16x32xbf16>, vector<32x16xbf16>, vector<16x16xf32> -> vector<16x16xf32>
    %c0_74 = arith.constant 0 : index
    %c0_75 = arith.constant 0 : index
    %c0_76 = arith.constant 0 : index
    %125 = vector.load %arg12[%c0_74, %c0_75, %c0_76] : memref<3x1x16xf32, #tpu.memory_space<vmem>>, vector<1x1x16xf32>
    %126 = vector.shape_cast %125 : vector<1x1x16xf32> to vector<1x16xf32>
    %127 = vector.broadcast %126 : vector<1x16xf32> to vector<16x16xf32>
    %128 = arith.addf %124, %127 : vector<16x16xf32>
    %cst_77 = arith.constant 0.000000e+00 : f32
    %129 = vector.broadcast %cst_77 : f32 to vector<16x16xf32>
    %130 = arith.maximumf %128, %129 : vector<16x16xf32>
    %131 = arith.truncf %130 : vector<16x16xf32> to vector<16x16xbf16>
    %c0_78 = arith.constant 0 : index
    %c0_79 = arith.constant 0 : index
    %c0_80 = arith.constant 0 : index
    %132 = vector.load %arg13[%c0_78, %c0_79, %c0_80] : memref<3x16x32xbf16, #tpu.memory_space<vmem>>, vector<1x16x32xbf16>
    %133 = vector.shape_cast %132 : vector<1x16x32xbf16> to vector<16x32xbf16>
    %cst_81 = arith.constant dense<0.000000e+00> : vector<16x32xf32>
    %134 = tpu.matmul %131, %133, %cst_81 {dimension_numbers = #tpu.dot_dimension_numbers<[1], [0], [0], [1], [0, 0, 1, 1], [], []>} : vector<16x16xbf16>, vector<16x32xbf16>, vector<16x32xf32> -> vector<16x32xf32>
    %c0_82 = arith.constant 0 : index
    %c0_83 = arith.constant 0 : index
    %c0_84 = arith.constant 0 : index
    %c0_85 = arith.constant 0 : index
    %135 = vector.load %arg14[%c0_82, %c0_83, %c0_84, %c0_85] : memref<3x3x1x32xf32, #tpu.memory_space<vmem>>, vector<1x1x1x32xf32>
    %136 = vector.shape_cast %135 : vector<1x1x1x32xf32> to vector<1x32xf32>
    %137 = vector.broadcast %136 : vector<1x32xf32> to vector<16x32xf32>
    %138 = arith.addf %134, %137 : vector<16x32xf32>
    %139 = arith.addf %138, %120 : vector<16x32xf32>
    %140 = arith.addf %0, %139 : vector<16x32xf32>
    %cst_86 = arith.constant dense<0.000000e+00> : vector<16xf32>
    %141 = vector.multi_reduction <add>, %140, %cst_86 [1] : vector<16x32xf32> to vector<16xf32>
    %142 = vector.shape_cast %141 : vector<16xf32> to vector<16x1xf32>
    %cst_87 = arith.constant 3.200000e+01 : f32
    %143 = vector.broadcast %cst_87 : f32 to vector<16x1xf32>
    %144 = arith.divf %142, %143 : vector<16x1xf32>
    %145 = vector.broadcast %144 : vector<16x1xf32> to vector<16x32xf32>
    %146 = arith.subf %140, %145 : vector<16x32xf32>
    %147 = arith.mulf %146, %146 : vector<16x32xf32>
    %cst_88 = arith.constant dense<0.000000e+00> : vector<16xf32>
    %148 = vector.multi_reduction <add>, %147, %cst_88 [1] : vector<16x32xf32> to vector<16xf32>
    %149 = vector.shape_cast %148 : vector<16xf32> to vector<16x1xf32>
    %cst_89 = arith.constant 3.200000e+01 : f32
    %150 = vector.broadcast %cst_89 : f32 to vector<16x1xf32>
    %151 = arith.divf %149, %150 : vector<16x1xf32>
    %152 = vector.broadcast %144 : vector<16x1xf32> to vector<16x32xf32>
    %153 = arith.subf %140, %152 : vector<16x32xf32>
    %cst_90 = arith.constant 9.99999974E-6 : f32
    %154 = vector.broadcast %cst_90 : f32 to vector<16x1xf32>
    %155 = arith.addf %151, %154 : vector<16x1xf32>
    %156 = math.rsqrt %155 : vector<16x1xf32>
    %157 = vector.broadcast %156 : vector<16x1xf32> to vector<16x32xf32>
    %158 = arith.mulf %153, %157 : vector<16x32xf32>
    %c0_91 = arith.constant 0 : index
    %c1_92 = arith.constant 1 : index
    %c0_93 = arith.constant 0 : index
    %c0_94 = arith.constant 0 : index
    %159 = vector.load %arg14[%c0_91, %c1_92, %c0_93, %c0_94] : memref<3x3x1x32xf32, #tpu.memory_space<vmem>>, vector<1x1x1x32xf32>
    %160 = vector.shape_cast %159 : vector<1x1x1x32xf32> to vector<1x32xf32>
    %161 = vector.broadcast %160 : vector<1x32xf32> to vector<16x32xf32>
    %162 = arith.mulf %158, %161 : vector<16x32xf32>
    %c0_95 = arith.constant 0 : index
    %c2_96 = arith.constant 2 : index
    %c0_97 = arith.constant 0 : index
    %c0_98 = arith.constant 0 : index
    %163 = vector.load %arg14[%c0_95, %c2_96, %c0_97, %c0_98] : memref<3x3x1x32xf32, #tpu.memory_space<vmem>>, vector<1x1x1x32xf32>
    %164 = vector.shape_cast %163 : vector<1x1x1x32xf32> to vector<1x32xf32>
    %165 = vector.broadcast %164 : vector<1x32xf32> to vector<16x32xf32>
    %166 = arith.addf %162, %165 : vector<16x32xf32>
    %167 = arith.truncf %166 : vector<16x32xf32> to vector<16x32xbf16>
    %c1_99 = arith.constant 1 : index
    %c0_100 = arith.constant 0 : index
    %c0_101 = arith.constant 0 : index
    %c0_102 = arith.constant 0 : index
    %168 = vector.load %arg4[%c1_99, %c0_100, %c0_101, %c0_102] : memref<2x3x32x32xbf16, #tpu.memory_space<vmem>>, vector<1x1x32x32xbf16>
    %169 = vector.shape_cast %168 : vector<1x1x32x32xbf16> to vector<32x32xbf16>
    %cst_103 = arith.constant dense<0.000000e+00> : vector<16x32xf32>
    %170 = tpu.matmul %167, %169, %cst_103 {dimension_numbers = #tpu.dot_dimension_numbers<[1], [0], [0], [1], [0, 0, 1, 1], [], []>} : vector<16x32xbf16>, vector<32x32xbf16>, vector<16x32xf32> -> vector<16x32xf32>
    %c1_104 = arith.constant 1 : index
    %c0_105 = arith.constant 0 : index
    %c0_106 = arith.constant 0 : index
    %c0_107 = arith.constant 0 : index
    %171 = vector.load %arg5[%c1_104, %c0_105, %c0_106, %c0_107] : memref<2x4x1x32xf32, #tpu.memory_space<vmem>>, vector<1x1x1x32xf32>
    %172 = vector.shape_cast %171 : vector<1x1x1x32xf32> to vector<1x32xf32>
    %173 = vector.broadcast %172 : vector<1x32xf32> to vector<16x32xf32>
    %174 = arith.addf %170, %173 : vector<16x32xf32>
    %c1_108 = arith.constant 1 : index
    %c1_109 = arith.constant 1 : index
    %c0_110 = arith.constant 0 : index
    %c0_111 = arith.constant 0 : index
    %175 = vector.load %arg4[%c1_108, %c1_109, %c0_110, %c0_111] : memref<2x3x32x32xbf16, #tpu.memory_space<vmem>>, vector<1x1x32x32xbf16>
    %176 = vector.shape_cast %175 : vector<1x1x32x32xbf16> to vector<32x32xbf16>
    %cst_112 = arith.constant dense<0.000000e+00> : vector<32x32xf32>
    %177 = tpu.matmul %2, %176, %cst_112 {dimension_numbers = #tpu.dot_dimension_numbers<[1], [0], [0], [1], [0, 0, 1, 1], [], []>} : vector<32x32xbf16>, vector<32x32xbf16>, vector<32x32xf32> -> vector<32x32xf32>
    %c1_113 = arith.constant 1 : index
    %c1_114 = arith.constant 1 : index
    %c0_115 = arith.constant 0 : index
    %c0_116 = arith.constant 0 : index
    %178 = vector.load %arg5[%c1_113, %c1_114, %c0_115, %c0_116] : memref<2x4x1x32xf32, #tpu.memory_space<vmem>>, vector<1x1x1x32xf32>
    %179 = vector.shape_cast %178 : vector<1x1x1x32xf32> to vector<1x32xf32>
    %180 = vector.broadcast %179 : vector<1x32xf32> to vector<32x32xf32>
    %181 = arith.addf %177, %180 : vector<32x32xf32>
    %c1_117 = arith.constant 1 : index
    %c2_118 = arith.constant 2 : index
    %c0_119 = arith.constant 0 : index
    %c0_120 = arith.constant 0 : index
    %182 = vector.load %arg4[%c1_117, %c2_118, %c0_119, %c0_120] : memref<2x3x32x32xbf16, #tpu.memory_space<vmem>>, vector<1x1x32x32xbf16>
    %183 = vector.shape_cast %182 : vector<1x1x32x32xbf16> to vector<32x32xbf16>
    %cst_121 = arith.constant dense<0.000000e+00> : vector<32x32xf32>
    %184 = tpu.matmul %2, %183, %cst_121 {dimension_numbers = #tpu.dot_dimension_numbers<[1], [0], [0], [1], [0, 0, 1, 1], [], []>} : vector<32x32xbf16>, vector<32x32xbf16>, vector<32x32xf32> -> vector<32x32xf32>
    %c1_122 = arith.constant 1 : index
    %c2_123 = arith.constant 2 : index
    %c0_124 = arith.constant 0 : index
    %c0_125 = arith.constant 0 : index
    %185 = vector.load %arg5[%c1_122, %c2_123, %c0_124, %c0_125] : memref<2x4x1x32xf32, #tpu.memory_space<vmem>>, vector<1x1x1x32xf32>
    %186 = vector.shape_cast %185 : vector<1x1x1x32xf32> to vector<1x32xf32>
    %187 = vector.broadcast %186 : vector<1x32xf32> to vector<32x32xf32>
    %188 = arith.addf %184, %187 : vector<32x32xf32>
    %189 = arith.truncf %174 : vector<16x32xf32> to vector<16x32xbf16>
    %190 = arith.truncf %181 : vector<32x32xf32> to vector<32x32xbf16>
    %191 = arith.truncf %188 : vector<32x32xf32> to vector<32x32xbf16>
    %192 = vector.extract_strided_slice %189 {offsets = [0, 0], sizes = [16, 8], strides = [1, 1]} : vector<16x32xbf16> to vector<16x8xbf16>
    %193 = vector.extract_strided_slice %190 {offsets = [0, 0], sizes = [32, 8], strides = [1, 1]} : vector<32x32xbf16> to vector<32x8xbf16>
    %194 = vector.extract_strided_slice %191 {offsets = [0, 0], sizes = [32, 8], strides = [1, 1]} : vector<32x32xbf16> to vector<32x8xbf16>
    %cst_126 = arith.constant dense<0.000000e+00> : vector<16x32xf32>
    %195 = tpu.matmul %192, %193, %cst_126 {dimension_numbers = #tpu.dot_dimension_numbers<[1], [1], [0], [0], [0, 0, 1, 0], [], []>} : vector<16x8xbf16>, vector<32x8xbf16>, vector<16x32xf32> -> vector<16x32xf32>
    %196 = arith.addf %195, %4 : vector<16x32xf32>
    %cst_127 = arith.constant dense<0xFF800000> : vector<16xf32>
    %197 = vector.multi_reduction <maximumf>, %196, %cst_127 [1] : vector<16x32xf32> to vector<16xf32>
    %198 = vector.shape_cast %197 : vector<16xf32> to vector<16x1xf32>
    %199 = vector.broadcast %198 : vector<16x1xf32> to vector<16x32xf32>
    %200 = arith.subf %196, %199 : vector<16x32xf32>
    %201 = math.exp %200 : vector<16x32xf32>
    %cst_128 = arith.constant dense<0.000000e+00> : vector<16xf32>
    %202 = vector.multi_reduction <add>, %201, %cst_128 [1] : vector<16x32xf32> to vector<16xf32>
    %203 = vector.shape_cast %202 : vector<16xf32> to vector<16x1xf32>
    %204 = tpu.reciprocal %203 {approx = true} : vector<16x1xf32> -> vector<16x1xf32>
    %205 = vector.broadcast %204 : vector<16x1xf32> to vector<16x32xf32>
    %206 = arith.mulf %201, %205 : vector<16x32xf32>
    %207 = arith.truncf %206 : vector<16x32xf32> to vector<16x32xbf16>
    %cst_129 = arith.constant dense<0.000000e+00> : vector<16x8xf32>
    %208 = tpu.matmul %207, %194, %cst_129 {dimension_numbers = #tpu.dot_dimension_numbers<[1], [0], [0], [1], [0, 0, 1, 1], [], []>} : vector<16x32xbf16>, vector<32x8xbf16>, vector<16x8xf32> -> vector<16x8xf32>
    %209 = arith.truncf %208 : vector<16x8xf32> to vector<16x8xbf16>
    %c1_130 = arith.constant 1 : index
    %c0_131 = arith.constant 0 : index
    %c0_132 = arith.constant 0 : index
    %c0_133 = arith.constant 0 : index
    %210 = vector.load %arg6[%c1_130, %c0_131, %c0_132, %c0_133] : memref<2x4x8x32xbf16, #tpu.memory_space<vmem>>, vector<1x1x8x32xbf16>
    %211 = vector.shape_cast %210 : vector<1x1x8x32xbf16> to vector<8x32xbf16>
    %cst_134 = arith.constant dense<0.000000e+00> : vector<16x32xf32>
    %212 = tpu.matmul %209, %211, %cst_134 {dimension_numbers = #tpu.dot_dimension_numbers<[1], [0], [0], [1], [0, 0, 1, 1], [], []>} : vector<16x8xbf16>, vector<8x32xbf16>, vector<16x32xf32> -> vector<16x32xf32>
    %213 = vector.extract_strided_slice %189 {offsets = [0, 8], sizes = [16, 8], strides = [1, 1]} : vector<16x32xbf16> to vector<16x8xbf16>
    %214 = vector.extract_strided_slice %190 {offsets = [0, 8], sizes = [32, 8], strides = [1, 1]} : vector<32x32xbf16> to vector<32x8xbf16>
    %215 = vector.extract_strided_slice %191 {offsets = [0, 8], sizes = [32, 8], strides = [1, 1]} : vector<32x32xbf16> to vector<32x8xbf16>
    %cst_135 = arith.constant dense<0.000000e+00> : vector<16x32xf32>
    %216 = tpu.matmul %213, %214, %cst_135 {dimension_numbers = #tpu.dot_dimension_numbers<[1], [1], [0], [0], [0, 0, 1, 0], [], []>} : vector<16x8xbf16>, vector<32x8xbf16>, vector<16x32xf32> -> vector<16x32xf32>
    %217 = arith.addf %216, %4 : vector<16x32xf32>
    %cst_136 = arith.constant dense<0xFF800000> : vector<16xf32>
    %218 = vector.multi_reduction <maximumf>, %217, %cst_136 [1] : vector<16x32xf32> to vector<16xf32>
    %219 = vector.shape_cast %218 : vector<16xf32> to vector<16x1xf32>
    %220 = vector.broadcast %219 : vector<16x1xf32> to vector<16x32xf32>
    %221 = arith.subf %217, %220 : vector<16x32xf32>
    %222 = math.exp %221 : vector<16x32xf32>
    %cst_137 = arith.constant dense<0.000000e+00> : vector<16xf32>
    %223 = vector.multi_reduction <add>, %222, %cst_137 [1] : vector<16x32xf32> to vector<16xf32>
    %224 = vector.shape_cast %223 : vector<16xf32> to vector<16x1xf32>
    %225 = tpu.reciprocal %224 {approx = true} : vector<16x1xf32> -> vector<16x1xf32>
    %226 = vector.broadcast %225 : vector<16x1xf32> to vector<16x32xf32>
    %227 = arith.mulf %222, %226 : vector<16x32xf32>
    %228 = arith.truncf %227 : vector<16x32xf32> to vector<16x32xbf16>
    %cst_138 = arith.constant dense<0.000000e+00> : vector<16x8xf32>
    %229 = tpu.matmul %228, %215, %cst_138 {dimension_numbers = #tpu.dot_dimension_numbers<[1], [0], [0], [1], [0, 0, 1, 1], [], []>} : vector<16x32xbf16>, vector<32x8xbf16>, vector<16x8xf32> -> vector<16x8xf32>
    %230 = arith.truncf %229 : vector<16x8xf32> to vector<16x8xbf16>
    %c1_139 = arith.constant 1 : index
    %c1_140 = arith.constant 1 : index
    %c0_141 = arith.constant 0 : index
    %c0_142 = arith.constant 0 : index
    %231 = vector.load %arg6[%c1_139, %c1_140, %c0_141, %c0_142] : memref<2x4x8x32xbf16, #tpu.memory_space<vmem>>, vector<1x1x8x32xbf16>
    %232 = vector.shape_cast %231 : vector<1x1x8x32xbf16> to vector<8x32xbf16>
    %cst_143 = arith.constant dense<0.000000e+00> : vector<16x32xf32>
    %233 = tpu.matmul %230, %232, %cst_143 {dimension_numbers = #tpu.dot_dimension_numbers<[1], [0], [0], [1], [0, 0, 1, 1], [], []>} : vector<16x8xbf16>, vector<8x32xbf16>, vector<16x32xf32> -> vector<16x32xf32>
    %234 = arith.addf %212, %233 : vector<16x32xf32>
    %235 = vector.extract_strided_slice %189 {offsets = [0, 16], sizes = [16, 8], strides = [1, 1]} : vector<16x32xbf16> to vector<16x8xbf16>
    %236 = vector.extract_strided_slice %190 {offsets = [0, 16], sizes = [32, 8], strides = [1, 1]} : vector<32x32xbf16> to vector<32x8xbf16>
    %237 = vector.extract_strided_slice %191 {offsets = [0, 16], sizes = [32, 8], strides = [1, 1]} : vector<32x32xbf16> to vector<32x8xbf16>
    %cst_144 = arith.constant dense<0.000000e+00> : vector<16x32xf32>
    %238 = tpu.matmul %235, %236, %cst_144 {dimension_numbers = #tpu.dot_dimension_numbers<[1], [1], [0], [0], [0, 0, 1, 0], [], []>} : vector<16x8xbf16>, vector<32x8xbf16>, vector<16x32xf32> -> vector<16x32xf32>
    %239 = arith.addf %238, %4 : vector<16x32xf32>
    %cst_145 = arith.constant dense<0xFF800000> : vector<16xf32>
    %240 = vector.multi_reduction <maximumf>, %239, %cst_145 [1] : vector<16x32xf32> to vector<16xf32>
    %241 = vector.shape_cast %240 : vector<16xf32> to vector<16x1xf32>
    %242 = vector.broadcast %241 : vector<16x1xf32> to vector<16x32xf32>
    %243 = arith.subf %239, %242 : vector<16x32xf32>
    %244 = math.exp %243 : vector<16x32xf32>
    %cst_146 = arith.constant dense<0.000000e+00> : vector<16xf32>
    %245 = vector.multi_reduction <add>, %244, %cst_146 [1] : vector<16x32xf32> to vector<16xf32>
    %246 = vector.shape_cast %245 : vector<16xf32> to vector<16x1xf32>
    %247 = tpu.reciprocal %246 {approx = true} : vector<16x1xf32> -> vector<16x1xf32>
    %248 = vector.broadcast %247 : vector<16x1xf32> to vector<16x32xf32>
    %249 = arith.mulf %244, %248 : vector<16x32xf32>
    %250 = arith.truncf %249 : vector<16x32xf32> to vector<16x32xbf16>
    %cst_147 = arith.constant dense<0.000000e+00> : vector<16x8xf32>
    %251 = tpu.matmul %250, %237, %cst_147 {dimension_numbers = #tpu.dot_dimension_numbers<[1], [0], [0], [1], [0, 0, 1, 1], [], []>} : vector<16x32xbf16>, vector<32x8xbf16>, vector<16x8xf32> -> vector<16x8xf32>
    %252 = arith.truncf %251 : vector<16x8xf32> to vector<16x8xbf16>
    %c1_148 = arith.constant 1 : index
    %c2_149 = arith.constant 2 : index
    %c0_150 = arith.constant 0 : index
    %c0_151 = arith.constant 0 : index
    %253 = vector.load %arg6[%c1_148, %c2_149, %c0_150, %c0_151] : memref<2x4x8x32xbf16, #tpu.memory_space<vmem>>, vector<1x1x8x32xbf16>
    %254 = vector.shape_cast %253 : vector<1x1x8x32xbf16> to vector<8x32xbf16>
    %cst_152 = arith.constant dense<0.000000e+00> : vector<16x32xf32>
    %255 = tpu.matmul %252, %254, %cst_152 {dimension_numbers = #tpu.dot_dimension_numbers<[1], [0], [0], [1], [0, 0, 1, 1], [], []>} : vector<16x8xbf16>, vector<8x32xbf16>, vector<16x32xf32> -> vector<16x32xf32>
    %256 = arith.addf %234, %255 : vector<16x32xf32>
    %257 = vector.extract_strided_slice %189 {offsets = [0, 24], sizes = [16, 8], strides = [1, 1]} : vector<16x32xbf16> to vector<16x8xbf16>
    %258 = vector.extract_strided_slice %190 {offsets = [0, 24], sizes = [32, 8], strides = [1, 1]} : vector<32x32xbf16> to vector<32x8xbf16>
    %259 = vector.extract_strided_slice %191 {offsets = [0, 24], sizes = [32, 8], strides = [1, 1]} : vector<32x32xbf16> to vector<32x8xbf16>
    %cst_153 = arith.constant dense<0.000000e+00> : vector<16x32xf32>
    %260 = tpu.matmul %257, %258, %cst_153 {dimension_numbers = #tpu.dot_dimension_numbers<[1], [1], [0], [0], [0, 0, 1, 0], [], []>} : vector<16x8xbf16>, vector<32x8xbf16>, vector<16x32xf32> -> vector<16x32xf32>
    %261 = arith.addf %260, %4 : vector<16x32xf32>
    %cst_154 = arith.constant dense<0xFF800000> : vector<16xf32>
    %262 = vector.multi_reduction <maximumf>, %261, %cst_154 [1] : vector<16x32xf32> to vector<16xf32>
    %263 = vector.shape_cast %262 : vector<16xf32> to vector<16x1xf32>
    %264 = vector.broadcast %263 : vector<16x1xf32> to vector<16x32xf32>
    %265 = arith.subf %261, %264 : vector<16x32xf32>
    %266 = math.exp %265 : vector<16x32xf32>
    %cst_155 = arith.constant dense<0.000000e+00> : vector<16xf32>
    %267 = vector.multi_reduction <add>, %266, %cst_155 [1] : vector<16x32xf32> to vector<16xf32>
    %268 = vector.shape_cast %267 : vector<16xf32> to vector<16x1xf32>
    %269 = tpu.reciprocal %268 {approx = true} : vector<16x1xf32> -> vector<16x1xf32>
    %270 = vector.broadcast %269 : vector<16x1xf32> to vector<16x32xf32>
    %271 = arith.mulf %266, %270 : vector<16x32xf32>
    %272 = arith.truncf %271 : vector<16x32xf32> to vector<16x32xbf16>
    %cst_156 = arith.constant dense<0.000000e+00> : vector<16x8xf32>
    %273 = tpu.matmul %272, %259, %cst_156 {dimension_numbers = #tpu.dot_dimension_numbers<[1], [0], [0], [1], [0, 0, 1, 1], [], []>} : vector<16x32xbf16>, vector<32x8xbf16>, vector<16x8xf32> -> vector<16x8xf32>
    %274 = arith.truncf %273 : vector<16x8xf32> to vector<16x8xbf16>
    %c1_157 = arith.constant 1 : index
    %c3_158 = arith.constant 3 : index
    %c0_159 = arith.constant 0 : index
    %c0_160 = arith.constant 0 : index
    %275 = vector.load %arg6[%c1_157, %c3_158, %c0_159, %c0_160] : memref<2x4x8x32xbf16, #tpu.memory_space<vmem>>, vector<1x1x8x32xbf16>
    %276 = vector.shape_cast %275 : vector<1x1x8x32xbf16> to vector<8x32xbf16>
    %cst_161 = arith.constant dense<0.000000e+00> : vector<16x32xf32>
    %277 = tpu.matmul %274, %276, %cst_161 {dimension_numbers = #tpu.dot_dimension_numbers<[1], [0], [0], [1], [0, 0, 1, 1], [], []>} : vector<16x8xbf16>, vector<8x32xbf16>, vector<16x32xf32> -> vector<16x32xf32>
    %278 = arith.addf %256, %277 : vector<16x32xf32>
    %c1_162 = arith.constant 1 : index
    %c3_163 = arith.constant 3 : index
    %c0_164 = arith.constant 0 : index
    %c0_165 = arith.constant 0 : index
    %279 = vector.load %arg5[%c1_162, %c3_163, %c0_164, %c0_165] : memref<2x4x1x32xf32, #tpu.memory_space<vmem>>, vector<1x1x1x32xf32>
    %280 = vector.shape_cast %279 : vector<1x1x1x32xf32> to vector<1x32xf32>
    %281 = vector.broadcast %280 : vector<1x32xf32> to vector<16x32xf32>
    %282 = arith.addf %278, %281 : vector<16x32xf32>
    %283 = arith.truncf %282 : vector<16x32xf32> to vector<16x32xbf16>
    %c1_166 = arith.constant 1 : index
    %c0_167 = arith.constant 0 : index
    %c0_168 = arith.constant 0 : index
    %284 = vector.load %arg11[%c1_166, %c0_167, %c0_168] : memref<3x32x16xbf16, #tpu.memory_space<vmem>>, vector<1x32x16xbf16>
    %285 = vector.shape_cast %284 : vector<1x32x16xbf16> to vector<32x16xbf16>
    %cst_169 = arith.constant dense<0.000000e+00> : vector<16x16xf32>
    %286 = tpu.matmul %283, %285, %cst_169 {dimension_numbers = #tpu.dot_dimension_numbers<[1], [0], [0], [1], [0, 0, 1, 1], [], []>} : vector<16x32xbf16>, vector<32x16xbf16>, vector<16x16xf32> -> vector<16x16xf32>
    %c1_170 = arith.constant 1 : index
    %c0_171 = arith.constant 0 : index
    %c0_172 = arith.constant 0 : index
    %287 = vector.load %arg12[%c1_170, %c0_171, %c0_172] : memref<3x1x16xf32, #tpu.memory_space<vmem>>, vector<1x1x16xf32>
    %288 = vector.shape_cast %287 : vector<1x1x16xf32> to vector<1x16xf32>
    %289 = vector.broadcast %288 : vector<1x16xf32> to vector<16x16xf32>
    %290 = arith.addf %286, %289 : vector<16x16xf32>
    %cst_173 = arith.constant 0.000000e+00 : f32
    %291 = vector.broadcast %cst_173 : f32 to vector<16x16xf32>
    %292 = arith.maximumf %290, %291 : vector<16x16xf32>
    %293 = arith.truncf %292 : vector<16x16xf32> to vector<16x16xbf16>
    %c1_174 = arith.constant 1 : index
    %c0_175 = arith.constant 0 : index
    %c0_176 = arith.constant 0 : index
    %294 = vector.load %arg13[%c1_174, %c0_175, %c0_176] : memref<3x16x32xbf16, #tpu.memory_space<vmem>>, vector<1x16x32xbf16>
    %295 = vector.shape_cast %294 : vector<1x16x32xbf16> to vector<16x32xbf16>
    %cst_177 = arith.constant dense<0.000000e+00> : vector<16x32xf32>
    %296 = tpu.matmul %293, %295, %cst_177 {dimension_numbers = #tpu.dot_dimension_numbers<[1], [0], [0], [1], [0, 0, 1, 1], [], []>} : vector<16x16xbf16>, vector<16x32xbf16>, vector<16x32xf32> -> vector<16x32xf32>
    %c1_178 = arith.constant 1 : index
    %c0_179 = arith.constant 0 : index
    %c0_180 = arith.constant 0 : index
    %c0_181 = arith.constant 0 : index
    %297 = vector.load %arg14[%c1_178, %c0_179, %c0_180, %c0_181] : memref<3x3x1x32xf32, #tpu.memory_space<vmem>>, vector<1x1x1x32xf32>
    %298 = vector.shape_cast %297 : vector<1x1x1x32xf32> to vector<1x32xf32>
    %299 = vector.broadcast %298 : vector<1x32xf32> to vector<16x32xf32>
    %300 = arith.addf %296, %299 : vector<16x32xf32>
    %301 = arith.addf %300, %282 : vector<16x32xf32>
    %302 = arith.addf %166, %301 : vector<16x32xf32>
    %cst_182 = arith.constant dense<0.000000e+00> : vector<16xf32>
    %303 = vector.multi_reduction <add>, %302, %cst_182 [1] : vector<16x32xf32> to vector<16xf32>
    %304 = vector.shape_cast %303 : vector<16xf32> to vector<16x1xf32>
    %cst_183 = arith.constant 3.200000e+01 : f32
    %305 = vector.broadcast %cst_183 : f32 to vector<16x1xf32>
    %306 = arith.divf %304, %305 : vector<16x1xf32>
    %307 = vector.broadcast %306 : vector<16x1xf32> to vector<16x32xf32>
    %308 = arith.subf %302, %307 : vector<16x32xf32>
    %309 = arith.mulf %308, %308 : vector<16x32xf32>
    %cst_184 = arith.constant dense<0.000000e+00> : vector<16xf32>
    %310 = vector.multi_reduction <add>, %309, %cst_184 [1] : vector<16x32xf32> to vector<16xf32>
    %311 = vector.shape_cast %310 : vector<16xf32> to vector<16x1xf32>
    %cst_185 = arith.constant 3.200000e+01 : f32
    %312 = vector.broadcast %cst_185 : f32 to vector<16x1xf32>
    %313 = arith.divf %311, %312 : vector<16x1xf32>
    %314 = vector.broadcast %306 : vector<16x1xf32> to vector<16x32xf32>
    %315 = arith.subf %302, %314 : vector<16x32xf32>
    %cst_186 = arith.constant 9.99999974E-6 : f32
    %316 = vector.broadcast %cst_186 : f32 to vector<16x1xf32>
    %317 = arith.addf %313, %316 : vector<16x1xf32>
    %318 = math.rsqrt %317 : vector<16x1xf32>
    %319 = vector.broadcast %318 : vector<16x1xf32> to vector<16x32xf32>
    %320 = arith.mulf %315, %319 : vector<16x32xf32>
    %c1_187 = arith.constant 1 : index
    %c1_188 = arith.constant 1 : index
    %c0_189 = arith.constant 0 : index
    %c0_190 = arith.constant 0 : index
    %321 = vector.load %arg14[%c1_187, %c1_188, %c0_189, %c0_190] : memref<3x3x1x32xf32, #tpu.memory_space<vmem>>, vector<1x1x1x32xf32>
    %322 = vector.shape_cast %321 : vector<1x1x1x32xf32> to vector<1x32xf32>
    %323 = vector.broadcast %322 : vector<1x32xf32> to vector<16x32xf32>
    %324 = arith.mulf %320, %323 : vector<16x32xf32>
    %c1_191 = arith.constant 1 : index
    %c2_192 = arith.constant 2 : index
    %c0_193 = arith.constant 0 : index
    %c0_194 = arith.constant 0 : index
    %325 = vector.load %arg14[%c1_191, %c2_192, %c0_193, %c0_194] : memref<3x3x1x32xf32, #tpu.memory_space<vmem>>, vector<1x1x1x32xf32>
    %326 = vector.shape_cast %325 : vector<1x1x1x32xf32> to vector<1x32xf32>
    %327 = vector.broadcast %326 : vector<1x32xf32> to vector<16x32xf32>
    %328 = arith.addf %324, %327 : vector<16x32xf32>
    %329 = arith.truncf %328 : vector<16x32xf32> to vector<16x32xbf16>
    %c0_195 = arith.constant 0 : index
    %c0_196 = arith.constant 0 : index
    %330 = vector.load %arg7[%c0_195, %c0_196] : memref<32x64xbf16, #tpu.memory_space<vmem>>, vector<32x64xbf16>
    %cst_197 = arith.constant dense<0.000000e+00> : vector<16x64xf32>
    %331 = tpu.matmul %329, %330, %cst_197 {dimension_numbers = #tpu.dot_dimension_numbers<[1], [0], [0], [1], [0, 0, 1, 1], [], []>} : vector<16x32xbf16>, vector<32x64xbf16>, vector<16x64xf32> -> vector<16x64xf32>
    %c0_198 = arith.constant 0 : index
    %c0_199 = arith.constant 0 : index
    %332 = vector.load %arg8[%c0_198, %c0_199] : memref<1x64xf32, #tpu.memory_space<vmem>>, vector<1x64xf32>
    %333 = vector.broadcast %332 : vector<1x64xf32> to vector<16x64xf32>
    %334 = arith.addf %331, %333 : vector<16x64xf32>
    %cst_200 = arith.constant 0.000000e+00 : f32
    %335 = vector.broadcast %cst_200 : f32 to vector<16x64xf32>
    %336 = arith.maximumf %334, %335 : vector<16x64xf32>
    %337 = arith.truncf %336 : vector<16x64xf32> to vector<16x64xbf16>
    %c0_201 = arith.constant 0 : index
    %c0_202 = arith.constant 0 : index
    %338 = vector.load %arg9[%c0_201, %c0_202] : memref<64x32xbf16, #tpu.memory_space<vmem>>, vector<64x32xbf16>
    %cst_203 = arith.constant dense<0.000000e+00> : vector<16x32xf32>
    %339 = tpu.matmul %337, %338, %cst_203 {dimension_numbers = #tpu.dot_dimension_numbers<[1], [0], [0], [1], [0, 0, 1, 1], [], []>} : vector<16x64xbf16>, vector<64x32xbf16>, vector<16x32xf32> -> vector<16x32xf32>
    %c0_204 = arith.constant 0 : index
    %c0_205 = arith.constant 0 : index
    %340 = vector.load %arg10[%c0_204, %c0_205] : memref<1x32xf32, #tpu.memory_space<vmem>>, vector<1x32xf32>
    %341 = vector.broadcast %340 : vector<1x32xf32> to vector<16x32xf32>
    %342 = arith.addf %339, %341 : vector<16x32xf32>
    %343 = arith.truncf %342 : vector<16x32xf32> to vector<16x32xbf16>
    %c2_206 = arith.constant 2 : index
    %c0_207 = arith.constant 0 : index
    %c0_208 = arith.constant 0 : index
    %344 = vector.load %arg11[%c2_206, %c0_207, %c0_208] : memref<3x32x16xbf16, #tpu.memory_space<vmem>>, vector<1x32x16xbf16>
    %345 = vector.shape_cast %344 : vector<1x32x16xbf16> to vector<32x16xbf16>
    %cst_209 = arith.constant dense<0.000000e+00> : vector<16x16xf32>
    %346 = tpu.matmul %343, %345, %cst_209 {dimension_numbers = #tpu.dot_dimension_numbers<[1], [0], [0], [1], [0, 0, 1, 1], [], []>} : vector<16x32xbf16>, vector<32x16xbf16>, vector<16x16xf32> -> vector<16x16xf32>
    %c2_210 = arith.constant 2 : index
    %c0_211 = arith.constant 0 : index
    %c0_212 = arith.constant 0 : index
    %347 = vector.load %arg12[%c2_210, %c0_211, %c0_212] : memref<3x1x16xf32, #tpu.memory_space<vmem>>, vector<1x1x16xf32>
    %348 = vector.shape_cast %347 : vector<1x1x16xf32> to vector<1x16xf32>
    %349 = vector.broadcast %348 : vector<1x16xf32> to vector<16x16xf32>
    %350 = arith.addf %346, %349 : vector<16x16xf32>
    %cst_213 = arith.constant 0.000000e+00 : f32
    %351 = vector.broadcast %cst_213 : f32 to vector<16x16xf32>
    %352 = arith.maximumf %350, %351 : vector<16x16xf32>
    %353 = arith.truncf %352 : vector<16x16xf32> to vector<16x16xbf16>
    %c2_214 = arith.constant 2 : index
    %c0_215 = arith.constant 0 : index
    %c0_216 = arith.constant 0 : index
    %354 = vector.load %arg13[%c2_214, %c0_215, %c0_216] : memref<3x16x32xbf16, #tpu.memory_space<vmem>>, vector<1x16x32xbf16>
    %355 = vector.shape_cast %354 : vector<1x16x32xbf16> to vector<16x32xbf16>
    %cst_217 = arith.constant dense<0.000000e+00> : vector<16x32xf32>
    %356 = tpu.matmul %353, %355, %cst_217 {dimension_numbers = #tpu.dot_dimension_numbers<[1], [0], [0], [1], [0, 0, 1, 1], [], []>} : vector<16x16xbf16>, vector<16x32xbf16>, vector<16x32xf32> -> vector<16x32xf32>
    %c2_218 = arith.constant 2 : index
    %c0_219 = arith.constant 0 : index
    %c0_220 = arith.constant 0 : index
    %c0_221 = arith.constant 0 : index
    %357 = vector.load %arg14[%c2_218, %c0_219, %c0_220, %c0_221] : memref<3x3x1x32xf32, #tpu.memory_space<vmem>>, vector<1x1x1x32xf32>
    %358 = vector.shape_cast %357 : vector<1x1x1x32xf32> to vector<1x32xf32>
    %359 = vector.broadcast %358 : vector<1x32xf32> to vector<16x32xf32>
    %360 = arith.addf %356, %359 : vector<16x32xf32>
    %361 = arith.addf %360, %342 : vector<16x32xf32>
    %362 = arith.addf %328, %361 : vector<16x32xf32>
    %cst_222 = arith.constant dense<0.000000e+00> : vector<16xf32>
    %363 = vector.multi_reduction <add>, %362, %cst_222 [1] : vector<16x32xf32> to vector<16xf32>
    %364 = vector.shape_cast %363 : vector<16xf32> to vector<16x1xf32>
    %cst_223 = arith.constant 3.200000e+01 : f32
    %365 = vector.broadcast %cst_223 : f32 to vector<16x1xf32>
    %366 = arith.divf %364, %365 : vector<16x1xf32>
    %367 = vector.broadcast %366 : vector<16x1xf32> to vector<16x32xf32>
    %368 = arith.subf %362, %367 : vector<16x32xf32>
    %369 = arith.mulf %368, %368 : vector<16x32xf32>
    %cst_224 = arith.constant dense<0.000000e+00> : vector<16xf32>
    %370 = vector.multi_reduction <add>, %369, %cst_224 [1] : vector<16x32xf32> to vector<16xf32>
    %371 = vector.shape_cast %370 : vector<16xf32> to vector<16x1xf32>
    %cst_225 = arith.constant 3.200000e+01 : f32
    %372 = vector.broadcast %cst_225 : f32 to vector<16x1xf32>
    %373 = arith.divf %371, %372 : vector<16x1xf32>
    %374 = vector.broadcast %366 : vector<16x1xf32> to vector<16x32xf32>
    %375 = arith.subf %362, %374 : vector<16x32xf32>
    %cst_226 = arith.constant 9.99999974E-6 : f32
    %376 = vector.broadcast %cst_226 : f32 to vector<16x1xf32>
    %377 = arith.addf %373, %376 : vector<16x1xf32>
    %378 = math.rsqrt %377 : vector<16x1xf32>
    %379 = vector.broadcast %378 : vector<16x1xf32> to vector<16x32xf32>
    %380 = arith.mulf %375, %379 : vector<16x32xf32>
    %c2_227 = arith.constant 2 : index
    %c1_228 = arith.constant 1 : index
    %c0_229 = arith.constant 0 : index
    %c0_230 = arith.constant 0 : index
    %381 = vector.load %arg14[%c2_227, %c1_228, %c0_229, %c0_230] : memref<3x3x1x32xf32, #tpu.memory_space<vmem>>, vector<1x1x1x32xf32>
    %382 = vector.shape_cast %381 : vector<1x1x1x32xf32> to vector<1x32xf32>
    %383 = vector.broadcast %382 : vector<1x32xf32> to vector<16x32xf32>
    %384 = arith.mulf %380, %383 : vector<16x32xf32>
    %c2_231 = arith.constant 2 : index
    %c2_232 = arith.constant 2 : index
    %c0_233 = arith.constant 0 : index
    %c0_234 = arith.constant 0 : index
    %385 = vector.load %arg14[%c2_231, %c2_232, %c0_233, %c0_234] : memref<3x3x1x32xf32, #tpu.memory_space<vmem>>, vector<1x1x1x32xf32>
    %386 = vector.shape_cast %385 : vector<1x1x1x32xf32> to vector<1x32xf32>
    %387 = vector.broadcast %386 : vector<1x32xf32> to vector<16x32xf32>
    %388 = arith.addf %384, %387 : vector<16x32xf32>
    %c0_235 = arith.constant 0 : index
    %c0_236 = arith.constant 0 : index
    %389 = vector.load %arg15[%c0_235, %c0_236] : memref<16x32xf32, #tpu.memory_space<vmem>>, vector<16x32xf32>
    tpu.vector_store %arg15[%c0_235, %c0_236], %388 {strides = array<i32>} : memref<16x32xf32, #tpu.memory_space<vmem>>, vector<16x32xf32>,
    return
  }
}

</mosaic_0001>

<llo_original>
// kernel: pallas_forward.1
$region0: #{pallas_forward.1}
  #allocation0 [shape = 'u32[]', space=smem, size = 0x4, offset = 0x4, fixed_abs, tag = 'smem constant byte address 0x4 - core index']
  #allocation1 [shape = 'u32[144,128]{1,0:T(1,128)}', space=vmem, size = 0x12000, scoped, tag = 'internal scratch']
  %s0 = inlined_call_operand.vmem [shape: f32[16,32], index: 0, kind: input, shape index: {}]
  %s1 = inlined_call_operand.vmem [shape: f32[32,32], index: 1, kind: input, shape index: {}]
  %s2 = inlined_call_operand.vmem [shape: f32[16,16], index: 2, kind: input, shape index: {}]
  %s3 = inlined_call_operand.vmem [shape: f32[16,32], index: 3, kind: input, shape index: {}]
  %s4 = inlined_call_operand.vmem [shape: bf16[2,3,32,32], index: 4, kind: input, shape index: {}]
  %s5 = inlined_call_operand.vmem [shape: f32[2,4,1,32], index: 5, kind: input, shape index: {}]
  %s6 = inlined_call_operand.vmem [shape: bf16[2,4,8,32], index: 6, kind: input, shape index: {}]
  %s7 = inlined_call_operand.vmem [shape: bf16[32,64], index: 7, kind: input, shape index: {}]
  %s8 = inlined_call_operand.vmem [shape: f32[1,64], index: 8, kind: input, shape index: {}]
  %s9 = inlined_call_operand.vmem [shape: bf16[64,32], index: 9, kind: input, shape index: {}]
  %s10 = inlined_call_operand.vmem [shape: f32[1,32], index: 10, kind: input, shape index: {}]
  %s11 = inlined_call_operand.vmem [shape: bf16[3,32,16], index: 11, kind: input, shape index: {}]
  %s12 = inlined_call_operand.vmem [shape: f32[3,1,16], index: 12, kind: input, shape index: {}]
  %s13 = inlined_call_operand.vmem [shape: bf16[3,16,32], index: 13, kind: input, shape index: {}]
  %s14 = inlined_call_operand.vmem [shape: f32[3,3,1,32], index: 14, kind: input, shape index: {}]
  %s15 = inlined_call_operand.hbm [shape: f32[16,32], index: 15, kind: output, shape index: {}]
  %s16 = sld [smem:[#allocation0]]
  $region70: #{pallas_forward.1} parent=0
    _
  %s18 = ssub.s32 1, %s16
  %s19 = scalar_select 0, %s18, %s16
  $region1: #{pallas_forward.1} parent=0
    #allocation2 [shape = 'u8[8192]{0}', space=vmem, size = 0x2000, scoped, tag = 'output window, operand 0, single buffered']
    #allocation3 [shape = 's32[1]{0}', space=sflag, size = 0x4, scoped, tag = 'scoped memory for pallas_forward.1']
    %20 = vsyncpa [#allocation3], 0
    // Predicated region
    $region2: #{pallas_forward.1} parent=1 // pred_check
      _
    $region3: #{pallas_forward.1} parent=1 // pred_check_branch
      %22 = sbr.rel (0) target = $region5
    $region4: #{pallas_forward.1} parent=1 // pred_region
      _
    $region5: #{pallas_forward.1} parent=1 // pred_fallthru
      _
    // Predicated region
    $region6: #{pallas_forward.1} parent=1 // pred_check
      _
    $region7: #{pallas_forward.1} parent=1 // pred_check_branch
      %24 = sbr.rel (0) target = $region9
    $region8: #{pallas_forward.1} parent=1 // pred_region
      _
    $region9: #{pallas_forward.1} parent=1 // pred_fallthru
      _
    // Predicated region
    $region10: #{pallas_forward.1} parent=1 // pred_check
      _
    $region11: #{pallas_forward.1} parent=1 // pred_check_branch
      %26 = sbr.rel (0) target = $region13
    $region12: #{pallas_forward.1} parent=1 // pred_region
      _
    $region13: #{pallas_forward.1} parent=1 // pred_fallthru
      _
    // Predicated region
    $region14: #{pallas_forward.1} parent=1 // pred_check
      _
    $region15: #{pallas_forward.1} parent=1 // pred_check_branch
      %28 = sbr.rel (0) target = $region17
    $region16: #{pallas_forward.1} parent=1 // pred_region
      _
    $region17: #{pallas_forward.1} parent=1 // pred_fallthru
      _
    // Predicated region
    $region18: #{pallas_forward.1} parent=1 // pred_check
      _
    $region19: #{pallas_forward.1} parent=1 // pred_check_branch
      %30 = sbr.rel (0) target = $region21
    $region20: #{pallas_forward.1} parent=1 // pred_region
      _
    $region21: #{pallas_forward.1} parent=1 // pred_fallthru
      _
    // Predicated region
    $region22: #{pallas_forward.1} parent=1 // pred_check
      _
    $region23: #{pallas_forward.1} parent=1 // pred_check_branch
      %32 = sbr.rel (0) target = $region25
    $region24: #{pallas_forward.1} parent=1 // pred_region
      _
    $region25: #{pallas_forward.1} parent=1 // pred_fallthru
      _
    // Predicated region
    $region26: #{pallas_forward.1} parent=1 // pred_check
      _
    $region27: #{pallas_forward.1} parent=1 // pred_check_branch
      %34 = sbr.rel (0) target = $region29
    $region28: #{pallas_forward.1} parent=1 // pred_region
      _
    $region29: #{pallas_forward.1} parent=1 // pred_fallthru
      _
    // Predicated region
    $region30: #{pallas_forward.1} parent=1 // pred_check
      _
    $region31: #{pallas_forward.1} parent=1 // pred_check_branch
      %36 = sbr.rel (0) target = $region33
    $region32: #{pallas_forward.1} parent=1 // pred_region
      _
    $region33: #{pallas_forward.1} parent=1 // pred_fallthru
      _
    // Predicated region
    $region34: #{pallas_forward.1} parent=1 // pred_check
      _
    $region35: #{pallas_forward.1} parent=1 // pred_check_branch
      %38 = sbr.rel (0) target = $region37
    $region36: #{pallas_forward.1} parent=1 // pred_region
      _
    $region37: #{pallas_forward.1} parent=1 // pred_fallthru
      _
    // Predicated region
    $region38: #{pallas_forward.1} parent=1 // pred_check
      _
    $region39: #{pallas_forward.1} parent=1 // pred_check_branch
      %40 = sbr.rel (0) target = $region41
    $region40: #{pallas_forward.1} parent=1 // pred_region
      _
    $region41: #{pallas_forward.1} parent=1 // pred_fallthru
      _
    // Predicated region
    $region42: #{pallas_forward.1} parent=1 // pred_check
      _
    $region43: #{pallas_forward.1} parent=1 // pred_check_branch
      %42 = sbr.rel (0) target = $region45
    $region44: #{pallas_forward.1} parent=1 // pred_region
      _
    $region45: #{pallas_forward.1} parent=1 // pred_fallthru
      _
    // Predicated region
    $region46: #{pallas_forward.1} parent=1 // pred_check
      _
    $region47: #{pallas_forward.1} parent=1 // pred_check_branch
      %44 = sbr.rel (0) target = $region49
    $region48: #{pallas_forward.1} parent=1 // pred_region
      _
    $region49: #{pallas_forward.1} parent=1 // pred_fallthru
      _
    // Predicated region
    $region50: #{pallas_forward.1} parent=1 // pred_check
      _
    $region51: #{pallas_forward.1} parent=1 // pred_check_branch
      %46 = sbr.rel (0) target = $region53
    $region52: #{pallas_forward.1} parent=1 // pred_region
      _
    $region53: #{pallas_forward.1} parent=1 // pred_fallthru
      _
    // Predicated region
    $region54: #{pallas_forward.1} parent=1 // pred_check
      _
    $region55: #{pallas_forward.1} parent=1 // pred_check_branch
      %48 = sbr.rel (0) target = $region57
    $region56: #{pallas_forward.1} parent=1 // pred_region
      _
    $region57: #{pallas_forward.1} parent=1 // pred_fallthru
      _
    // Predicated region
    $region58: #{pallas_forward.1} parent=1 // pred_check
      _
    $region59: #{pallas_forward.1} parent=1 // pred_check_branch
      %50 = sbr.rel (0) target = $region61
    $region60: #{pallas_forward.1} parent=1 // pred_region
      _
    $region61: #{pallas_forward.1} parent=1 // pred_fallthru
      _
    %v52 = vld [vmem:[%s0] sm:$0xff]
    %v53 = vld [vmem:[%s0 + $0x8] sm:$0xff]
    %v54 = vld [vmem:[%s1] sm:$0xff]
    %v55 = vld [vmem:[%s1 + $0x8] sm:$0xff]
    %v56 = vld [vmem:[%s1 + $0x10] sm:$0xff]
    %v57 = vld [vmem:[%s1 + $0x18] sm:$0xff]
    %v58 = vpack.c.bf16 %v55, %v54
    %v59 = vpack.c.bf16 %v57, %v56
    %v60 = vld [vmem:[%s2] sm:$0xff]
    %v61 = vld [vmem:[%s2 + $0x8] sm:$0xff]
    %v62 = vld [vmem:[%s3] sm:$0xff]
    %v63 = vld [vmem:[%s3 + $0x8] sm:$0xff]
    %v64 = vpack.c.bf16 %v53, %v52
    %v65 = vld [vmem:[%s4] sm:$0xf]
    %v66 = vld [vmem:[%s4 + $0x4] sm:$0xf]
    %v67 = vld [vmem:[%s4 + $0x8] sm:$0xf]
    %v68 = vld [vmem:[%s4 + $0xc] sm:$0xf]
    %v69 = vld [vmem:[%s5] sm:$0x1]
    %v71 = vlaneseq
    %v72 = vshrl.u32 %v71, 7
    %v73 = vsub.s32 0, %v72
    %v74 = vrot.slane %v69, %v73
    %v80 = vunpack.c.l.b16 %v65
    %v81 = vunpack.c.l.b16 %v66
    %v82 = vunpack.c.l.b16 %v67
    %v83 = vunpack.c.l.b16 %v68
    %v84 = vpack.c.b16 %v81, %v80
    %v85 = vpack.c.b16 %v83, %v82
    %vm88 = vcmask 261120
    %v90 = vsel %vm88, %v64, 0
    %92 = vmatprep.subr.bf16.mxu0 0
    %93 = vmatpush1.bf16.msra.mxu0 %v84
    %94 = vmatprep.subr.bf16.mxu0 0
    %95 = vmatpush1.bf16.msra.mxu0 %v85
    %96 = vmatprep.subr.bf16.mxu0 0
    %97 = vmatpush1.bf16.msra.mxu0 0
    %98 = vmatprep.subr.bf16.mxu0 0
    %99 = vmatpush1.bf16.msra.mxu0 0
    %100 = vmatprep.subr.bf16.mxu0 0
    %101 = vmatpush1.bf16.msra.mxu0 0
    %102 = vmatprep.subr.bf16.mxu0 0
    %103 = vmatpush1.bf16.msra.mxu0 0
    %104 = vmatprep.subr.bf16.mxu0 0
    %105 = vmatpush1.bf16.msra.mxu0 0
    %106 = vmatprep.subr.bf16.mxu0 0
    %107 = vmatpush1.bf16.msra.mxu0 0
    %108 = vmatprep.subr.bf16.mxu0 0
    %109 = vmatpush1.bf16.msra.mxu0 0
    %110 = vmatprep.subr.bf16.mxu0 0
    %111 = vmatpush1.bf16.msra.mxu0 0
    %112 = vmatprep.subr.bf16.mxu0 0
    %113 = vmatpush1.bf16.msra.mxu0 0
    %114 = vmatprep.subr.bf16.mxu0 0
    %115 = vmatpush1.bf16.msra.mxu0 0
    %116 = vmatprep.subr.bf16.mxu0 0
    %117 = vmatpush1.bf16.msra.mxu0 0
    %118 = vmatprep.subr.bf16.mxu0 0
    %119 = vmatpush1.bf16.msra.mxu0 0
    %120 = vmatprep.subr.bf16.mxu0 0
    %121 = vmatpush1.bf16.msra.mxu0 0
    %122 = vmatprep.subr.bf16.mxu0 0
    %123 = vmatpush1.bf16.msra.mxu0 0
    %124 = vmatprep.mubr.bf16.mxu0 0
    %125 = vmatmul.mubr.bf16.gmra.mrb[0].mxu0 %v90
    %v126 = vpop.f32.mrb[0].mxu0
    %v127 = vadd.f32 %v74, %v126
    %v128 = vpop.f32.mrb[0].mxu0
    %v129 = vpop.f32.mrb[0].mxu0
    %v130 = vadd.f32 %v74, %v129
    %v131 = vpop.f32.mrb[0].mxu0
    %132 = vdwg.mxu0
    %s133 = scalar_lea.vmem %s4, 16
    %v134 = vld [vmem:[%s133] sm:$0xf]
    %v135 = vld [vmem:[%s133 + $0x4] sm:$0xf]
    %v136 = vld [vmem:[%s133 + $0x8] sm:$0xf]
    %v137 = vld [vmem:[%s133 + $0xc] sm:$0xf]
    %s138 = scalar_lea.vmem %s5, 1
    %v139 = vld [vmem:[%s138] sm:$0x1]
    %v141 = vlaneseq
    %v142 = vshrl.u32 %v141, 7
    %v143 = vsub.s32 0, %v142
    %v144 = vrot.slane %v139, %v143
    %v150 = vunpack.c.l.b16 %v134
    %v151 = vunpack.c.l.b16 %v135
    %v152 = vunpack.c.l.b16 %v136
    %v153 = vunpack.c.l.b16 %v137
    %v154 = vpack.c.b16 %v151, %v150
    %v155 = vpack.c.b16 %v153, %v152
    %158 = vmatprep.subr.bf16.mxu0 0
    %159 = vmatpush1.bf16.msra.mxu0 %v154
    %160 = vmatprep.subr.bf16.mxu0 0
    %161 = vmatpush1.bf16.msra.mxu0 %v155
    %162 = vmatprep.subr.bf16.mxu0 0
    %163 = vmatpush1.bf16.msra.mxu0 0
    %164 = vmatprep.subr.bf16.mxu0 0
    %165 = vmatpush1.bf16.msra.mxu0 0
    %166 = vmatprep.subr.bf16.mxu0 0
    %167 = vmatpush1.bf16.msra.mxu0 0
    %168 = vmatprep.subr.bf16.mxu0 0
    %169 = vmatpush1.bf16.msra.mxu0 0
    %170 = vmatprep.subr.bf16.mxu0 0
    %171 = vmatpush1.bf16.msra.mxu0 0
    %172 = vmatprep.subr.bf16.mxu0 0
    %173 = vmatpush1.bf16.msra.mxu0 0
    %174 = vmatprep.subr.bf16.mxu0 0
    %175 = vmatpush1.bf16.msra.mxu0 0
    %176 = vmatprep.subr.bf16.mxu0 0
    %177 = vmatpush1.bf16.msra.mxu0 0
    %178 = vmatprep.subr.bf16.mxu0 0
    %179 = vmatpush1.bf16.msra.mxu0 0
    %180 = vmatprep.subr.bf16.mxu0 0
    %181 = vmatpush1.bf16.msra.mxu0 0
    %182 = vmatprep.subr.bf16.mxu0 0
    %183 = vmatpush1.bf16.msra.mxu0 0
    %184 = vmatprep.subr.bf16.mxu0 0
    %185 = vmatpush1.bf16.msra.mxu0 0
    %186 = vmatprep.subr.bf16.mxu0 0
    %187 = vmatpush1.bf16.msra.mxu0 0
    %188 = vmatprep.subr.bf16.mxu0 0
    %189 = vmatpush1.bf16.msra.mxu0 0
    %190 = vmatprep.mubr.bf16.mxu0 0
    %191 = vmatmul.mubr.bf16.gmra.mrb[0].mxu0 %v90
    %v192 = vpop.f32.mrb[0].mxu0
    %v193 = vadd.f32 %v144, %v192
    %v194 = vpop.f32.mrb[0].mxu0
    %v195 = vpop.f32.mrb[0].mxu0
    %v196 = vadd.f32 %v144, %v195
    %v197 = vpop.f32.mrb[0].mxu0
    %198 = vdwg.mxu0
    %s199 = scalar_lea.vmem %s4, 32
    %v200 = vld [vmem:[%s199] sm:$0xf]
    %v201 = vld [vmem:[%s199 + $0x4] sm:$0xf]
    %v202 = vld [vmem:[%s199 + $0x8] sm:$0xf]
    %v203 = vld [vmem:[%s199 + $0xc] sm:$0xf]
    %s204 = scalar_lea.vmem %s5, 2
    %v205 = vld [vmem:[%s204] sm:$0x1]
    %v207 = vlaneseq
    %v208 = vshrl.u32 %v207, 7
    %v209 = vsub.s32 0, %v208
    %v210 = vrot.slane %v205, %v209
    %v216 = vunpack.c.l.b16 %v200
    %v217 = vunpack.c.l.b16 %v201
    %v218 = vunpack.c.l.b16 %v202
    %v219 = vunpack.c.l.b16 %v203
    %v220 = vpack.c.b16 %v217, %v216
    %v221 = vpack.c.b16 %v219, %v218
    %224 = vmatprep.subr.bf16.mxu0 0
    %225 = vmatpush1.bf16.msra.mxu0 %v220
    %226 = vmatprep.subr.bf16.mxu0 0
    %227 = vmatpush1.bf16.msra.mxu0 %v221
    %228 = vmatprep.subr.bf16.mxu0 0
    %229 = vmatpush1.bf16.msra.mxu0 0
    %230 = vmatprep.subr.bf16.mxu0 0
    %231 = vmatpush1.bf16.msra.mxu0 0
    %232 = vmatprep.subr.bf16.mxu0 0
    %233 = vmatpush1.bf16.msra.mxu0 0
    %234 = vmatprep.subr.bf16.mxu0 0
    %235 = vmatpush1.bf16.msra.mxu0 0
    %236 = vmatprep.subr.bf16.mxu0 0
    %237 = vmatpush1.bf16.msra.mxu0 0
    %238 = vmatprep.subr.bf16.mxu0 0
    %239 = vmatpush1.bf16.msra.mxu0 0
    %240 = vmatprep.subr.bf16.mxu0 0
    %241 = vmatpush1.bf16.msra.mxu0 0
    %242 = vmatprep.subr.bf16.mxu0 0
    %243 = vmatpush1.bf16.msra.mxu0 0
    %244 = vmatprep.subr.bf16.mxu0 0
    %245 = vmatpush1.bf16.msra.mxu0 0
    %246 = vmatprep.subr.bf16.mxu0 0
    %247 = vmatpush1.bf16.msra.mxu0 0
    %248 = vmatprep.subr.bf16.mxu0 0
    %249 = vmatpush1.bf16.msra.mxu0 0
    %250 = vmatprep.subr.bf16.mxu0 0
    %251 = vmatpush1.bf16.msra.mxu0 0
    %252 = vmatprep.subr.bf16.mxu0 0
    %253 = vmatpush1.bf16.msra.mxu0 0
    %254 = vmatprep.subr.bf16.mxu0 0
    %255 = vmatpush1.bf16.msra.mxu0 0
    %256 = vmatprep.mubr.bf16.mxu0 0
    %257 = vmatmul.mubr.bf16.gmra.mrb[0].mxu0 %v90
    %v258 = vpop.f32.mrb[0].mxu0
    %v259 = vadd.f32 %v210, %v258
    %v260 = vpop.f32.mrb[0].mxu0
    %v261 = vpop.f32.mrb[0].mxu0
    %v262 = vadd.f32 %v210, %v261
    %v263 = vpop.f32.mrb[0].mxu0
    %264 = vdwg.mxu0
    %v265 = vpack.c.bf16 %v130, %v127
    %v266 = vpack.c.bf16 %v196, %v193
    %v267 = vpack.c.bf16 %v262, %v259
    %vm268 = vcmask 64512
    %v270 = vsel %vm268, %v265, 0
    %v273 = vsel %vm268, %v266, 0
    %275 = vmatprep.subr.bf16.mxu0 0
    %276 = vmatpush1.bf16.xpose.msra.mxu0 %v273
    %277 = vmatprep.subr.bf16.mxu0 0
    %278 = vmatpush1.bf16.xpose.msra.mxu0 0
    %279 = vmatprep.subr.bf16.mxu0 0
    %280 = vmatpush1.bf16.xpose.msra.mxu0 0
    %281 = vmatprep.subr.bf16.mxu0 0
    %282 = vmatpush1.bf16.xpose.msra.mxu0 0
    %283 = vmatprep.subr.bf16.mxu0 0
    %284 = vmatpush1.bf16.xpose.msra.mxu0 0
    %285 = vmatprep.subr.bf16.mxu0 0
    %286 = vmatpush1.bf16.xpose.msra.mxu0 0
    %287 = vmatprep.subr.bf16.mxu0 0
    %288 = vmatpush1.bf16.xpose.msra.mxu0 0
    %289 = vmatprep.subr.bf16.mxu0 0
    %290 = vmatpush1.bf16.xpose.msra.mxu0 0
    %291 = vmatprep.subr.bf16.mxu0 0
    %292 = vmatpush1.bf16.xpose.msra.mxu0 0
    %293 = vmatprep.subr.bf16.mxu0 0
    %294 = vmatpush1.bf16.xpose.msra.mxu0 0
    %295 = vmatprep.subr.bf16.mxu0 0
    %296 = vmatpush1.bf16.xpose.msra.mxu0 0
    %297 = vmatprep.subr.bf16.mxu0 0
    %298 = vmatpush1.bf16.xpose.msra.mxu0 0
    %299 = vmatprep.subr.bf16.mxu0 0
    %300 = vmatpush1.bf16.xpose.msra.mxu0 0
    %301 = vmatprep.subr.bf16.mxu0 0
    %302 = vmatpush1.bf16.xpose.msra.mxu0 0
    %303 = vmatprep.subr.bf16.mxu0 0
    %304 = vmatpush1.bf16.xpose.msra.mxu0 0
    %305 = vmatprep.subr.bf16.mxu0 0
    %306 = vmatpush1.bf16.xpose.msra.mxu0 0
    %307 = vmatprep.mubr.bf16.mxu0 0
    %308 = vmatmul.mubr.bf16.gmra.mrb[0].mxu0 %v270
    %v309 = vpop.f32.mrb[0].mxu0
    %v310 = vadd.f32 %v60, %v309
    %v311 = vpop.f32.mrb[0].mxu0
    %v312 = vpop.f32.mrb[0].mxu0
    %v313 = vadd.f32 %v61, %v312
    %v314 = vpop.f32.mrb[0].mxu0
    %315 = vdwg.mxu0
    %vm316 = vcmask 130048
    %v317 = vsel %vm316, %v310, -inf
    %318 = vmax.xlane.f32.xlu0 %v317
    %v319 = vpop.xlane.xlu0 %318
    %v320 = vsel %vm316, %v313, -inf
    %321 = vmax.xlane.f32.xlu0 %v320
    %v322 = vpop.xlane.xlu0 %321
    %v323 = vsub.f32 %v310, %v319
    %v324 = vsub.f32 %v313, %v322
    %v325 = vmul.f32 %v323, 1.442695
    %v326 = vpow.pop %v325
    %v327 = vmul.f32 %v324, 1.442695
    %v328 = vpow.pop %v327
    %v329 = vsel %vm316, %v326, 0.0
    %330 = vadd.xlane.f32.xlu0 %v329
    %v331 = vpop.xlane.xlu0 %330
    %v332 = vsel %vm316, %v328, 0.0
    %333 = vadd.xlane.f32.xlu0 %v332
    %v334 = vpop.xlane.xlu0 %333
    %v335 = vrcp.pop %v331
    %v336 = vrcp.pop %v334
    %v337 = vmul.f32 %v326, %v335
    %v338 = vmul.f32 %v328, %v336
    %v339 = vpack.c.bf16 %v338, %v337
    %v341 = vsel %vm316, %v339, 0
    %343 = vmatprep.subr.bf16.mxu0 0
    %344 = vmatpush1.bf16.msra.mxu0 %v267
    %345 = vmatprep.subr.bf16.mxu0 0
    %346 = vmatpush1.bf16.msra.mxu0 0
    %347 = vmatprep.subr.bf16.mxu0 0
    %348 = vmatpush1.bf16.msra.mxu0 0
    %349 = vmatprep.subr.bf16.mxu0 0
    %350 = vmatpush1.bf16.msra.mxu0 0
    %351 = vmatprep.subr.bf16.mxu0 0
    %352 = vmatpush1.bf16.msra.mxu0 0
    %353 = vmatprep.subr.bf16.mxu0 0
    %354 = vmatpush1.bf16.msra.mxu0 0
    %355 = vmatprep.subr.bf16.mxu0 0
    %356 = vmatpush1.bf16.msra.mxu0 0
    %357 = vmatprep.subr.bf16.mxu0 0
    %358 = vmatpush1.bf16.msra.mxu0 0
    %359 = vmatprep.subr.bf16.mxu0 0
    %360 = vmatpush1.bf16.msra.mxu0 0
    %361 = vmatprep.subr.bf16.mxu0 0
    %362 = vmatpush1.bf16.msra.mxu0 0
    %363 = vmatprep.subr.bf16.mxu0 0
    %364 = vmatpush1.bf16.msra.mxu0 0
    %365 = vmatprep.subr.bf16.mxu0 0
    %366 = vmatpush1.bf16.msra.mxu0 0
    %367 = vmatprep.subr.bf16.mxu0 0
    %368 = vmatpush1.bf16.msra.mxu0 0
    %369 = vmatprep.subr.bf16.mxu0 0
    %370 = vmatpush1.bf16.msra.mxu0 0
    %371 = vmatprep.subr.bf16.mxu0 0
    %372 = vmatpush1.bf16.msra.mxu0 0
    %373 = vmatprep.subr.bf16.mxu0 0
    %374 = vmatpush1.bf16.msra.mxu0 0
    %375 = vmatprep.mubr.bf16.mxu0 0
    %376 = vmatmul.mubr.bf16.gmra.mrb[0].mxu0 %v341
    %v377 = vpop.f32.mrb[0].mxu0
    %v378 = vadd.f32 0.0, %v377
    %v379 = vpop.f32.mrb[0].mxu0
    %v380 = vpop.f32.mrb[0].mxu0
    %v381 = vadd.f32 0.0, %v380
    %v382 = vpop.f32.mrb[0].mxu0
    %383 = vdwg.mxu0
    %v384 = vpack.c.bf16 %v381, %v378
    %v385 = vld [vmem:[%s6] sm:$0xf]
    %387 = vrot.lane.b32.xlu0 %v265, 120
    %v388 = vpop.permute.xlu0 %387
    %390 = vrot.lane.b32.xlu0 %v266, 120
    %v391 = vpop.permute.xlu0 %390
    %v393 = vsel %vm268, %v388, 0
    %v396 = vsel %vm268, %v391, 0
    %398 = vmatprep.subr.bf16.mxu0 0
    %399 = vmatpush1.bf16.xpose.msra.mxu0 %v396
    %400 = vmatprep.subr.bf16.mxu0 0
    %401 = vmatpush1.bf16.xpose.msra.mxu0 0
    %402 = vmatprep.subr.bf16.mxu0 0
    %403 = vmatpush1.bf16.xpose.msra.mxu0 0
    %404 = vmatprep.subr.bf16.mxu0 0
    %405 = vmatpush1.bf16.xpose.msra.mxu0 0
    %406 = vmatprep.subr.bf16.mxu0 0
    %407 = vmatpush1.bf16.xpose.msra.mxu0 0
    %408 = vmatprep.subr.bf16.mxu0 0
    %409 = vmatpush1.bf16.xpose.msra.mxu0 0
    %410 = vmatprep.subr.bf16.mxu0 0
    %411 = vmatpush1.bf16.xpose.msra.mxu0 0
    %412 = vmatprep.subr.bf16.mxu0 0
    %413 = vmatpush1.bf16.xpose.msra.mxu0 0
    %414 = vmatprep.subr.bf16.mxu0 0
    %415 = vmatpush1.bf16.xpose.msra.mxu0 0
    %416 = vmatprep.subr.bf16.mxu0 0
    %417 = vmatpush1.bf16.xpose.msra.mxu0 0
    %418 = vmatprep.subr.bf16.mxu0 0
    %419 = vmatpush1.bf16.xpose.msra.mxu0 0
    %420 = vmatprep.subr.bf16.mxu0 0
    %421 = vmatpush1.bf16.xpose.msra.mxu0 0
    %422 = vmatprep.subr.bf16.mxu0 0
    %423 = vmatpush1.bf16.xpose.msra.mxu0 0
    %424 = vmatprep.subr.bf16.mxu0 0
    %425 = vmatpush1.bf16.xpose.msra.mxu0 0
    %426 = vmatprep.subr.bf16.mxu0 0
    %427 = vmatpush1.bf16.xpose.msra.mxu0 0
    %428 = vmatprep.subr.bf16.mxu0 0
    %429 = vmatpush1.bf16.xpose.msra.mxu0 0
    %430 = vmatprep.mubr.bf16.mxu0 0
    %431 = vmatmul.mubr.bf16.gmra.mrb[0].mxu0 %v393
    %v432 = vpop.f32.mrb[0].mxu0
    %v433 = vadd.f32 %v60, %v432
    %v434 = vpop.f32.mrb[0].mxu0
    %v435 = vpop.f32.mrb[0].mxu0
    %v436 = vadd.f32 %v61, %v435
    %v437 = vpop.f32.mrb[0].mxu0
    %438 = vdwg.mxu0
    %v439 = vsel %vm316, %v433, -inf
    %440 = vmax.xlane.f32.xlu0 %v439
    %v441 = vpop.xlane.xlu0 %440
    %v442 = vsel %vm316, %v436, -inf
    %443 = vmax.xlane.f32.xlu0 %v442
    %v444 = vpop.xlane.xlu0 %443
    %v445 = vsub.f32 %v433, %v441
    %v446 = vsub.f32 %v436, %v444
    %v447 = vmul.f32 %v445, 1.442695
    %v448 = vpow.pop %v447
    %v449 = vmul.f32 %v446, 1.442695
    %v450 = vpow.pop %v449
    %v451 = vsel %vm316, %v448, 0.0
    %452 = vadd.xlane.f32.xlu0 %v451
    %v453 = vpop.xlane.xlu0 %452
    %v454 = vsel %vm316, %v450, 0.0
    %455 = vadd.xlane.f32.xlu0 %v454
    %v456 = vpop.xlane.xlu0 %455
    %v457 = vrcp.pop %v453
    %v458 = vrcp.pop %v456
    %v459 = vmul.f32 %v448, %v457
    %v460 = vmul.f32 %v450, %v458
    %v461 = vpack.c.bf16 %v460, %v459
    %463 = vrot.lane.b32.xlu0 %v267, 120
    %v464 = vpop.permute.xlu0 %463
    %v467 = vsel %vm316, %v461, 0
    %469 = vmatprep.subr.bf16.mxu0 0
    %470 = vmatpush1.bf16.msra.mxu0 %v464
    %471 = vmatprep.subr.bf16.mxu0 0
    %472 = vmatpush1.bf16.msra.mxu0 0
    %473 = vmatprep.subr.bf16.mxu0 0
    %474 = vmatpush1.bf16.msra.mxu0 0
    %475 = vmatprep.subr.bf16.mxu0 0
    %476 = vmatpush1.bf16.msra.mxu0 0
    %477 = vmatprep.subr.bf16.mxu0 0
    %478 = vmatpush1.bf16.msra.mxu0 0
    %479 = vmatprep.subr.bf16.mxu0 0
    %480 = vmatpush1.bf16.msra.mxu0 0
    %481 = vmatprep.subr.bf16.mxu0 0
    %482 = vmatpush1.bf16.msra.mxu0 0
    %483 = vmatprep.subr.bf16.mxu0 0
    %484 = vmatpush1.bf16.msra.mxu0 0
    %485 = vmatprep.subr.bf16.mxu0 0
    %486 = vmatpush1.bf16.msra.mxu0 0
    %487 = vmatprep.subr.bf16.mxu0 0
    %488 = vmatpush1.bf16.msra.mxu0 0
    %489 = vmatprep.subr.bf16.mxu0 0
    %490 = vmatpush1.bf16.msra.mxu0 0
    %491 = vmatprep.subr.bf16.mxu0 0
    %492 = vmatpush1.bf16.msra.mxu0 0
    %493 = vmatprep.subr.bf16.mxu0 0
    %494 = vmatpush1.bf16.msra.mxu0 0
    %495 = vmatprep.subr.bf16.mxu0 0
    %496 = vmatpush1.bf16.msra.mxu0 0
    %497 = vmatprep.subr.bf16.mxu0 0
    %498 = vmatpush1.bf16.msra.mxu0 0
    %499 = vmatprep.subr.bf16.mxu0 0
    %500 = vmatpush1.bf16.msra.mxu0 0
    %501 = vmatprep.mubr.bf16.mxu0 0
    %502 = vmatmul.mubr.bf16.gmra.mrb[0].mxu0 %v467
    %v503 = vpop.f32.mrb[0].mxu0
    %v504 = vadd.f32 0.0, %v503
    %v505 = vpop.f32.mrb[0].mxu0
    %v506 = vpop.f32.mrb[0].mxu0
    %v507 = vadd.f32 0.0, %v506
    %v508 = vpop.f32.mrb[0].mxu0
    %509 = vdwg.mxu0
    %v510 = vpack.c.bf16 %v507, %v504
    %s511 = scalar_lea.vmem %s6, 4
    %v512 = vld [vmem:[%s511] sm:$0xf]
    %v514 = vsel %vm268, %v510, 0
    %vm516 = vcmask 1043456
    %v518 = vsel %vm516, %v512, 0
    %520 = vmatprep.subr.bf16.mxu0 0
    %521 = vmatpush1.bf16.msra.mxu0 %v518
    %522 = vmatprep.subr.bf16.mxu0 0
    %523 = vmatpush1.bf16.msra.mxu0 0
    %524 = vmatprep.subr.bf16.mxu0 0
    %525 = vmatpush1.bf16.msra.mxu0 0
    %526 = vmatprep.subr.bf16.mxu0 0
    %527 = vmatpush1.bf16.msra.mxu0 0
    %528 = vmatprep.subr.bf16.mxu0 0
    %529 = vmatpush1.bf16.msra.mxu0 0
    %530 = vmatprep.subr.bf16.mxu0 0
    %531 = vmatpush1.bf16.msra.mxu0 0
    %532 = vmatprep.subr.bf16.mxu0 0
    %533 = vmatpush1.bf16.msra.mxu0 0
    %534 = vmatprep.subr.bf16.mxu0 0
    %535 = vmatpush1.bf16.msra.mxu0 0
    %536 = vmatprep.subr.bf16.mxu0 0
    %537 = vmatpush1.bf16.msra.mxu0 0
    %538 = vmatprep.subr.bf16.mxu0 0
    %539 = vmatpush1.bf16.msra.mxu0 0
    %540 = vmatprep.subr.bf16.mxu0 0
    %541 = vmatpush1.bf16.msra.mxu0 0
    %542 = vmatprep.subr.bf16.mxu0 0
    %543 = vmatpush1.bf16.msra.mxu0 0
    %544 = vmatprep.subr.bf16.mxu0 0
    %545 = vmatpush1.bf16.msra.mxu0 0
    %546 = vmatprep.subr.bf16.mxu0 0
    %547 = vmatpush1.bf16.msra.mxu0 0
    %548 = vmatprep.subr.bf16.mxu0 0
    %549 = vmatpush1.bf16.msra.mxu0 0
    %550 = vmatprep.subr.bf16.mxu0 0
    %551 = vmatpush1.bf16.msra.mxu0 0
    %552 = vmatprep.mubr.bf16.mxu0 0
    %553 = vmatmul.mubr.bf16.gmra.mrb[0].mxu0 %v514
    %v554 = vpop.f32.mrb[0].mxu0
    %v555 = vadd.f32 0.0, %v554
    %v556 = vpop.f32.mrb[0].mxu0
    %v557 = vpop.f32.mrb[0].mxu0
    %v558 = vadd.f32 0.0, %v557
    %v559 = vpop.f32.mrb[0].mxu0
    %560 = vdwg.mxu0
    %v562 = vsel %vm268, %v384, 0
    %v565 = vsel %vm516, %v385, 0
    %567 = vmatprep.subr.bf16.mxu0 0
    %568 = vmatpush1.bf16.msra.mxu0 %v565
    %569 = vmatprep.subr.bf16.mxu0 0
    %570 = vmatpush1.bf16.msra.mxu0 0
    %571 = vmatprep.subr.bf16.mxu0 0
    %572 = vmatpush1.bf16.msra.mxu0 0
    %573 = vmatprep.subr.bf16.mxu0 0
    %574 = vmatpush1.bf16.msra.mxu0 0
    %575 = vmatprep.subr.bf16.mxu0 0
    %576 = vmatpush1.bf16.msra.mxu0 0
    %577 = vmatprep.subr.bf16.mxu0 0
    %578 = vmatpush1.bf16.msra.mxu0 0
    %579 = vmatprep.subr.bf16.mxu0 0
    %580 = vmatpush1.bf16.msra.mxu0 0
    %581 = vmatprep.subr.bf16.mxu0 0
    %582 = vmatpush1.bf16.msra.mxu0 0
    %583 = vmatprep.subr.bf16.mxu0 0
    %584 = vmatpush1.bf16.msra.mxu0 0
    %585 = vmatprep.subr.bf16.mxu0 0
    %586 = vmatpush1.bf16.msra.mxu0 0
    %587 = vmatprep.subr.bf16.mxu0 0
    %588 = vmatpush1.bf16.msra.mxu0 0
    %589 = vmatprep.subr.bf16.mxu0 0
    %590 = vmatpush1.bf16.msra.mxu0 0
    %591 = vmatprep.subr.bf16.mxu0 0
    %592 = vmatpush1.bf16.msra.mxu0 0
    %593 = vmatprep.subr.bf16.mxu0 0
    %594 = vmatpush1.bf16.msra.mxu0 0
    %595 = vmatprep.subr.bf16.mxu0 0
    %596 = vmatpush1.bf16.msra.mxu0 0
    %597 = vmatprep.subr.bf16.mxu0 0
    %598 = vmatpush1.bf16.msra.mxu0 0
    %599 = vmatprep.mubr.bf16.mxu0 0
    %600 = vmatmul.mubr.bf16.gmra.mrb[0].mxu0 %v562
    %v601 = vpop.f32.mrb[0].mxu0
    %v602 = vadd.f32 %v555, %v601
    %v603 = vpop.f32.mrb[0].mxu0
    %v604 = vpop.f32.mrb[0].mxu0
    %v605 = vadd.f32 %v558, %v604
    %v606 = vpop.f32.mrb[0].mxu0
    %607 = vdwg.mxu0
    %608 = vrot.lane.b32.xlu0 %v265, 112
    %v609 = vpop.permute.xlu0 %608
    %610 = vrot.lane.b32.xlu0 %v266, 112
    %v611 = vpop.permute.xlu0 %610
    %v613 = vsel %vm268, %v609, 0
    %v616 = vsel %vm268, %v611, 0
    %618 = vmatprep.subr.bf16.mxu0 0
    %619 = vmatpush1.bf16.xpose.msra.mxu0 %v616
    %620 = vmatprep.subr.bf16.mxu0 0
    %621 = vmatpush1.bf16.xpose.msra.mxu0 0
    %622 = vmatprep.subr.bf16.mxu0 0
    %623 = vmatpush1.bf16.xpose.msra.mxu0 0
    %624 = vmatprep.subr.bf16.mxu0 0
    %625 = vmatpush1.bf16.xpose.msra.mxu0 0
    %626 = vmatprep.subr.bf16.mxu0 0
    %627 = vmatpush1.bf16.xpose.msra.mxu0 0
    %628 = vmatprep.subr.bf16.mxu0 0
    %629 = vmatpush1.bf16.xpose.msra.mxu0 0
    %630 = vmatprep.subr.bf16.mxu0 0
    %631 = vmatpush1.bf16.xpose.msra.mxu0 0
    %632 = vmatprep.subr.bf16.mxu0 0
    %633 = vmatpush1.bf16.xpose.msra.mxu0 0
    %634 = vmatprep.subr.bf16.mxu0 0
    %635 = vmatpush1.bf16.xpose.msra.mxu0 0
    %636 = vmatprep.subr.bf16.mxu0 0
    %637 = vmatpush1.bf16.xpose.msra.mxu0 0
    %638 = vmatprep.subr.bf16.mxu0 0
    %639 = vmatpush1.bf16.xpose.msra.mxu0 0
    %640 = vmatprep.subr.bf16.mxu0 0
    %641 = vmatpush1.bf16.xpose.msra.mxu0 0
    %642 = vmatprep.subr.bf16.mxu0 0
    %643 = vmatpush1.bf16.xpose.msra.mxu0 0
    %644 = vmatprep.subr.bf16.mxu0 0
    %645 = vmatpush1.bf16.xpose.msra.mxu0 0
    %646 = vmatprep.subr.bf16.mxu0 0
    %647 = vmatpush1.bf16.xpose.msra.mxu0 0
    %648 = vmatprep.subr.bf16.mxu0 0
    %649 = vmatpush1.bf16.xpose.msra.mxu0 0
    %650 = vmatprep.mubr.bf16.mxu0 0
    %651 = vmatmul.mubr.bf16.gmra.mrb[0].mxu0 %v613
    %v652 = vpop.f32.mrb[0].mxu0
    %v653 = vadd.f32 %v60, %v652
    %v654 = vpop.f32.mrb[0].mxu0
    %v655 = vpop.f32.mrb[0].mxu0
    %v656 = vadd.f32 %v61, %v655
    %v657 = vpop.f32.mrb[0].mxu0
    %658 = vdwg.mxu0
    %v659 = vsel %vm316, %v653, -inf
    %660 = vmax.xlane.f32.xlu0 %v659
    %v661 = vpop.xlane.xlu0 %660
    %v662 = vsel %vm316, %v656, -inf
    %663 = vmax.xlane.f32.xlu0 %v662
    %v664 = vpop.xlane.xlu0 %663
    %v665 = vsub.f32 %v653, %v661
    %v666 = vsub.f32 %v656, %v664
    %v667 = vmul.f32 %v665, 1.442695
    %v668 = vpow.pop %v667
    %v669 = vmul.f32 %v666, 1.442695
    %v670 = vpow.pop %v669
    %v671 = vsel %vm316, %v668, 0.0
    %672 = vadd.xlane.f32.xlu0 %v671
    %v673 = vpop.xlane.xlu0 %672
    %v674 = vsel %vm316, %v670, 0.0
    %675 = vadd.xlane.f32.xlu0 %v674
    %v676 = vpop.xlane.xlu0 %675
    %v677 = vrcp.pop %v673
    %v678 = vrcp.pop %v676
    %v679 = vmul.f32 %v668, %v677
    %v680 = vmul.f32 %v670, %v678
    %v681 = vpack.c.bf16 %v680, %v679
    %682 = vrot.lane.b32.xlu0 %v267, 112
    %v683 = vpop.permute.xlu0 %682
    %v686 = vsel %vm316, %v681, 0
    %688 = vmatprep.subr.bf16.mxu0 0
    %689 = vmatpush1.bf16.msra.mxu0 %v683
    %690 = vmatprep.subr.bf16.mxu0 0
    %691 = vmatpush1.bf16.msra.mxu0 0
    %692 = vmatprep.subr.bf16.mxu0 0
    %693 = vmatpush1.bf16.msra.mxu0 0
    %694 = vmatprep.subr.bf16.mxu0 0
    %695 = vmatpush1.bf16.msra.mxu0 0
    %696 = vmatprep.subr.bf16.mxu0 0
    %697 = vmatpush1.bf16.msra.mxu0 0
    %698 = vmatprep.subr.bf16.mxu0 0
    %699 = vmatpush1.bf16.msra.mxu0 0
    %700 = vmatprep.subr.bf16.mxu0 0
    %701 = vmatpush1.bf16.msra.mxu0 0
    %702 = vmatprep.subr.bf16.mxu0 0
    %703 = vmatpush1.bf16.msra.mxu0 0
    %704 = vmatprep.subr.bf16.mxu0 0
    %705 = vmatpush1.bf16.msra.mxu0 0
    %706 = vmatprep.subr.bf16.mxu0 0
    %707 = vmatpush1.bf16.msra.mxu0 0
    %708 = vmatprep.subr.bf16.mxu0 0
    %709 = vmatpush1.bf16.msra.mxu0 0
    %710 = vmatprep.subr.bf16.mxu0 0
    %711 = vmatpush1.bf16.msra.mxu0 0
    %712 = vmatprep.subr.bf16.mxu0 0
    %713 = vmatpush1.bf16.msra.mxu0 0
    %714 = vmatprep.subr.bf16.mxu0 0
    %715 = vmatpush1.bf16.msra.mxu0 0
    %716 = vmatprep.subr.bf16.mxu0 0
    %717 = vmatpush1.bf16.msra.mxu0 0
    %718 = vmatprep.subr.bf16.mxu0 0
    %719 = vmatpush1.bf16.msra.mxu0 0
    %720 = vmatprep.mubr.bf16.mxu0 0
    %721 = vmatmul.mubr.bf16.gmra.mrb[0].mxu0 %v686
    %v722 = vpop.f32.mrb[0].mxu0
    %v723 = vadd.f32 0.0, %v722
    %v724 = vpop.f32.mrb[0].mxu0
    %v725 = vpop.f32.mrb[0].mxu0
    %v726 = vadd.f32 0.0, %v725
    %v727 = vpop.f32.mrb[0].mxu0
    %728 = vdwg.mxu0
    %v729 = vpack.c.bf16 %v726, %v723
    %s730 = scalar_lea.vmem %s6, 8
    %v731 = vld [vmem:[%s730] sm:$0xf]
    %v733 = vsel %vm268, %v729, 0
    %v736 = vsel %vm516, %v731, 0
    %738 = vmatprep.subr.bf16.mxu0 0
    %739 = vmatpush1.bf16.msra.mxu0 %v736
    %740 = vmatprep.subr.bf16.mxu0 0
    %741 = vmatpush1.bf16.msra.mxu0 0
    %742 = vmatprep.subr.bf16.mxu0 0
    %743 = vmatpush1.bf16.msra.mxu0 0
    %744 = vmatprep.subr.bf16.mxu0 0
    %745 = vmatpush1.bf16.msra.mxu0 0
    %746 = vmatprep.subr.bf16.mxu0 0
    %747 = vmatpush1.bf16.msra.mxu0 0
    %748 = vmatprep.subr.bf16.mxu0 0
    %749 = vmatpush1.bf16.msra.mxu0 0
    %750 = vmatprep.subr.bf16.mxu0 0
    %751 = vmatpush1.bf16.msra.mxu0 0
    %752 = vmatprep.subr.bf16.mxu0 0
    %753 = vmatpush1.bf16.msra.mxu0 0
    %754 = vmatprep.subr.bf16.mxu0 0
    %755 = vmatpush1.bf16.msra.mxu0 0
    %756 = vmatprep.subr.bf16.mxu0 0
    %757 = vmatpush1.bf16.msra.mxu0 0
    %758 = vmatprep.subr.bf16.mxu0 0
    %759 = vmatpush1.bf16.msra.mxu0 0
    %760 = vmatprep.subr.bf16.mxu0 0
    %761 = vmatpush1.bf16.msra.mxu0 0
    %762 = vmatprep.subr.bf16.mxu0 0
    %763 = vmatpush1.bf16.msra.mxu0 0
    %764 = vmatprep.subr.bf16.mxu0 0
    %765 = vmatpush1.bf16.msra.mxu0 0
    %766 = vmatprep.subr.bf16.mxu0 0
    %767 = vmatpush1.bf16.msra.mxu0 0
    %768 = vmatprep.subr.bf16.mxu0 0
    %769 = vmatpush1.bf16.msra.mxu0 0
    %770 = vmatprep.mubr.bf16.mxu0 0
    %771 = vmatmul.mubr.bf16.gmra.mrb[0].mxu0 %v733
    %v772 = vpop.f32.mrb[0].mxu0
    %v773 = vadd.f32 0.0, %v772
    %v774 = vpop.f32.mrb[0].mxu0
    %v775 = vpop.f32.mrb[0].mxu0
    %v776 = vadd.f32 0.0, %v775
    %v777 = vpop.f32.mrb[0].mxu0
    %778 = vdwg.mxu0
    %v779 = vadd.f32 %v602, %v773
    %v780 = vadd.f32 %v605, %v776
    %781 = vrot.lane.b32.xlu0 %v265, 104
    %v782 = vpop.permute.xlu0 %781
    %783 = vrot.lane.b32.xlu0 %v266, 104
    %v784 = vpop.permute.xlu0 %783
    %v786 = vsel %vm268, %v782, 0
    %v789 = vsel %vm268, %v784, 0
    %791 = vmatprep.subr.bf16.mxu0 0
    %792 = vmatpush1.bf16.xpose.msra.mxu0 %v789
    %793 = vmatprep.subr.bf16.mxu0 0
    %794 = vmatpush1.bf16.xpose.msra.mxu0 0
    %795 = vmatprep.subr.bf16.mxu0 0
    %796 = vmatpush1.bf16.xpose.msra.mxu0 0
    %797 = vmatprep.subr.bf16.mxu0 0
    %798 = vmatpush1.bf16.xpose.msra.mxu0 0
    %799 = vmatprep.subr.bf16.mxu0 0
    %800 = vmatpush1.bf16.xpose.msra.mxu0 0
    %801 = vmatprep.subr.bf16.mxu0 0
    %802 = vmatpush1.bf16.xpose.msra.mxu0 0
    %803 = vmatprep.subr.bf16.mxu0 0
    %804 = vmatpush1.bf16.xpose.msra.mxu0 0
    %805 = vmatprep.subr.bf16.mxu0 0
    %806 = vmatpush1.bf16.xpose.msra.mxu0 0
    %807 = vmatprep.subr.bf16.mxu0 0
    %808 = vmatpush1.bf16.xpose.msra.mxu0 0
    %809 = vmatprep.subr.bf16.mxu0 0
    %810 = vmatpush1.bf16.xpose.msra.mxu0 0
    %811 = vmatprep.subr.bf16.mxu0 0
    %812 = vmatpush1.bf16.xpose.msra.mxu0 0
    %813 = vmatprep.subr.bf16.mxu0 0
    %814 = vmatpush1.bf16.xpose.msra.mxu0 0
    %815 = vmatprep.subr.bf16.mxu0 0
    %816 = vmatpush1.bf16.xpose.msra.mxu0 0
    %817 = vmatprep.subr.bf16.mxu0 0
    %818 = vmatpush1.bf16.xpose.msra.mxu0 0
    %819 = vmatprep.subr.bf16.mxu0 0
    %820 = vmatpush1.bf16.xpose.msra.mxu0 0
    %821 = vmatprep.subr.bf16.mxu0 0
    %822 = vmatpush1.bf16.xpose.msra.mxu0 0
    %823 = vmatprep.mubr.bf16.mxu0 0
    %824 = vmatmul.mubr.bf16.gmra.mrb[0].mxu0 %v786
    %v825 = vpop.f32.mrb[0].mxu0
    %v826 = vadd.f32 %v60, %v825
    %v827 = vpop.f32.mrb[0].mxu0
    %v828 = vpop.f32.mrb[0].mxu0
    %v829 = vadd.f32 %v61, %v828
    %v830 = vpop.f32.mrb[0].mxu0
    %831 = vdwg.mxu0
    %v832 = vsel %vm316, %v826, -inf
    %833 = vmax.xlane.f32.xlu0 %v832
    %v834 = vpop.xlane.xlu0 %833
    %v835 = vsel %vm316, %v829, -inf
    %836 = vmax.xlane.f32.xlu0 %v835
    %v837 = vpop.xlane.xlu0 %836
    %v838 = vsub.f32 %v826, %v834
    %v839 = vsub.f32 %v829, %v837
    %v840 = vmul.f32 %v838, 1.442695
    %v841 = vpow.pop %v840
    %v842 = vmul.f32 %v839, 1.442695
    %v843 = vpow.pop %v842
    %v844 = vsel %vm316, %v841, 0.0
    %845 = vadd.xlane.f32.xlu0 %v844
    %v846 = vpop.xlane.xlu0 %845
    %v847 = vsel %vm316, %v843, 0.0
    %848 = vadd.xlane.f32.xlu0 %v847
    %v849 = vpop.xlane.xlu0 %848
    %v850 = vrcp.pop %v846
    %v851 = vrcp.pop %v849
    %v852 = vmul.f32 %v841, %v850
    %v853 = vmul.f32 %v843, %v851
    %v854 = vpack.c.bf16 %v853, %v852
    %855 = vrot.lane.b32.xlu0 %v267, 104
    %v856 = vpop.permute.xlu0 %855
    %v859 = vsel %vm316, %v854, 0
    %861 = vmatprep.subr.bf16.mxu0 0
    %862 = vmatpush1.bf16.msra.mxu0 %v856
    %863 = vmatprep.subr.bf16.mxu0 0
    %864 = vmatpush1.bf16.msra.mxu0 0
    %865 = vmatprep.subr.bf16.mxu0 0
    %866 = vmatpush1.bf16.msra.mxu0 0
    %867 = vmatprep.subr.bf16.mxu0 0
    %868 = vmatpush1.bf16.msra.mxu0 0
    %869 = vmatprep.subr.bf16.mxu0 0
    %870 = vmatpush1.bf16.msra.mxu0 0
    %871 = vmatprep.subr.bf16.mxu0 0
    %872 = vmatpush1.bf16.msra.mxu0 0
    %873 = vmatprep.subr.bf16.mxu0 0
    %874 = vmatpush1.bf16.msra.mxu0 0
    %875 = vmatprep.subr.bf16.mxu0 0
    %876 = vmatpush1.bf16.msra.mxu0 0
    %877 = vmatprep.subr.bf16.mxu0 0
    %878 = vmatpush1.bf16.msra.mxu0 0
    %879 = vmatprep.subr.bf16.mxu0 0
    %880 = vmatpush1.bf16.msra.mxu0 0
    %881 = vmatprep.subr.bf16.mxu0 0
    %882 = vmatpush1.bf16.msra.mxu0 0
    %883 = vmatprep.subr.bf16.mxu0 0
    %884 = vmatpush1.bf16.msra.mxu0 0
    %885 = vmatprep.subr.bf16.mxu0 0
    %886 = vmatpush1.bf16.msra.mxu0 0
    %887 = vmatprep.subr.bf16.mxu0 0
    %888 = vmatpush1.bf16.msra.mxu0 0
    %889 = vmatprep.subr.bf16.mxu0 0
    %890 = vmatpush1.bf16.msra.mxu0 0
    %891 = vmatprep.subr.bf16.mxu0 0
    %892 = vmatpush1.bf16.msra.mxu0 0
    %893 = vmatprep.mubr.bf16.mxu0 0
    %894 = vmatmul.mubr.bf16.gmra.mrb[0].mxu0 %v859
    %v895 = vpop.f32.mrb[0].mxu0
    %v896 = vadd.f32 0.0, %v895
    %v897 = vpop.f32.mrb[0].mxu0
    %v898 = vpop.f32.mrb[0].mxu0
    %v899 = vadd.f32 0.0, %v898
    %v900 = vpop.f32.mrb[0].mxu0
    %901 = vdwg.mxu0
    %v902 = vpack.c.bf16 %v899, %v896
    %s903 = scalar_lea.vmem %s6, 12
    %v904 = vld [vmem:[%s903] sm:$0xf]
    %v906 = vsel %vm268, %v902, 0
    %v909 = vsel %vm516, %v904, 0
    %911 = vmatprep.subr.bf16.mxu0 0
    %912 = vmatpush1.bf16.msra.mxu0 %v909
    %913 = vmatprep.subr.bf16.mxu0 0
    %914 = vmatpush1.bf16.msra.mxu0 0
    %915 = vmatprep.subr.bf16.mxu0 0
    %916 = vmatpush1.bf16.msra.mxu0 0
    %917 = vmatprep.subr.bf16.mxu0 0
    %918 = vmatpush1.bf16.msra.mxu0 0
    %919 = vmatprep.subr.bf16.mxu0 0
    %920 = vmatpush1.bf16.msra.mxu0 0
    %921 = vmatprep.subr.bf16.mxu0 0
    %922 = vmatpush1.bf16.msra.mxu0 0
    %923 = vmatprep.subr.bf16.mxu0 0
    %924 = vmatpush1.bf16.msra.mxu0 0
    %925 = vmatprep.subr.bf16.mxu0 0
    %926 = vmatpush1.bf16.msra.mxu0 0
    %927 = vmatprep.subr.bf16.mxu0 0
    %928 = vmatpush1.bf16.msra.mxu0 0
    %929 = vmatprep.subr.bf16.mxu0 0
    %930 = vmatpush1.bf16.msra.mxu0 0
    %931 = vmatprep.subr.bf16.mxu0 0
    %932 = vmatpush1.bf16.msra.mxu0 0
    %933 = vmatprep.subr.bf16.mxu0 0
    %934 = vmatpush1.bf16.msra.mxu0 0
    %935 = vmatprep.subr.bf16.mxu0 0
    %936 = vmatpush1.bf16.msra.mxu0 0
    %937 = vmatprep.subr.bf16.mxu0 0
    %938 = vmatpush1.bf16.msra.mxu0 0
    %939 = vmatprep.subr.bf16.mxu0 0
    %940 = vmatpush1.bf16.msra.mxu0 0
    %941 = vmatprep.subr.bf16.mxu0 0
    %942 = vmatpush1.bf16.msra.mxu0 0
    %943 = vmatprep.mubr.bf16.mxu0 0
    %944 = vmatmul.mubr.bf16.gmra.mrb[0].mxu0 %v906
    %v945 = vpop.f32.mrb[0].mxu0
    %v946 = vadd.f32 0.0, %v945
    %v947 = vpop.f32.mrb[0].mxu0
    %v948 = vpop.f32.mrb[0].mxu0
    %v949 = vadd.f32 0.0, %v948
    %v950 = vpop.f32.mrb[0].mxu0
    %951 = vdwg.mxu0
    %v952 = vadd.f32 %v779, %v946
    %v953 = vadd.f32 %v780, %v949
    %s954 = scalar_lea.vmem %s5, 3
    %v955 = vld [vmem:[%s954] sm:$0x1]
    %v957 = vlaneseq
    %v958 = vshrl.u32 %v957, 7
    %v959 = vsub.s32 0, %v958
    %v960 = vrot.slane %v955, %v959
    %v962 = vadd.f32 %v952, %v960
    %v963 = vadd.f32 %v953, %v960
    %v964 = vpack.c.bf16 %v963, %v962
    %v965 = vld [vmem:[%s11] sm:$0xf]
    %v966 = vld [vmem:[%s11 + $0x4] sm:$0xf]
    %v967 = vld [vmem:[%s11 + $0x8] sm:$0xf]
    %v968 = vld [vmem:[%s11 + $0xc] sm:$0xf]
    %v969 = vld [vmem:[%s12] sm:$0x1]
    %v971 = vlaneseq
    %v972 = vshrl.u32 %v971, 7
    %v973 = vsub.s32 0, %v972
    %v974 = vrot.slane %v969, %v973
    %v980 = vunpack.c.l.b16 %v965
    %v981 = vunpack.c.l.b16 %v966
    %v982 = vunpack.c.l.b16 %v967
    %v983 = vunpack.c.l.b16 %v968
    %v984 = vpack.c.b16 %v981, %v980
    %v985 = vpack.c.b16 %v983, %v982
    %v989 = vsel %vm88, %v964, 0
    %991 = vmatprep.subr.bf16.mxu0 0
    %992 = vmatpush1.bf16.msra.mxu0 %v984
    %993 = vmatprep.subr.bf16.mxu0 0
    %994 = vmatpush1.bf16.msra.mxu0 %v985
    %995 = vmatprep.subr.bf16.mxu0 0
    %996 = vmatpush1.bf16.msra.mxu0 0
    %997 = vmatprep.subr.bf16.mxu0 0
    %998 = vmatpush1.bf16.msra.mxu0 0
    %999 = vmatprep.subr.bf16.mxu0 0
    %1000 = vmatpush1.bf16.msra.mxu0 0
    %1001 = vmatprep.subr.bf16.mxu0 0
    %1002 = vmatpush1.bf16.msra.mxu0 0
    %1003 = vmatprep.subr.bf16.mxu0 0
    %1004 = vmatpush1.bf16.msra.mxu0 0
    %1005 = vmatprep.subr.bf16.mxu0 0
    %1006 = vmatpush1.bf16.msra.mxu0 0
    %1007 = vmatprep.subr.bf16.mxu0 0
    %1008 = vmatpush1.bf16.msra.mxu0 0
    %1009 = vmatprep.subr.bf16.mxu0 0
    %1010 = vmatpush1.bf16.msra.mxu0 0
    %1011 = vmatprep.subr.bf16.mxu0 0
    %1012 = vmatpush1.bf16.msra.mxu0 0
    %1013 = vmatprep.subr.bf16.mxu0 0
    %1014 = vmatpush1.bf16.msra.mxu0 0
    %1015 = vmatprep.subr.bf16.mxu0 0
    %1016 = vmatpush1.bf16.msra.mxu0 0
    %1017 = vmatprep.subr.bf16.mxu0 0
    %1018 = vmatpush1.bf16.msra.mxu0 0
    %1019 = vmatprep.subr.bf16.mxu0 0
    %1020 = vmatpush1.bf16.msra.mxu0 0
    %1021 = vmatprep.subr.bf16.mxu0 0
    %1022 = vmatpush1.bf16.msra.mxu0 0
    %1023 = vmatprep.mubr.bf16.mxu0 0
    %1024 = vmatmul.mubr.bf16.gmra.mrb[0].mxu0 %v989
    %v1025 = vpop.f32.mrb[0].mxu0
    %v1026 = vadd.f32 %v974, %v1025
    %v1027 = vpop.f32.mrb[0].mxu0
    %v1028 = vpop.f32.mrb[0].mxu0
    %v1029 = vadd.f32 %v974, %v1028
    %v1030 = vpop.f32.mrb[0].mxu0
    %1031 = vdwg.mxu0
    %v1032 = vmax.f32 %v1026, 0.0
    %v1033 = vmax.f32 %v1029, 0.0
    %v1034 = vpack.c.bf16 %v1033, %v1032
    %v1035 = vld [vmem:[%s13] sm:$0xf]
    %v1036 = vld [vmem:[%s13 + $0x4] sm:$0xf]
    %v1037 = vld [vmem:[%s14] sm:$0x1]
    %v1039 = vlaneseq
    %v1040 = vshrl.u32 %v1039, 7
    %v1041 = vsub.s32 0, %v1040
    %v1042 = vrot.slane %v1037, %v1041
    %v1046 = vunpack.c.l.b16 %v1035
    %v1047 = vunpack.c.l.b16 %v1036
    %v1048 = vpack.c.b16 %v1047, %v1046
    %v1051 = vsel %vm316, %v1034, 0
    %1053 = vmatprep.subr.bf16.mxu0 0
    %1054 = vmatpush1.bf16.msra.mxu0 %v1048
    %1055 = vmatprep.subr.bf16.mxu0 0
    %1056 = vmatpush1.bf16.msra.mxu0 0
    %1057 = vmatprep.subr.bf16.mxu0 0
    %1058 = vmatpush1.bf16.msra.mxu0 0
    %1059 = vmatprep.subr.bf16.mxu0 0
    %1060 = vmatpush1.bf16.msra.mxu0 0
    %1061 = vmatprep.subr.bf16.mxu0 0
    %1062 = vmatpush1.bf16.msra.mxu0 0
    %1063 = vmatprep.subr.bf16.mxu0 0
    %1064 = vmatpush1.bf16.msra.mxu0 0
    %1065 = vmatprep.subr.bf16.mxu0 0
    %1066 = vmatpush1.bf16.msra.mxu0 0
    %1067 = vmatprep.subr.bf16.mxu0 0
    %1068 = vmatpush1.bf16.msra.mxu0 0
    %1069 = vmatprep.subr.bf16.mxu0 0
    %1070 = vmatpush1.bf16.msra.mxu0 0
    %1071 = vmatprep.subr.bf16.mxu0 0
    %1072 = vmatpush1.bf16.msra.mxu0 0
    %1073 = vmatprep.subr.bf16.mxu0 0
    %1074 = vmatpush1.bf16.msra.mxu0 0
    %1075 = vmatprep.subr.bf16.mxu0 0
    %1076 = vmatpush1.bf16.msra.mxu0 0
    %1077 = vmatprep.subr.bf16.mxu0 0
    %1078 = vmatpush1.bf16.msra.mxu0 0
    %1079 = vmatprep.subr.bf16.mxu0 0
    %1080 = vmatpush1.bf16.msra.mxu0 0
    %1081 = vmatprep.subr.bf16.mxu0 0
    %1082 = vmatpush1.bf16.msra.mxu0 0
    %1083 = vmatprep.subr.bf16.mxu0 0
    %1084 = vmatpush1.bf16.msra.mxu0 0
    %1085 = vmatprep.mubr.bf16.mxu0 0
    %1086 = vmatmul.mubr.bf16.gmra.mrb[0].mxu0 %v1051
    %v1087 = vpop.f32.mrb[0].mxu0
    %v1088 = vadd.f32 %v1042, %v1087
    %v1089 = vpop.f32.mrb[0].mxu0
    %v1090 = vpop.f32.mrb[0].mxu0
    %v1091 = vadd.f32 %v1042, %v1090
    %v1092 = vpop.f32.mrb[0].mxu0
    %1093 = vdwg.mxu0
    %v1094 = vadd.f32 %v1088, %v962
    %v1095 = vadd.f32 %v1091, %v963
    %v1096 = vadd.f32 %v52, %v1094
    %v1097 = vadd.f32 %v53, %v1095
    %v1098 = vsel %vm88, %v1096, 0.0
    %1099 = vadd.xlane.f32.xlu0 %v1098
    %v1100 = vpop.xlane.xlu0 %1099
    %v1101 = vsel %vm88, %v1097, 0.0
    %1102 = vadd.xlane.f32.xlu0 %v1101
    %v1103 = vpop.xlane.xlu0 %1102
    %v1104 = vrcp.pop 32.0
    %v1105 = vmul.f32 %v1100, %v1104
    %v1106 = vmul.f32 %v1103, %v1104
    %v1107 = vsub.f32 %v1096, %v1105
    %v1108 = vsub.f32 %v1097, %v1106
    %v1109 = vmul.f32 %v1107, %v1107
    %v1110 = vmul.f32 %v1108, %v1108
    %v1111 = vsel %vm88, %v1109, 0.0
    %1112 = vadd.xlane.f32.xlu0 %v1111
    %v1113 = vpop.xlane.xlu0 %1112
    %v1114 = vsel %vm88, %v1110, 0.0
    %1115 = vadd.xlane.f32.xlu0 %v1114
    %v1116 = vpop.xlane.xlu0 %1115
    %v1117 = vmul.f32 %v1113, %v1104
    %v1118 = vmul.f32 %v1116, %v1104
    %v1119 = vadd.f32 %v1117, 1e-05
    %v1120 = vadd.f32 %v1118, 1e-05
    %v1121 = vrsqrt.pop %v1119
    %v1122 = vrsqrt.pop %v1120
    %v1123 = vmul.f32 %v1107, %v1121
    %v1124 = vmul.f32 %v1108, %v1122
    %s1125 = scalar_lea.vmem %s14, 1
    %v1126 = vld [vmem:[%s1125] sm:$0x1]
    %v1128 = vlaneseq
    %v1129 = vshrl.u32 %v1128, 7
    %v1130 = vsub.s32 0, %v1129
    %v1131 = vrot.slane %v1126, %v1130
    %v1133 = vmul.f32 %v1123, %v1131
    %v1134 = vmul.f32 %v1124, %v1131
    %s1135 = scalar_lea.vmem %s14, 2
    %v1136 = vld [vmem:[%s1135] sm:$0x1]
    %v1138 = vlaneseq
    %v1139 = vshrl.u32 %v1138, 7
    %v1140 = vsub.s32 0, %v1139
    %v1141 = vrot.slane %v1136, %v1140
    %v1143 = vadd.f32 %v1133, %v1141
    %v1144 = vadd.f32 %v1134, %v1141
    %v1145 = vpack.c.bf16 %v1144, %v1143
    %s1146 = scalar_lea.vmem %s4, 48
    %v1147 = vld [vmem:[%s1146] sm:$0xf]
    %v1148 = vld [vmem:[%s1146 + $0x4] sm:$0xf]
    %v1149 = vld [vmem:[%s1146 + $0x8] sm:$0xf]
    %v1150 = vld [vmem:[%s1146 + $0xc] sm:$0xf]
    %s1151 = scalar_lea.vmem %s5, 4
    %v1152 = vld [vmem:[%s1151] sm:$0x1]
    %v1154 = vlaneseq
    %v1155 = vshrl.u32 %v1154, 7
    %v1156 = vsub.s32 0, %v1155
    %v1157 = vrot.slane %v1152, %v1156
    %v1163 = vunpack.c.l.b16 %v1147
    %v1164 = vunpack.c.l.b16 %v1148
    %v1165 = vunpack.c.l.b16 %v1149
    %v1166 = vunpack.c.l.b16 %v1150
    %v1167 = vpack.c.b16 %v1164, %v1163
    %v1168 = vpack.c.b16 %v1166, %v1165
    %v1172 = vsel %vm88, %v1145, 0
    %1174 = vmatprep.subr.bf16.mxu0 0
    %1175 = vmatpush1.bf16.msra.mxu0 %v1167
    %1176 = vmatprep.subr.bf16.mxu0 0
    %1177 = vmatpush1.bf16.msra.mxu0 %v1168
    %1178 = vmatprep.subr.bf16.mxu0 0
    %1179 = vmatpush1.bf16.msra.mxu0 0
    %1180 = vmatprep.subr.bf16.mxu0 0
    %1181 = vmatpush1.bf16.msra.mxu0 0
    %1182 = vmatprep.subr.bf16.mxu0 0
    %1183 = vmatpush1.bf16.msra.mxu0 0
    %1184 = vmatprep.subr.bf16.mxu0 0
    %1185 = vmatpush1.bf16.msra.mxu0 0
    %1186 = vmatprep.subr.bf16.mxu0 0
    %1187 = vmatpush1.bf16.msra.mxu0 0
    %1188 = vmatprep.subr.bf16.mxu0 0
    %1189 = vmatpush1.bf16.msra.mxu0 0
    %1190 = vmatprep.subr.bf16.mxu0 0
    %1191 = vmatpush1.bf16.msra.mxu0 0
    %1192 = vmatprep.subr.bf16.mxu0 0
    %1193 = vmatpush1.bf16.msra.mxu0 0
    %1194 = vmatprep.subr.bf16.mxu0 0
    %1195 = vmatpush1.bf16.msra.mxu0 0
    %1196 = vmatprep.subr.bf16.mxu0 0
    %1197 = vmatpush1.bf16.msra.mxu0 0
    %1198 = vmatprep.subr.bf16.mxu0 0
    %1199 = vmatpush1.bf16.msra.mxu0 0
    %1200 = vmatprep.subr.bf16.mxu0 0
    %1201 = vmatpush1.bf16.msra.mxu0 0
    %1202 = vmatprep.subr.bf16.mxu0 0
    %1203 = vmatpush1.bf16.msra.mxu0 0
    %1204 = vmatprep.subr.bf16.mxu0 0
    %1205 = vmatpush1.bf16.msra.mxu0 0
    %1206 = vmatprep.mubr.bf16.mxu0 0
    %1207 = vmatmul.mubr.bf16.gmra.mrb[0].mxu0 %v1172
    %v1208 = vpop.f32.mrb[0].mxu0
    %v1209 = vadd.f32 %v1157, %v1208
    %v1210 = vpop.f32.mrb[0].mxu0
    %v1211 = vpop.f32.mrb[0].mxu0
    %v1212 = vadd.f32 %v1157, %v1211
    %v1213 = vpop.f32.mrb[0].mxu0
    %1214 = vdwg.mxu0
    %s1215 = scalar_lea.vmem %s4, 64
    %v1216 = vld [vmem:[%s1215] sm:$0xf]
    %v1217 = vld [vmem:[%s1215 + $0x4] sm:$0xf]
    %v1218 = vld [vmem:[%s1215 + $0x8] sm:$0xf]
    %v1219 = vld [vmem:[%s1215 + $0xc] sm:$0xf]
    %s1220 = scalar_lea.vmem %s5, 5
    %v1221 = vld [vmem:[%s1220] sm:$0x1]
    %v1223 = vlaneseq
    %v1224 = vshrl.u32 %v1223, 7
    %v1225 = vsub.s32 0, %v1224
    %v1226 = vrot.slane %v1221, %v1225
    %v1232 = vunpack.c.l.b16 %v1216
    %v1233 = vunpack.c.l.b16 %v1217
    %v1234 = vunpack.c.l.b16 %v1218
    %v1235 = vunpack.c.l.b16 %v1219
    %v1236 = vpack.c.b16 %v1233, %v1232
    %v1237 = vpack.c.b16 %v1235, %v1234
    %v1241 = vsel %vm88, %v58, 0
    %v1244 = vsel %vm88, %v59, 0
    %1246 = vmatprep.subr.bf16.mxu0 0
    %1247 = vmatpush1.bf16.msra.mxu0 %v1236
    %1248 = vmatprep.subr.bf16.mxu0 0
    %1249 = vmatpush1.bf16.msra.mxu0 %v1237
    %1250 = vmatprep.subr.bf16.mxu0 0
    %1251 = vmatpush1.bf16.msra.mxu0 0
    %1252 = vmatprep.subr.bf16.mxu0 0
    %1253 = vmatpush1.bf16.msra.mxu0 0
    %1254 = vmatprep.subr.bf16.mxu0 0
    %1255 = vmatpush1.bf16.msra.mxu0 0
    %1256 = vmatprep.subr.bf16.mxu0 0
    %1257 = vmatpush1.bf16.msra.mxu0 0
    %1258 = vmatprep.subr.bf16.mxu0 0
    %1259 = vmatpush1.bf16.msra.mxu0 0
    %1260 = vmatprep.subr.bf16.mxu0 0
    %1261 = vmatpush1.bf16.msra.mxu0 0
    %1262 = vmatprep.subr.bf16.mxu0 0
    %1263 = vmatpush1.bf16.msra.mxu0 0
    %1264 = vmatprep.subr.bf16.mxu0 0
    %1265 = vmatpush1.bf16.msra.mxu0 0
    %1266 = vmatprep.subr.bf16.mxu0 0
    %1267 = vmatpush1.bf16.msra.mxu0 0
    %1268 = vmatprep.subr.bf16.mxu0 0
    %1269 = vmatpush1.bf16.msra.mxu0 0
    %1270 = vmatprep.subr.bf16.mxu0 0
    %1271 = vmatpush1.bf16.msra.mxu0 0
    %1272 = vmatprep.subr.bf16.mxu0 0
    %1273 = vmatpush1.bf16.msra.mxu0 0
    %1274 = vmatprep.subr.bf16.mxu0 0
    %1275 = vmatpush1.bf16.msra.mxu0 0
    %1276 = vmatprep.subr.bf16.mxu0 0
    %1277 = vmatpush1.bf16.msra.mxu0 0
    %1278 = vmatprep.mubr.bf16.mxu0 0
    %1279 = vmatmul.mubr.bf16.gmra.mrb[0].mxu0 %v1241
    %v1280 = vpop.f32.mrb[0].mxu0
    %v1281 = vadd.f32 %v1226, %v1280
    %v1282 = vpop.f32.mrb[0].mxu0
    %v1283 = vpop.f32.mrb[0].mxu0
    %v1284 = vadd.f32 %v1226, %v1283
    %v1285 = vpop.f32.mrb[0].mxu0
    %1286 = vmatprep.mubr.bf16.mxu0 0
    %1287 = vmatmul.mubr.bf16.gmra.mrb[0].mxu0 %v1244
    %v1288 = vpop.f32.mrb[0].mxu0
    %v1289 = vadd.f32 %v1226, %v1288
    %v1290 = vpop.f32.mrb[0].mxu0
    %v1291 = vpop.f32.mrb[0].mxu0
    %v1292 = vadd.f32 %v1226, %v1291
    %v1293 = vpop.f32.mrb[0].mxu0
    %1294 = vdwg.mxu0
    %s1295 = scalar_lea.vmem %s4, 80
    %v1296 = vld [vmem:[%s1295] sm:$0xf]
    %v1297 = vld [vmem:[%s1295 + $0x4] sm:$0xf]
    %v1298 = vld [vmem:[%s1295 + $0x8] sm:$0xf]
    %v1299 = vld [vmem:[%s1295 + $0xc] sm:$0xf]
    %s1300 = scalar_lea.vmem %s5, 6
    %v1301 = vld [vmem:[%s1300] sm:$0x1]
    %v1303 = vlaneseq
    %v1304 = vshrl.u32 %v1303, 7
    %v1305 = vsub.s32 0, %v1304
    %v1306 = vrot.slane %v1301, %v1305
    %v1312 = vunpack.c.l.b16 %v1296
    %v1313 = vunpack.c.l.b16 %v1297
    %v1314 = vunpack.c.l.b16 %v1298
    %v1315 = vunpack.c.l.b16 %v1299
    %v1316 = vpack.c.b16 %v1313, %v1312
    %v1317 = vpack.c.b16 %v1315, %v1314
    %1320 = vmatprep.subr.bf16.mxu0 0
    %1321 = vmatpush1.bf16.msra.mxu0 %v1316
    %1322 = vmatprep.subr.bf16.mxu0 0
    %1323 = vmatpush1.bf16.msra.mxu0 %v1317
    %1324 = vmatprep.subr.bf16.mxu0 0
    %1325 = vmatpush1.bf16.msra.mxu0 0
    %1326 = vmatprep.subr.bf16.mxu0 0
    %1327 = vmatpush1.bf16.msra.mxu0 0
    %1328 = vmatprep.subr.bf16.mxu0 0
    %1329 = vmatpush1.bf16.msra.mxu0 0
    %1330 = vmatprep.subr.bf16.mxu0 0
    %1331 = vmatpush1.bf16.msra.mxu0 0
    %1332 = vmatprep.subr.bf16.mxu0 0
    %1333 = vmatpush1.bf16.msra.mxu0 0
    %1334 = vmatprep.subr.bf16.mxu0 0
    %1335 = vmatpush1.bf16.msra.mxu0 0
    %1336 = vmatprep.subr.bf16.mxu0 0
    %1337 = vmatpush1.bf16.msra.mxu0 0
    %1338 = vmatprep.subr.bf16.mxu0 0
    %1339 = vmatpush1.bf16.msra.mxu0 0
    %1340 = vmatprep.subr.bf16.mxu0 0
    %1341 = vmatpush1.bf16.msra.mxu0 0
    %1342 = vmatprep.subr.bf16.mxu0 0
    %1343 = vmatpush1.bf16.msra.mxu0 0
    %1344 = vmatprep.subr.bf16.mxu0 0
    %1345 = vmatpush1.bf16.msra.mxu0 0
    %1346 = vmatprep.subr.bf16.mxu0 0
    %1347 = vmatpush1.bf16.msra.mxu0 0
    %1348 = vmatprep.subr.bf16.mxu0 0
    %1349 = vmatpush1.bf16.msra.mxu0 0
    %1350 = vmatprep.subr.bf16.mxu0 0
    %1351 = vmatpush1.bf16.msra.mxu0 0
    %1352 = vmatprep.mubr.bf16.mxu0 0
    %1353 = vmatmul.mubr.bf16.gmra.mrb[0].mxu0 %v1241
    %v1354 = vpop.f32.mrb[0].mxu0
    %v1355 = vadd.f32 %v1306, %v1354
    %v1356 = vpop.f32.mrb[0].mxu0
    %v1357 = vpop.f32.mrb[0].mxu0
    %v1358 = vadd.f32 %v1306, %v1357
    %v1359 = vpop.f32.mrb[0].mxu0
    %1360 = vmatprep.mubr.bf16.mxu0 0
    %1361 = vmatmul.mubr.bf16.gmra.mrb[0].mxu0 %v1244
    %v1362 = vpop.f32.mrb[0].mxu0
    %v1363 = vadd.f32 %v1306, %v1362
    %v1364 = vpop.f32.mrb[0].mxu0
    %v1365 = vpop.f32.mrb[0].mxu0
    %v1366 = vadd.f32 %v1306, %v1365
    %v1367 = vpop.f32.mrb[0].mxu0
    %1368 = vdwg.mxu0
    %v1369 = vpack.c.bf16 %v1212, %v1209
    %v1370 = vpack.c.bf16 %v1284, %v1281
    %v1371 = vpack.c.bf16 %v1292, %v1289
    %v1372 = vpack.c.bf16 %v1358, %v1355
    %v1373 = vpack.c.bf16 %v1366, %v1363
    %v1375 = vsel %vm268, %v1369, 0
    %v1378 = vsel %vm268, %v1370, 0
    %v1381 = vsel %vm268, %v1371, 0
    %1383 = vmatprep.subr.bf16.mxu0 0
    %1384 = vmatpush1.bf16.xpose.msra.mxu0 %v1378
    %1385 = vmatprep.subr.bf16.mxu0 0
    %1386 = vmatpush1.bf16.xpose.msra.mxu0 %v1381
    %1387 = vmatprep.subr.bf16.mxu0 0
    %1388 = vmatpush1.bf16.xpose.msra.mxu0 0
    %1389 = vmatprep.subr.bf16.mxu0 0
    %1390 = vmatpush1.bf16.xpose.msra.mxu0 0
    %1391 = vmatprep.subr.bf16.mxu0 0
    %1392 = vmatpush1.bf16.xpose.msra.mxu0 0
    %1393 = vmatprep.subr.bf16.mxu0 0
    %1394 = vmatpush1.bf16.xpose.msra.mxu0 0
    %1395 = vmatprep.subr.bf16.mxu0 0
    %1396 = vmatpush1.bf16.xpose.msra.mxu0 0
    %1397 = vmatprep.subr.bf16.mxu0 0
    %1398 = vmatpush1.bf16.xpose.msra.mxu0 0
    %1399 = vmatprep.subr.bf16.mxu0 0
    %1400 = vmatpush1.bf16.xpose.msra.mxu0 0
    %1401 = vmatprep.subr.bf16.mxu0 0
    %1402 = vmatpush1.bf16.xpose.msra.mxu0 0
    %1403 = vmatprep.subr.bf16.mxu0 0
    %1404 = vmatpush1.bf16.xpose.msra.mxu0 0
    %1405 = vmatprep.subr.bf16.mxu0 0
    %1406 = vmatpush1.bf16.xpose.msra.mxu0 0
    %1407 = vmatprep.subr.bf16.mxu0 0
    %1408 = vmatpush1.bf16.xpose.msra.mxu0 0
    %1409 = vmatprep.subr.bf16.mxu0 0
    %1410 = vmatpush1.bf16.xpose.msra.mxu0 0
    %1411 = vmatprep.subr.bf16.mxu0 0
    %1412 = vmatpush1.bf16.xpose.msra.mxu0 0
    %1413 = vmatprep.subr.bf16.mxu0 0
    %1414 = vmatpush1.bf16.xpose.msra.mxu0 0
    %1415 = vmatprep.mubr.bf16.mxu0 0
    %1416 = vmatmul.mubr.bf16.gmra.mrb[0].mxu0 %v1375
    %v1417 = vpop.f32.mrb[0].mxu0
    %v1418 = vadd.f32 %v62, %v1417
    %v1419 = vpop.f32.mrb[0].mxu0
    %v1420 = vpop.f32.mrb[0].mxu0
    %v1421 = vadd.f32 %v63, %v1420
    %v1422 = vpop.f32.mrb[0].mxu0
    %1423 = vdwg.mxu0
    %v1424 = vsel %vm88, %v1418, -inf
    %1425 = vmax.xlane.f32.xlu0 %v1424
    %v1426 = vpop.xlane.xlu0 %1425
    %v1427 = vsel %vm88, %v1421, -inf
    %1428 = vmax.xlane.f32.xlu0 %v1427
    %v1429 = vpop.xlane.xlu0 %1428
    %v1430 = vsub.f32 %v1418, %v1426
    %v1431 = vsub.f32 %v1421, %v1429
    %v1432 = vmul.f32 %v1430, 1.442695
    %v1433 = vpow.pop %v1432
    %v1434 = vmul.f32 %v1431, 1.442695
    %v1435 = vpow.pop %v1434
    %v1436 = vsel %vm88, %v1433, 0.0
    %1437 = vadd.xlane.f32.xlu0 %v1436
    %v1438 = vpop.xlane.xlu0 %1437
    %v1439 = vsel %vm88, %v1435, 0.0
    %1440 = vadd.xlane.f32.xlu0 %v1439
    %v1441 = vpop.xlane.xlu0 %1440
    %v1442 = vrcp.pop %v1438
    %v1443 = vrcp.pop %v1441
    %v1444 = vmul.f32 %v1433, %v1442
    %v1445 = vmul.f32 %v1435, %v1443
    %v1446 = vpack.c.bf16 %v1445, %v1444
    %v1448 = vsel %vm88, %v1446, 0
    %1450 = vmatprep.subr.bf16.mxu0 0
    %1451 = vmatpush1.bf16.msra.mxu0 %v1372
    %1452 = vmatprep.subr.bf16.mxu0 0
    %1453 = vmatpush1.bf16.msra.mxu0 %v1373
    %1454 = vmatprep.subr.bf16.mxu0 0
    %1455 = vmatpush1.bf16.msra.mxu0 0
    %1456 = vmatprep.subr.bf16.mxu0 0
    %1457 = vmatpush1.bf16.msra.mxu0 0
    %1458 = vmatprep.subr.bf16.mxu0 0
    %1459 = vmatpush1.bf16.msra.mxu0 0
    %1460 = vmatprep.subr.bf16.mxu0 0
    %1461 = vmatpush1.bf16.msra.mxu0 0
    %1462 = vmatprep.subr.bf16.mxu0 0
    %1463 = vmatpush1.bf16.msra.mxu0 0
    %1464 = vmatprep.subr.bf16.mxu0 0
    %1465 = vmatpush1.bf16.msra.mxu0 0
    %1466 = vmatprep.subr.bf16.mxu0 0
    %1467 = vmatpush1.bf16.msra.mxu0 0
    %1468 = vmatprep.subr.bf16.mxu0 0
    %1469 = vmatpush1.bf16.msra.mxu0 0
    %1470 = vmatprep.subr.bf16.mxu0 0
    %1471 = vmatpush1.bf16.msra.mxu0 0
    %1472 = vmatprep.subr.bf16.mxu0 0
    %1473 = vmatpush1.bf16.msra.mxu0 0
    %1474 = vmatprep.subr.bf16.mxu0 0
    %1475 = vmatpush1.bf16.msra.mxu0 0
    %1476 = vmatprep.subr.bf16.mxu0 0
    %1477 = vmatpush1.bf16.msra.mxu0 0
    %1478 = vmatprep.subr.bf16.mxu0 0
    %1479 = vmatpush1.bf16.msra.mxu0 0
    %1480 = vmatprep.subr.bf16.mxu0 0
    %1481 = vmatpush1.bf16.msra.mxu0 0
    %1482 = vmatprep.mubr.bf16.mxu0 0
    %1483 = vmatmul.mubr.bf16.gmra.mrb[0].mxu0 %v1448
    %v1484 = vpop.f32.mrb[0].mxu0
    %v1485 = vadd.f32 0.0, %v1484
    %v1486 = vpop.f32.mrb[0].mxu0
    %v1487 = vpop.f32.mrb[0].mxu0
    %v1488 = vadd.f32 0.0, %v1487
    %v1489 = vpop.f32.mrb[0].mxu0
    %1490 = vdwg.mxu0
    %v1491 = vpack.c.bf16 %v1488, %v1485
    %s1492 = scalar_lea.vmem %s6, 16
    %v1493 = vld [vmem:[%s1492] sm:$0xf]
    %1495 = vrot.lane.b32.xlu0 %v1369, 120
    %v1496 = vpop.permute.xlu0 %1495
    %1499 = vrot.lane.b32.xlu0 %v1370, 120
    %v1500 = vpop.permute.xlu0 %1499
    %1501 = vrot.lane.b32.xlu0 %v1371, 120
    %v1502 = vpop.permute.xlu0 %1501
    %v1504 = vsel %vm268, %v1496, 0
    %v1507 = vsel %vm268, %v1500, 0
    %v1510 = vsel %vm268, %v1502, 0
    %1512 = vmatprep.subr.bf16.mxu0 0
    %1513 = vmatpush1.bf16.xpose.msra.mxu0 %v1507
    %1514 = vmatprep.subr.bf16.mxu0 0
    %1515 = vmatpush1.bf16.xpose.msra.mxu0 %v1510
    %1516 = vmatprep.subr.bf16.mxu0 0
    %1517 = vmatpush1.bf16.xpose.msra.mxu0 0
    %1518 = vmatprep.subr.bf16.mxu0 0
    %1519 = vmatpush1.bf16.xpose.msra.mxu0 0
    %1520 = vmatprep.subr.bf16.mxu0 0
    %1521 = vmatpush1.bf16.xpose.msra.mxu0 0
    %1522 = vmatprep.subr.bf16.mxu0 0
    %1523 = vmatpush1.bf16.xpose.msra.mxu0 0
    %1524 = vmatprep.subr.bf16.mxu0 0
    %1525 = vmatpush1.bf16.xpose.msra.mxu0 0
    %1526 = vmatprep.subr.bf16.mxu0 0
    %1527 = vmatpush1.bf16.xpose.msra.mxu0 0
    %1528 = vmatprep.subr.bf16.mxu0 0
    %1529 = vmatpush1.bf16.xpose.msra.mxu0 0
    %1530 = vmatprep.subr.bf16.mxu0 0
    %1531 = vmatpush1.bf16.xpose.msra.mxu0 0
    %1532 = vmatprep.subr.bf16.mxu0 0
    %1533 = vmatpush1.bf16.xpose.msra.mxu0 0
    %1534 = vmatprep.subr.bf16.mxu0 0
    %1535 = vmatpush1.bf16.xpose.msra.mxu0 0
    %1536 = vmatprep.subr.bf16.mxu0 0
    %1537 = vmatpush1.bf16.xpose.msra.mxu0 0
    %1538 = vmatprep.subr.bf16.mxu0 0
    %1539 = vmatpush1.bf16.xpose.msra.mxu0 0
    %1540 = vmatprep.subr.bf16.mxu0 0
    %1541 = vmatpush1.bf16.xpose.msra.mxu0 0
    %1542 = vmatprep.subr.bf16.mxu0 0
    %1543 = vmatpush1.bf16.xpose.msra.mxu0 0
    %1544 = vmatprep.mubr.bf16.mxu0 0
    %1545 = vmatmul.mubr.bf16.gmra.mrb[0].mxu0 %v1504
    %v1546 = vpop.f32.mrb[0].mxu0
    %v1547 = vadd.f32 %v62, %v1546
    %v1548 = vpop.f32.mrb[0].mxu0
    %v1549 = vpop.f32.mrb[0].mxu0
    %v1550 = vadd.f32 %v63, %v1549
    %v1551 = vpop.f32.mrb[0].mxu0
    %1552 = vdwg.mxu0
    %v1553 = vsel %vm88, %v1547, -inf
    %1554 = vmax.xlane.f32.xlu0 %v1553
    %v1555 = vpop.xlane.xlu0 %1554
    %v1556 = vsel %vm88, %v1550, -inf
    %1557 = vmax.xlane.f32.xlu0 %v1556
    %v1558 = vpop.xlane.xlu0 %1557
    %v1559 = vsub.f32 %v1547, %v1555
    %v1560 = vsub.f32 %v1550, %v1558
    %v1561 = vmul.f32 %v1559, 1.442695
    %v1562 = vpow.pop %v1561
    %v1563 = vmul.f32 %v1560, 1.442695
    %v1564 = vpow.pop %v1563
    %v1565 = vsel %vm88, %v1562, 0.0
    %1566 = vadd.xlane.f32.xlu0 %v1565
    %v1567 = vpop.xlane.xlu0 %1566
    %v1568 = vsel %vm88, %v1564, 0.0
    %1569 = vadd.xlane.f32.xlu0 %v1568
    %v1570 = vpop.xlane.xlu0 %1569
    %v1571 = vrcp.pop %v1567
    %v1572 = vrcp.pop %v1570
    %v1573 = vmul.f32 %v1562, %v1571
    %v1574 = vmul.f32 %v1564, %v1572
    %v1575 = vpack.c.bf16 %v1574, %v1573
    %1578 = vrot.lane.b32.xlu0 %v1372, 120
    %v1579 = vpop.permute.xlu0 %1578
    %1580 = vrot.lane.b32.xlu0 %v1373, 120
    %v1581 = vpop.permute.xlu0 %1580
    %v1585 = vsel %vm88, %v1575, 0
    %1587 = vmatprep.subr.bf16.mxu0 0
    %1588 = vmatpush1.bf16.msra.mxu0 %v1579
    %1589 = vmatprep.subr.bf16.mxu0 0
    %1590 = vmatpush1.bf16.msra.mxu0 %v1581
    %1591 = vmatprep.subr.bf16.mxu0 0
    %1592 = vmatpush1.bf16.msra.mxu0 0
    %1593 = vmatprep.subr.bf16.mxu0 0
    %1594 = vmatpush1.bf16.msra.mxu0 0
    %1595 = vmatprep.subr.bf16.mxu0 0
    %1596 = vmatpush1.bf16.msra.mxu0 0
    %1597 = vmatprep.subr.bf16.mxu0 0
    %1598 = vmatpush1.bf16.msra.mxu0 0
    %1599 = vmatprep.subr.bf16.mxu0 0
    %1600 = vmatpush1.bf16.msra.mxu0 0
    %1601 = vmatprep.subr.bf16.mxu0 0
    %1602 = vmatpush1.bf16.msra.mxu0 0
    %1603 = vmatprep.subr.bf16.mxu0 0
    %1604 = vmatpush1.bf16.msra.mxu0 0
    %1605 = vmatprep.subr.bf16.mxu0 0
    %1606 = vmatpush1.bf16.msra.mxu0 0
    %1607 = vmatprep.subr.bf16.mxu0 0
    %1608 = vmatpush1.bf16.msra.mxu0 0
    %1609 = vmatprep.subr.bf16.mxu0 0
    %1610 = vmatpush1.bf16.msra.mxu0 0
    %1611 = vmatprep.subr.bf16.mxu0 0
    %1612 = vmatpush1.bf16.msra.mxu0 0
    %1613 = vmatprep.subr.bf16.mxu0 0
    %1614 = vmatpush1.bf16.msra.mxu0 0
    %1615 = vmatprep.subr.bf16.mxu0 0
    %1616 = vmatpush1.bf16.msra.mxu0 0
    %1617 = vmatprep.subr.bf16.mxu0 0
    %1618 = vmatpush1.bf16.msra.mxu0 0
    %1619 = vmatprep.mubr.bf16.mxu0 0
    %1620 = vmatmul.mubr.bf16.gmra.mrb[0].mxu0 %v1585
    %v1621 = vpop.f32.mrb[0].mxu0
    %v1622 = vadd.f32 0.0, %v1621
    %v1623 = vpop.f32.mrb[0].mxu0
    %v1624 = vpop.f32.mrb[0].mxu0
    %v1625 = vadd.f32 0.0, %v1624
    %v1626 = vpop.f32.mrb[0].mxu0
    %1627 = vdwg.mxu0
    %v1628 = vpack.c.bf16 %v1625, %v1622
    %s1629 = scalar_lea.vmem %s6, 20
    %v1630 = vld [vmem:[%s1629] sm:$0xf]
    %v1632 = vsel %vm268, %v1628, 0
    %v1635 = vsel %vm516, %v1630, 0
    %1637 = vmatprep.subr.bf16.mxu0 0
    %1638 = vmatpush1.bf16.msra.mxu0 %v1635
    %1639 = vmatprep.subr.bf16.mxu0 0
    %1640 = vmatpush1.bf16.msra.mxu0 0
    %1641 = vmatprep.subr.bf16.mxu0 0
    %1642 = vmatpush1.bf16.msra.mxu0 0
    %1643 = vmatprep.subr.bf16.mxu0 0
    %1644 = vmatpush1.bf16.msra.mxu0 0
    %1645 = vmatprep.subr.bf16.mxu0 0
    %1646 = vmatpush1.bf16.msra.mxu0 0
    %1647 = vmatprep.subr.bf16.mxu0 0
    %1648 = vmatpush1.bf16.msra.mxu0 0
    %1649 = vmatprep.subr.bf16.mxu0 0
    %1650 = vmatpush1.bf16.msra.mxu0 0
    %1651 = vmatprep.subr.bf16.mxu0 0
    %1652 = vmatpush1.bf16.msra.mxu0 0
    %1653 = vmatprep.subr.bf16.mxu0 0
    %1654 = vmatpush1.bf16.msra.mxu0 0
    %1655 = vmatprep.subr.bf16.mxu0 0
    %1656 = vmatpush1.bf16.msra.mxu0 0
    %1657 = vmatprep.subr.bf16.mxu0 0
    %1658 = vmatpush1.bf16.msra.mxu0 0
    %1659 = vmatprep.subr.bf16.mxu0 0
    %1660 = vmatpush1.bf16.msra.mxu0 0
    %1661 = vmatprep.subr.bf16.mxu0 0
    %1662 = vmatpush1.bf16.msra.mxu0 0
    %1663 = vmatprep.subr.bf16.mxu0 0
    %1664 = vmatpush1.bf16.msra.mxu0 0
    %1665 = vmatprep.subr.bf16.mxu0 0
    %1666 = vmatpush1.bf16.msra.mxu0 0
    %1667 = vmatprep.subr.bf16.mxu0 0
    %1668 = vmatpush1.bf16.msra.mxu0 0
    %1669 = vmatprep.mubr.bf16.mxu0 0
    %1670 = vmatmul.mubr.bf16.gmra.mrb[0].mxu0 %v1632
    %v1671 = vpop.f32.mrb[0].mxu0
    %v1672 = vadd.f32 0.0, %v1671
    %v1673 = vpop.f32.mrb[0].mxu0
    %v1674 = vpop.f32.mrb[0].mxu0
    %v1675 = vadd.f32 0.0, %v1674
    %v1676 = vpop.f32.mrb[0].mxu0
    %1677 = vdwg.mxu0
    %v1679 = vsel %vm268, %v1491, 0
    %v1682 = vsel %vm516, %v1493, 0
    %1684 = vmatprep.subr.bf16.mxu0 0
    %1685 = vmatpush1.bf16.msra.mxu0 %v1682
    %1686 = vmatprep.subr.bf16.mxu0 0
    %1687 = vmatpush1.bf16.msra.mxu0 0
    %1688 = vmatprep.subr.bf16.mxu0 0
    %1689 = vmatpush1.bf16.msra.mxu0 0
    %1690 = vmatprep.subr.bf16.mxu0 0
    %1691 = vmatpush1.bf16.msra.mxu0 0
    %1692 = vmatprep.subr.bf16.mxu0 0
    %1693 = vmatpush1.bf16.msra.mxu0 0
    %1694 = vmatprep.subr.bf16.mxu0 0
    %1695 = vmatpush1.bf16.msra.mxu0 0
    %1696 = vmatprep.subr.bf16.mxu0 0
    %1697 = vmatpush1.bf16.msra.mxu0 0
    %1698 = vmatprep.subr.bf16.mxu0 0
    %1699 = vmatpush1.bf16.msra.mxu0 0
    %1700 = vmatprep.subr.bf16.mxu0 0
    %1701 = vmatpush1.bf16.msra.mxu0 0
    %1702 = vmatprep.subr.bf16.mxu0 0
    %1703 = vmatpush1.bf16.msra.mxu0 0
    %1704 = vmatprep.subr.bf16.mxu0 0
    %1705 = vmatpush1.bf16.msra.mxu0 0
    %1706 = vmatprep.subr.bf16.mxu0 0
    %1707 = vmatpush1.bf16.msra.mxu0 0
    %1708 = vmatprep.subr.bf16.mxu0 0
    %1709 = vmatpush1.bf16.msra.mxu0 0
    %1710 = vmatprep.subr.bf16.mxu0 0
    %1711 = vmatpush1.bf16.msra.mxu0 0
    %1712 = vmatprep.subr.bf16.mxu0 0
    %1713 = vmatpush1.bf16.msra.mxu0 0
    %1714 = vmatprep.subr.bf16.mxu0 0
    %1715 = vmatpush1.bf16.msra.mxu0 0
    %1716 = vmatprep.mubr.bf16.mxu0 0
    %1717 = vmatmul.mubr.bf16.gmra.mrb[0].mxu0 %v1679
    %v1718 = vpop.f32.mrb[0].mxu0
    %v1719 = vadd.f32 %v1672, %v1718
    %v1720 = vpop.f32.mrb[0].mxu0
    %v1721 = vpop.f32.mrb[0].mxu0
    %v1722 = vadd.f32 %v1675, %v1721
    %v1723 = vpop.f32.mrb[0].mxu0
    %1724 = vdwg.mxu0
    %1725 = vrot.lane.b32.xlu0 %v1369, 112
    %v1726 = vpop.permute.xlu0 %1725
    %1727 = vrot.lane.b32.xlu0 %v1370, 112
    %v1728 = vpop.permute.xlu0 %1727
    %1729 = vrot.lane.b32.xlu0 %v1371, 112
    %v1730 = vpop.permute.xlu0 %1729
    %v1732 = vsel %vm268, %v1726, 0
    %v1735 = vsel %vm268, %v1728, 0
    %v1738 = vsel %vm268, %v1730, 0
    %1740 = vmatprep.subr.bf16.mxu0 0
    %1741 = vmatpush1.bf16.xpose.msra.mxu0 %v1735
    %1742 = vmatprep.subr.bf16.mxu0 0
    %1743 = vmatpush1.bf16.xpose.msra.mxu0 %v1738
    %1744 = vmatprep.subr.bf16.mxu0 0
    %1745 = vmatpush1.bf16.xpose.msra.mxu0 0
    %1746 = vmatprep.subr.bf16.mxu0 0
    %1747 = vmatpush1.bf16.xpose.msra.mxu0 0
    %1748 = vmatprep.subr.bf16.mxu0 0
    %1749 = vmatpush1.bf16.xpose.msra.mxu0 0
    %1750 = vmatprep.subr.bf16.mxu0 0
    %1751 = vmatpush1.bf16.xpose.msra.mxu0 0
    %1752 = vmatprep.subr.bf16.mxu0 0
    %1753 = vmatpush1.bf16.xpose.msra.mxu0 0
    %1754 = vmatprep.subr.bf16.mxu0 0
    %1755 = vmatpush1.bf16.xpose.msra.mxu0 0
    %1756 = vmatprep.subr.bf16.mxu0 0
    %1757 = vmatpush1.bf16.xpose.msra.mxu0 0
    %1758 = vmatprep.subr.bf16.mxu0 0
    %1759 = vmatpush1.bf16.xpose.msra.mxu0 0
    %1760 = vmatprep.subr.bf16.mxu0 0
    %1761 = vmatpush1.bf16.xpose.msra.mxu0 0
    %1762 = vmatprep.subr.bf16.mxu0 0
    %1763 = vmatpush1.bf16.xpose.msra.mxu0 0
    %1764 = vmatprep.subr.bf16.mxu0 0
    %1765 = vmatpush1.bf16.xpose.msra.mxu0 0
    %1766 = vmatprep.subr.bf16.mxu0 0
    %1767 = vmatpush1.bf16.xpose.msra.mxu0 0
    %1768 = vmatprep.subr.bf16.mxu0 0
    %1769 = vmatpush1.bf16.xpose.msra.mxu0 0
    %1770 = vmatprep.subr.bf16.mxu0 0
    %1771 = vmatpush1.bf16.xpose.msra.mxu0 0
    %1772 = vmatprep.mubr.bf16.mxu0 0
    %1773 = vmatmul.mubr.bf16.gmra.mrb[0].mxu0 %v1732
    %v1774 = vpop.f32.mrb[0].mxu0
    %v1775 = vadd.f32 %v62, %v1774
    %v1776 = vpop.f32.mrb[0].mxu0
    %v1777 = vpop.f32.mrb[0].mxu0
    %v1778 = vadd.f32 %v63, %v1777
    %v1779 = vpop.f32.mrb[0].mxu0
    %1780 = vdwg.mxu0
    %v1781 = vsel %vm88, %v1775, -inf
    %1782 = vmax.xlane.f32.xlu0 %v1781
    %v1783 = vpop.xlane.xlu0 %1782
    %v1784 = vsel %vm88, %v1778, -inf
    %1785 = vmax.xlane.f32.xlu0 %v1784
    %v1786 = vpop.xlane.xlu0 %1785
    %v1787 = vsub.f32 %v1775, %v1783
    %v1788 = vsub.f32 %v1778, %v1786
    %v1789 = vmul.f32 %v1787, 1.442695
    %v1790 = vpow.pop %v1789
    %v1791 = vmul.f32 %v1788, 1.442695
    %v1792 = vpow.pop %v1791
    %v1793 = vsel %vm88, %v1790, 0.0
    %1794 = vadd.xlane.f32.xlu0 %v1793
    %v1795 = vpop.xlane.xlu0 %1794
    %v1796 = vsel %vm88, %v1792, 0.0
    %1797 = vadd.xlane.f32.xlu0 %v1796
    %v1798 = vpop.xlane.xlu0 %1797
    %v1799 = vrcp.pop %v1795
    %v1800 = vrcp.pop %v1798
    %v1801 = vmul.f32 %v1790, %v1799
    %v1802 = vmul.f32 %v1792, %v1800
    %v1803 = vpack.c.bf16 %v1802, %v1801
    %1804 = vrot.lane.b32.xlu0 %v1372, 112
    %v1805 = vpop.permute.xlu0 %1804
    %1806 = vrot.lane.b32.xlu0 %v1373, 112
    %v1807 = vpop.permute.xlu0 %1806
    %v1811 = vsel %vm88, %v1803, 0
    %1813 = vmatprep.subr.bf16.mxu0 0
    %1814 = vmatpush1.bf16.msra.mxu0 %v1805
    %1815 = vmatprep.subr.bf16.mxu0 0
    %1816 = vmatpush1.bf16.msra.mxu0 %v1807
    %1817 = vmatprep.subr.bf16.mxu0 0
    %1818 = vmatpush1.bf16.msra.mxu0 0
    %1819 = vmatprep.subr.bf16.mxu0 0
    %1820 = vmatpush1.bf16.msra.mxu0 0
    %1821 = vmatprep.subr.bf16.mxu0 0
    %1822 = vmatpush1.bf16.msra.mxu0 0
    %1823 = vmatprep.subr.bf16.mxu0 0
    %1824 = vmatpush1.bf16.msra.mxu0 0
    %1825 = vmatprep.subr.bf16.mxu0 0
    %1826 = vmatpush1.bf16.msra.mxu0 0
    %1827 = vmatprep.subr.bf16.mxu0 0
    %1828 = vmatpush1.bf16.msra.mxu0 0
    %1829 = vmatprep.subr.bf16.mxu0 0
    %1830 = vmatpush1.bf16.msra.mxu0 0
    %1831 = vmatprep.subr.bf16.mxu0 0
    %1832 = vmatpush1.bf16.msra.mxu0 0
    %1833 = vmatprep.subr.bf16.mxu0 0
    %1834 = vmatpush1.bf16.msra.mxu0 0
    %1835 = vmatprep.subr.bf16.mxu0 0
    %1836 = vmatpush1.bf16.msra.mxu0 0
    %1837 = vmatprep.subr.bf16.mxu0 0
    %1838 = vmatpush1.bf16.msra.mxu0 0
    %1839 = vmatprep.subr.bf16.mxu0 0
    %1840 = vmatpush1.bf16.msra.mxu0 0
    %1841 = vmatprep.subr.bf16.mxu0 0
    %1842 = vmatpush1.bf16.msra.mxu0 0
    %1843 = vmatprep.subr.bf16.mxu0 0
    %1844 = vmatpush1.bf16.msra.mxu0 0
    %1845 = vmatprep.mubr.bf16.mxu0 0
    %1846 = vmatmul.mubr.bf16.gmra.mrb[0].mxu0 %v1811
    %v1847 = vpop.f32.mrb[0].mxu0
    %v1848 = vadd.f32 0.0, %v1847
    %v1849 = vpop.f32.mrb[0].mxu0
    %v1850 = vpop.f32.mrb[0].mxu0
    %v1851 = vadd.f32 0.0, %v1850
    %v1852 = vpop.f32.mrb[0].mxu0
    %1853 = vdwg.mxu0
    %v1854 = vpack.c.bf16 %v1851, %v1848
    %s1855 = scalar_lea.vmem %s6, 24
    %v1856 = vld [vmem:[%s1855] sm:$0xf]
    %v1858 = vsel %vm268, %v1854, 0
    %v1861 = vsel %vm516, %v1856, 0
    %1863 = vmatprep.subr.bf16.mxu0 0
    %1864 = vmatpush1.bf16.msra.mxu0 %v1861
    %1865 = vmatprep.subr.bf16.mxu0 0
    %1866 = vmatpush1.bf16.msra.mxu0 0
    %1867 = vmatprep.subr.bf16.mxu0 0
    %1868 = vmatpush1.bf16.msra.mxu0 0
    %1869 = vmatprep.subr.bf16.mxu0 0
    %1870 = vmatpush1.bf16.msra.mxu0 0
    %1871 = vmatprep.subr.bf16.mxu0 0
    %1872 = vmatpush1.bf16.msra.mxu0 0
    %1873 = vmatprep.subr.bf16.mxu0 0
    %1874 = vmatpush1.bf16.msra.mxu0 0
    %1875 = vmatprep.subr.bf16.mxu0 0
    %1876 = vmatpush1.bf16.msra.mxu0 0
    %1877 = vmatprep.subr.bf16.mxu0 0
    %1878 = vmatpush1.bf16.msra.mxu0 0
    %1879 = vmatprep.subr.bf16.mxu0 0
    %1880 = vmatpush1.bf16.msra.mxu0 0
    %1881 = vmatprep.subr.bf16.mxu0 0
    %1882 = vmatpush1.bf16.msra.mxu0 0
    %1883 = vmatprep.subr.bf16.mxu0 0
    %1884 = vmatpush1.bf16.msra.mxu0 0
    %1885 = vmatprep.subr.bf16.mxu0 0
    %1886 = vmatpush1.bf16.msra.mxu0 0
    %1887 = vmatprep.subr.bf16.mxu0 0
    %1888 = vmatpush1.bf16.msra.mxu0 0
    %1889 = vmatprep.subr.bf16.mxu0 0
    %1890 = vmatpush1.bf16.msra.mxu0 0
    %1891 = vmatprep.subr.bf16.mxu0 0
    %1892 = vmatpush1.bf16.msra.mxu0 0
    %1893 = vmatprep.subr.bf16.mxu0 0
    %1894 = vmatpush1.bf16.msra.mxu0 0
    %1895 = vmatprep.mubr.bf16.mxu0 0
    %1896 = vmatmul.mubr.bf16.gmra.mrb[0].mxu0 %v1858
    %v1897 = vpop.f32.mrb[0].mxu0
    %v1898 = vadd.f32 0.0, %v1897
    %v1899 = vpop.f32.mrb[0].mxu0
    %v1900 = vpop.f32.mrb[0].mxu0
    %v1901 = vadd.f32 0.0, %v1900
    %v1902 = vpop.f32.mrb[0].mxu0
    %1903 = vdwg.mxu0
    %v1904 = vadd.f32 %v1719, %v1898
    %v1905 = vadd.f32 %v1722, %v1901
    %1906 = vrot.lane.b32.xlu0 %v1369, 104
    %v1907 = vpop.permute.xlu0 %1906
    %1908 = vrot.lane.b32.xlu0 %v1370, 104
    %v1909 = vpop.permute.xlu0 %1908
    %1910 = vrot.lane.b32.xlu0 %v1371, 104
    %v1911 = vpop.permute.xlu0 %1910
    %v1913 = vsel %vm268, %v1907, 0
    %v1916 = vsel %vm268, %v1909, 0
    %v1919 = vsel %vm268, %v1911, 0
    %1921 = vmatprep.subr.bf16.mxu0 0
    %1922 = vmatpush1.bf16.xpose.msra.mxu0 %v1916
    %1923 = vmatprep.subr.bf16.mxu0 0
    %1924 = vmatpush1.bf16.xpose.msra.mxu0 %v1919
    %1925 = vmatprep.subr.bf16.mxu0 0
    %1926 = vmatpush1.bf16.xpose.msra.mxu0 0
    %1927 = vmatprep.subr.bf16.mxu0 0
    %1928 = vmatpush1.bf16.xpose.msra.mxu0 0
    %1929 = vmatprep.subr.bf16.mxu0 0
    %1930 = vmatpush1.bf16.xpose.msra.mxu0 0
    %1931 = vmatprep.subr.bf16.mxu0 0
    %1932 = vmatpush1.bf16.xpose.msra.mxu0 0
    %1933 = vmatprep.subr.bf16.mxu0 0
    %1934 = vmatpush1.bf16.xpose.msra.mxu0 0
    %1935 = vmatprep.subr.bf16.mxu0 0
    %1936 = vmatpush1.bf16.xpose.msra.mxu0 0
    %1937 = vmatprep.subr.bf16.mxu0 0
    %1938 = vmatpush1.bf16.xpose.msra.mxu0 0
    %1939 = vmatprep.subr.bf16.mxu0 0
    %1940 = vmatpush1.bf16.xpose.msra.mxu0 0
    %1941 = vmatprep.subr.bf16.mxu0 0
    %1942 = vmatpush1.bf16.xpose.msra.mxu0 0
    %1943 = vmatprep.subr.bf16.mxu0 0
    %1944 = vmatpush1.bf16.xpose.msra.mxu0 0
    %1945 = vmatprep.subr.bf16.mxu0 0
    %1946 = vmatpush1.bf16.xpose.msra.mxu0 0
    %1947 = vmatprep.subr.bf16.mxu0 0
    %1948 = vmatpush1.bf16.xpose.msra.mxu0 0
    %1949 = vmatprep.subr.bf16.mxu0 0
    %1950 = vmatpush1.bf16.xpose.msra.mxu0 0
    %1951 = vmatprep.subr.bf16.mxu0 0
    %1952 = vmatpush1.bf16.xpose.msra.mxu0 0
    %1953 = vmatprep.mubr.bf16.mxu0 0
    %1954 = vmatmul.mubr.bf16.gmra.mrb[0].mxu0 %v1913
    %v1955 = vpop.f32.mrb[0].mxu0
    %v1956 = vadd.f32 %v62, %v1955
    %v1957 = vpop.f32.mrb[0].mxu0
    %v1958 = vpop.f32.mrb[0].mxu0
    %v1959 = vadd.f32 %v63, %v1958
    %v1960 = vpop.f32.mrb[0].mxu0
    %1961 = vdwg.mxu0
    %v1962 = vsel %vm88, %v1956, -inf
    %1963 = vmax.xlane.f32.xlu0 %v1962
    %v1964 = vpop.xlane.xlu0 %1963
    %v1965 = vsel %vm88, %v1959, -inf
    %1966 = vmax.xlane.f32.xlu0 %v1965
    %v1967 = vpop.xlane.xlu0 %1966
    %v1968 = vsub.f32 %v1956, %v1964
    %v1969 = vsub.f32 %v1959, %v1967
    %v1970 = vmul.f32 %v1968, 1.442695
    %v1971 = vpow.pop %v1970
    %v1972 = vmul.f32 %v1969, 1.442695
    %v1973 = vpow.pop %v1972
    %v1974 = vsel %vm88, %v1971, 0.0
    %1975 = vadd.xlane.f32.xlu0 %v1974
    %v1976 = vpop.xlane.xlu0 %1975
    %v1977 = vsel %vm88, %v1973, 0.0
    %1978 = vadd.xlane.f32.xlu0 %v1977
    %v1979 = vpop.xlane.xlu0 %1978
    %v1980 = vrcp.pop %v1976
    %v1981 = vrcp.pop %v1979
    %v1982 = vmul.f32 %v1971, %v1980
    %v1983 = vmul.f32 %v1973, %v1981
    %v1984 = vpack.c.bf16 %v1983, %v1982
    %1985 = vrot.lane.b32.xlu0 %v1372, 104
    %v1986 = vpop.permute.xlu0 %1985
    %1987 = vrot.lane.b32.xlu0 %v1373, 104
    %v1988 = vpop.permute.xlu0 %1987
    %v1992 = vsel %vm88, %v1984, 0
    %1994 = vmatprep.subr.bf16.mxu0 0
    %1995 = vmatpush1.bf16.msra.mxu0 %v1986
    %1996 = vmatprep.subr.bf16.mxu0 0
    %1997 = vmatpush1.bf16.msra.mxu0 %v1988
    %1998 = vmatprep.subr.bf16.mxu0 0
    %1999 = vmatpush1.bf16.msra.mxu0 0
    %2000 = vmatprep.subr.bf16.mxu0 0
    %2001 = vmatpush1.bf16.msra.mxu0 0
    %2002 = vmatprep.subr.bf16.mxu0 0
    %2003 = vmatpush1.bf16.msra.mxu0 0
    %2004 = vmatprep.subr.bf16.mxu0 0
    %2005 = vmatpush1.bf16.msra.mxu0 0
    %2006 = vmatprep.subr.bf16.mxu0 0
    %2007 = vmatpush1.bf16.msra.mxu0 0
    %2008 = vmatprep.subr.bf16.mxu0 0
    %2009 = vmatpush1.bf16.msra.mxu0 0
    %2010 = vmatprep.subr.bf16.mxu0 0
    %2011 = vmatpush1.bf16.msra.mxu0 0
    %2012 = vmatprep.subr.bf16.mxu0 0
    %2013 = vmatpush1.bf16.msra.mxu0 0
    %2014 = vmatprep.subr.bf16.mxu0 0
    %2015 = vmatpush1.bf16.msra.mxu0 0
    %2016 = vmatprep.subr.bf16.mxu0 0
    %2017 = vmatpush1.bf16.msra.mxu0 0
    %2018 = vmatprep.subr.bf16.mxu0 0
    %2019 = vmatpush1.bf16.msra.mxu0 0
    %2020 = vmatprep.subr.bf16.mxu0 0
    %2021 = vmatpush1.bf16.msra.mxu0 0
    %2022 = vmatprep.subr.bf16.mxu0 0
    %2023 = vmatpush1.bf16.msra.mxu0 0
    %2024 = vmatprep.subr.bf16.mxu0 0
    %2025 = vmatpush1.bf16.msra.mxu0 0
    %2026 = vmatprep.mubr.bf16.mxu0 0
    %2027 = vmatmul.mubr.bf16.gmra.mrb[0].mxu0 %v1992
    %v2028 = vpop.f32.mrb[0].mxu0
    %v2029 = vadd.f32 0.0, %v2028
    %v2030 = vpop.f32.mrb[0].mxu0
    %v2031 = vpop.f32.mrb[0].mxu0
    %v2032 = vadd.f32 0.0, %v2031
    %v2033 = vpop.f32.mrb[0].mxu0
    %2034 = vdwg.mxu0
    %v2035 = vpack.c.bf16 %v2032, %v2029
    %s2036 = scalar_lea.vmem %s6, 28
    %v2037 = vld [vmem:[%s2036] sm:$0xf]
    %v2039 = vsel %vm268, %v2035, 0
    %v2042 = vsel %vm516, %v2037, 0
    %2044 = vmatprep.subr.bf16.mxu0 0
    %2045 = vmatpush1.bf16.msra.mxu0 %v2042
    %2046 = vmatprep.subr.bf16.mxu0 0
    %2047 = vmatpush1.bf16.msra.mxu0 0
    %2048 = vmatprep.subr.bf16.mxu0 0
    %2049 = vmatpush1.bf16.msra.mxu0 0
    %2050 = vmatprep.subr.bf16.mxu0 0
    %2051 = vmatpush1.bf16.msra.mxu0 0
    %2052 = vmatprep.subr.bf16.mxu0 0
    %2053 = vmatpush1.bf16.msra.mxu0 0
    %2054 = vmatprep.subr.bf16.mxu0 0
    %2055 = vmatpush1.bf16.msra.mxu0 0
    %2056 = vmatprep.subr.bf16.mxu0 0
    %2057 = vmatpush1.bf16.msra.mxu0 0
    %2058 = vmatprep.subr.bf16.mxu0 0
    %2059 = vmatpush1.bf16.msra.mxu0 0
    %2060 = vmatprep.subr.bf16.mxu0 0
    %2061 = vmatpush1.bf16.msra.mxu0 0
    %2062 = vmatprep.subr.bf16.mxu0 0
    %2063 = vmatpush1.bf16.msra.mxu0 0
    %2064 = vmatprep.subr.bf16.mxu0 0
    %2065 = vmatpush1.bf16.msra.mxu0 0
    %2066 = vmatprep.subr.bf16.mxu0 0
    %2067 = vmatpush1.bf16.msra.mxu0 0
    %2068 = vmatprep.subr.bf16.mxu0 0
    %2069 = vmatpush1.bf16.msra.mxu0 0
    %2070 = vmatprep.subr.bf16.mxu0 0
    %2071 = vmatpush1.bf16.msra.mxu0 0
    %2072 = vmatprep.subr.bf16.mxu0 0
    %2073 = vmatpush1.bf16.msra.mxu0 0
    %2074 = vmatprep.subr.bf16.mxu0 0
    %2075 = vmatpush1.bf16.msra.mxu0 0
    %2076 = vmatprep.mubr.bf16.mxu0 0
    %2077 = vmatmul.mubr.bf16.gmra.mrb[0].mxu0 %v2039
    %v2078 = vpop.f32.mrb[0].mxu0
    %v2079 = vadd.f32 0.0, %v2078
    %v2080 = vpop.f32.mrb[0].mxu0
    %v2081 = vpop.f32.mrb[0].mxu0
    %v2082 = vadd.f32 0.0, %v2081
    %v2083 = vpop.f32.mrb[0].mxu0
    %2084 = vdwg.mxu0
    %v2085 = vadd.f32 %v1904, %v2079
    %v2086 = vadd.f32 %v1905, %v2082
    %s2087 = scalar_lea.vmem %s5, 7
    %v2088 = vld [vmem:[%s2087] sm:$0x1]
    %v2090 = vlaneseq
    %v2091 = vshrl.u32 %v2090, 7
    %v2092 = vsub.s32 0, %v2091
    %v2093 = vrot.slane %v2088, %v2092
    %v2095 = vadd.f32 %v2085, %v2093
    %v2096 = vadd.f32 %v2086, %v2093
    %v2097 = vpack.c.bf16 %v2096, %v2095
    %s2098 = scalar_lea.vmem %s11, 16
    %v2099 = vld [vmem:[%s2098] sm:$0xf]
    %v2100 = vld [vmem:[%s2098 + $0x4] sm:$0xf]
    %v2101 = vld [vmem:[%s2098 + $0x8] sm:$0xf]
    %v2102 = vld [vmem:[%s2098 + $0xc] sm:$0xf]
    %s2103 = scalar_lea.vmem %s12, 1
    %v2104 = vld [vmem:[%s2103] sm:$0x1]
    %v2106 = vlaneseq
    %v2107 = vshrl.u32 %v2106, 7
    %v2108 = vsub.s32 0, %v2107
    %v2109 = vrot.slane %v2104, %v2108
    %v2115 = vunpack.c.l.b16 %v2099
    %v2116 = vunpack.c.l.b16 %v2100
    %v2117 = vunpack.c.l.b16 %v2101
    %v2118 = vunpack.c.l.b16 %v2102
    %v2119 = vpack.c.b16 %v2116, %v2115
    %v2120 = vpack.c.b16 %v2118, %v2117
    %v2124 = vsel %vm88, %v2097, 0
    %2126 = vmatprep.subr.bf16.mxu0 0
    %2127 = vmatpush1.bf16.msra.mxu0 %v2119
    %2128 = vmatprep.subr.bf16.mxu0 0
    %2129 = vmatpush1.bf16.msra.mxu0 %v2120
    %2130 = vmatprep.subr.bf16.mxu0 0
    %2131 = vmatpush1.bf16.msra.mxu0 0
    %2132 = vmatprep.subr.bf16.mxu0 0
    %2133 = vmatpush1.bf16.msra.mxu0 0
    %2134 = vmatprep.subr.bf16.mxu0 0
    %2135 = vmatpush1.bf16.msra.mxu0 0
    %2136 = vmatprep.subr.bf16.mxu0 0
    %2137 = vmatpush1.bf16.msra.mxu0 0
    %2138 = vmatprep.subr.bf16.mxu0 0
    %2139 = vmatpush1.bf16.msra.mxu0 0
    %2140 = vmatprep.subr.bf16.mxu0 0
    %2141 = vmatpush1.bf16.msra.mxu0 0
    %2142 = vmatprep.subr.bf16.mxu0 0
    %2143 = vmatpush1.bf16.msra.mxu0 0
    %2144 = vmatprep.subr.bf16.mxu0 0
    %2145 = vmatpush1.bf16.msra.mxu0 0
    %2146 = vmatprep.subr.bf16.mxu0 0
    %2147 = vmatpush1.bf16.msra.mxu0 0
    %2148 = vmatprep.subr.bf16.mxu0 0
    %2149 = vmatpush1.bf16.msra.mxu0 0
    %2150 = vmatprep.subr.bf16.mxu0 0
    %2151 = vmatpush1.bf16.msra.mxu0 0
    %2152 = vmatprep.subr.bf16.mxu0 0
    %2153 = vmatpush1.bf16.msra.mxu0 0
    %2154 = vmatprep.subr.bf16.mxu0 0
    %2155 = vmatpush1.bf16.msra.mxu0 0
    %2156 = vmatprep.subr.bf16.mxu0 0
    %2157 = vmatpush1.bf16.msra.mxu0 0
    %2158 = vmatprep.mubr.bf16.mxu0 0
    %2159 = vmatmul.mubr.bf16.gmra.mrb[0].mxu0 %v2124
    %v2160 = vpop.f32.mrb[0].mxu0
    %v2161 = vadd.f32 %v2109, %v2160
    %v2162 = vpop.f32.mrb[0].mxu0
    %v2163 = vpop.f32.mrb[0].mxu0
    %v2164 = vadd.f32 %v2109, %v2163
    %v2165 = vpop.f32.mrb[0].mxu0
    %2166 = vdwg.mxu0
    %v2167 = vmax.f32 %v2161, 0.0
    %v2168 = vmax.f32 %v2164, 0.0
    %v2169 = vpack.c.bf16 %v2168, %v2167
    %s2170 = scalar_lea.vmem %s13, 8
    %v2171 = vld [vmem:[%s2170] sm:$0xf]
    %v2172 = vld [vmem:[%s2170 + $0x4] sm:$0xf]
    %s2173 = scalar_lea.vmem %s14, 3
    %v2174 = vld [vmem:[%s2173] sm:$0x1]
    %v2176 = vlaneseq
    %v2177 = vshrl.u32 %v2176, 7
    %v2178 = vsub.s32 0, %v2177
    %v2179 = vrot.slane %v2174, %v2178
    %v2183 = vunpack.c.l.b16 %v2171
    %v2184 = vunpack.c.l.b16 %v2172
    %v2185 = vpack.c.b16 %v2184, %v2183
    %v2188 = vsel %vm316, %v2169, 0
    %2190 = vmatprep.subr.bf16.mxu0 0
    %2191 = vmatpush1.bf16.msra.mxu0 %v2185
    %2192 = vmatprep.subr.bf16.mxu0 0
    %2193 = vmatpush1.bf16.msra.mxu0 0
    %2194 = vmatprep.subr.bf16.mxu0 0
    %2195 = vmatpush1.bf16.msra.mxu0 0
    %2196 = vmatprep.subr.bf16.mxu0 0
    %2197 = vmatpush1.bf16.msra.mxu0 0
    %2198 = vmatprep.subr.bf16.mxu0 0
    %2199 = vmatpush1.bf16.msra.mxu0 0
    %2200 = vmatprep.subr.bf16.mxu0 0
    %2201 = vmatpush1.bf16.msra.mxu0 0
    %2202 = vmatprep.subr.bf16.mxu0 0
    %2203 = vmatpush1.bf16.msra.mxu0 0
    %2204 = vmatprep.subr.bf16.mxu0 0
    %2205 = vmatpush1.bf16.msra.mxu0 0
    %2206 = vmatprep.subr.bf16.mxu0 0
    %2207 = vmatpush1.bf16.msra.mxu0 0
    %2208 = vmatprep.subr.bf16.mxu0 0
    %2209 = vmatpush1.bf16.msra.mxu0 0
    %2210 = vmatprep.subr.bf16.mxu0 0
    %2211 = vmatpush1.bf16.msra.mxu0 0
    %2212 = vmatprep.subr.bf16.mxu0 0
    %2213 = vmatpush1.bf16.msra.mxu0 0
    %2214 = vmatprep.subr.bf16.mxu0 0
    %2215 = vmatpush1.bf16.msra.mxu0 0
    %2216 = vmatprep.subr.bf16.mxu0 0
    %2217 = vmatpush1.bf16.msra.mxu0 0
    %2218 = vmatprep.subr.bf16.mxu0 0
    %2219 = vmatpush1.bf16.msra.mxu0 0
    %2220 = vmatprep.subr.bf16.mxu0 0
    %2221 = vmatpush1.bf16.msra.mxu0 0
    %2222 = vmatprep.mubr.bf16.mxu0 0
    %2223 = vmatmul.mubr.bf16.gmra.mrb[0].mxu0 %v2188
    %v2224 = vpop.f32.mrb[0].mxu0
    %v2225 = vadd.f32 %v2179, %v2224
    %v2226 = vpop.f32.mrb[0].mxu0
    %v2227 = vpop.f32.mrb[0].mxu0
    %v2228 = vadd.f32 %v2179, %v2227
    %v2229 = vpop.f32.mrb[0].mxu0
    %2230 = vdwg.mxu0
    %v2231 = vadd.f32 %v2225, %v2095
    %v2232 = vadd.f32 %v2228, %v2096
    %v2233 = vadd.f32 %v1143, %v2231
    %v2234 = vadd.f32 %v1144, %v2232
    %v2235 = vsel %vm88, %v2233, 0.0
    %2236 = vadd.xlane.f32.xlu0 %v2235
    %v2237 = vpop.xlane.xlu0 %2236
    %v2238 = vsel %vm88, %v2234, 0.0
    %2239 = vadd.xlane.f32.xlu0 %v2238
    %v2240 = vpop.xlane.xlu0 %2239
    %v2241 = vmul.f32 %v2237, %v1104
    %v2242 = vmul.f32 %v2240, %v1104
    %v2243 = vsub.f32 %v2233, %v2241
    %v2244 = vsub.f32 %v2234, %v2242
    %v2245 = vmul.f32 %v2243, %v2243
    %v2246 = vmul.f32 %v2244, %v2244
    %v2247 = vsel %vm88, %v2245, 0.0
    %2248 = vadd.xlane.f32.xlu0 %v2247
    %v2249 = vpop.xlane.xlu0 %2248
    %v2250 = vsel %vm88, %v2246, 0.0
    %2251 = vadd.xlane.f32.xlu0 %v2250
    %v2252 = vpop.xlane.xlu0 %2251
    %v2253 = vmul.f32 %v2249, %v1104
    %v2254 = vmul.f32 %v2252, %v1104
    %v2255 = vadd.f32 %v2253, 1e-05
    %v2256 = vadd.f32 %v2254, 1e-05
    %v2257 = vrsqrt.pop %v2255
    %v2258 = vrsqrt.pop %v2256
    %v2259 = vmul.f32 %v2243, %v2257
    %v2260 = vmul.f32 %v2244, %v2258
    %s2261 = scalar_lea.vmem %s14, 4
    %v2262 = vld [vmem:[%s2261] sm:$0x1]
    %v2264 = vlaneseq
    %v2265 = vshrl.u32 %v2264, 7
    %v2266 = vsub.s32 0, %v2265
    %v2267 = vrot.slane %v2262, %v2266
    %v2269 = vmul.f32 %v2259, %v2267
    %v2270 = vmul.f32 %v2260, %v2267
    %s2271 = scalar_lea.vmem %s14, 5
    %v2272 = vld [vmem:[%s2271] sm:$0x1]
    %v2274 = vlaneseq
    %v2275 = vshrl.u32 %v2274, 7
    %v2276 = vsub.s32 0, %v2275
    %v2277 = vrot.slane %v2272, %v2276
    %v2279 = vadd.f32 %v2269, %v2277
    %v2280 = vadd.f32 %v2270, %v2277
    %v2281 = vpack.c.bf16 %v2280, %v2279
    %v2282 = vld [vmem:[%s7] sm:$0xf]
    %v2283 = vld [vmem:[%s7 + $0x4] sm:$0xf]
    %v2284 = vld [vmem:[%s7 + $0x8] sm:$0xf]
    %v2285 = vld [vmem:[%s7 + $0xc] sm:$0xf]
    %v2286 = vld [vmem:[%s8] sm:$0x1]
    %v2288 = vlaneseq
    %v2289 = vshrl.u32 %v2288, 7
    %v2290 = vsub.s32 0, %v2289
    %v2291 = vrot.slane %v2286, %v2290
    %v2297 = vunpack.c.l.b16 %v2282
    %v2298 = vunpack.c.l.b16 %v2283
    %v2299 = vunpack.c.l.b16 %v2284
    %v2300 = vunpack.c.l.b16 %v2285
    %v2301 = vpack.c.b16 %v2298, %v2297
    %v2302 = vpack.c.b16 %v2300, %v2299
    %v2306 = vsel %vm88, %v2281, 0
    %2308 = vmatprep.subr.bf16.mxu0 0
    %2309 = vmatpush1.bf16.msra.mxu0 %v2301
    %2310 = vmatprep.subr.bf16.mxu0 0
    %2311 = vmatpush1.bf16.msra.mxu0 %v2302
    %2312 = vmatprep.subr.bf16.mxu0 0
    %2313 = vmatpush1.bf16.msra.mxu0 0
    %2314 = vmatprep.subr.bf16.mxu0 0
    %2315 = vmatpush1.bf16.msra.mxu0 0
    %2316 = vmatprep.subr.bf16.mxu0 0
    %2317 = vmatpush1.bf16.msra.mxu0 0
    %2318 = vmatprep.subr.bf16.mxu0 0
    %2319 = vmatpush1.bf16.msra.mxu0 0
    %2320 = vmatprep.subr.bf16.mxu0 0
    %2321 = vmatpush1.bf16.msra.mxu0 0
    %2322 = vmatprep.subr.bf16.mxu0 0
    %2323 = vmatpush1.bf16.msra.mxu0 0
    %2324 = vmatprep.subr.bf16.mxu0 0
    %2325 = vmatpush1.bf16.msra.mxu0 0
    %2326 = vmatprep.subr.bf16.mxu0 0
    %2327 = vmatpush1.bf16.msra.mxu0 0
    %2328 = vmatprep.subr.bf16.mxu0 0
    %2329 = vmatpush1.bf16.msra.mxu0 0
    %2330 = vmatprep.subr.bf16.mxu0 0
    %2331 = vmatpush1.bf16.msra.mxu0 0
    %2332 = vmatprep.subr.bf16.mxu0 0
    %2333 = vmatpush1.bf16.msra.mxu0 0
    %2334 = vmatprep.subr.bf16.mxu0 0
    %2335 = vmatpush1.bf16.msra.mxu0 0
    %2336 = vmatprep.subr.bf16.mxu0 0
    %2337 = vmatpush1.bf16.msra.mxu0 0
    %2338 = vmatprep.subr.bf16.mxu0 0
    %2339 = vmatpush1.bf16.msra.mxu0 0
    %2340 = vmatprep.mubr.bf16.mxu0 0
    %2341 = vmatmul.mubr.bf16.gmra.mrb[0].mxu0 %v2306
    %v2342 = vpop.f32.mrb[0].mxu0
    %v2343 = vadd.f32 %v2291, %v2342
    %v2344 = vpop.f32.mrb[0].mxu0
    %v2345 = vpop.f32.mrb[0].mxu0
    %v2346 = vadd.f32 %v2291, %v2345
    %v2347 = vpop.f32.mrb[0].mxu0
    %2348 = vdwg.mxu0
    %v2349 = vmax.f32 %v2343, 0.0
    %v2350 = vmax.f32 %v2346, 0.0
    %v2351 = vpack.c.bf16 %v2350, %v2349
    %v2352 = vld [vmem:[%s9] sm:$0xf]
    %v2353 = vld [vmem:[%s9 + $0x4] sm:$0xf]
    %v2354 = vld [vmem:[%s9 + $0x8] sm:$0xf]
    %v2355 = vld [vmem:[%s9 + $0xc] sm:$0xf]
    %v2356 = vld [vmem:[%s9 + $0x10] sm:$0xf]
    %v2357 = vld [vmem:[%s9 + $0x14] sm:$0xf]
    %v2358 = vld [vmem:[%s9 + $0x18] sm:$0xf]
    %v2359 = vld [vmem:[%s9 + $0x1c] sm:$0xf]
    %v2360 = vld [vmem:[%s10] sm:$0x1]
    %v2362 = vlaneseq
    %v2363 = vshrl.u32 %v2362, 7
    %v2364 = vsub.s32 0, %v2363
    %v2365 = vrot.slane %v2360, %v2364
    %v2375 = vunpack.c.l.b16 %v2352
    %v2376 = vunpack.c.l.b16 %v2353
    %v2377 = vunpack.c.l.b16 %v2354
    %v2378 = vunpack.c.l.b16 %v2355
    %v2379 = vunpack.c.l.b16 %v2356
    %v2380 = vunpack.c.l.b16 %v2357
    %v2381 = vunpack.c.l.b16 %v2358
    %v2382 = vunpack.c.l.b16 %v2359
    %v2383 = vpack.c.b16 %v2376, %v2375
    %v2384 = vpack.c.b16 %v2378, %v2377
    %v2385 = vpack.c.b16 %v2380, %v2379
    %v2386 = vpack.c.b16 %v2382, %v2381
    %vm2391 = vcmask 523264
    %v2393 = vsel %vm2391, %v2351, 0
    %2395 = vmatprep.subr.bf16.mxu0 0
    %2396 = vmatpush1.bf16.msra.mxu0 %v2383
    %2397 = vmatprep.subr.bf16.mxu0 0
    %2398 = vmatpush1.bf16.msra.mxu0 %v2384
    %2399 = vmatprep.subr.bf16.mxu0 0
    %2400 = vmatpush1.bf16.msra.mxu0 %v2385
    %2401 = vmatprep.subr.bf16.mxu0 0
    %2402 = vmatpush1.bf16.msra.mxu0 %v2386
    %2403 = vmatprep.subr.bf16.mxu0 0
    %2404 = vmatpush1.bf16.msra.mxu0 0
    %2405 = vmatprep.subr.bf16.mxu0 0
    %2406 = vmatpush1.bf16.msra.mxu0 0
    %2407 = vmatprep.subr.bf16.mxu0 0
    %2408 = vmatpush1.bf16.msra.mxu0 0
    %2409 = vmatprep.subr.bf16.mxu0 0
    %2410 = vmatpush1.bf16.msra.mxu0 0
    %2411 = vmatprep.subr.bf16.mxu0 0
    %2412 = vmatpush1.bf16.msra.mxu0 0
    %2413 = vmatprep.subr.bf16.mxu0 0
    %2414 = vmatpush1.bf16.msra.mxu0 0
    %2415 = vmatprep.subr.bf16.mxu0 0
    %2416 = vmatpush1.bf16.msra.mxu0 0
    %2417 = vmatprep.subr.bf16.mxu0 0
    %2418 = vmatpush1.bf16.msra.mxu0 0
    %2419 = vmatprep.subr.bf16.mxu0 0
    %2420 = vmatpush1.bf16.msra.mxu0 0
    %2421 = vmatprep.subr.bf16.mxu0 0
    %2422 = vmatpush1.bf16.msra.mxu0 0
    %2423 = vmatprep.subr.bf16.mxu0 0
    %2424 = vmatpush1.bf16.msra.mxu0 0
    %2425 = vmatprep.subr.bf16.mxu0 0
    %2426 = vmatpush1.bf16.msra.mxu0 0
    %2427 = vmatprep.mubr.bf16.mxu0 0
    %2428 = vmatmul.mubr.bf16.gmra.mrb[0].mxu0 %v2393
    %v2429 = vpop.f32.mrb[0].mxu0
    %v2430 = vadd.f32 %v2365, %v2429
    %v2431 = vpop.f32.mrb[0].mxu0
    %v2432 = vpop.f32.mrb[0].mxu0
    %v2433 = vadd.f32 %v2365, %v2432
    %v2434 = vpop.f32.mrb[0].mxu0
    %2435 = vdwg.mxu0
    %v2436 = vpack.c.bf16 %v2433, %v2430
    %s2437 = scalar_lea.vmem %s11, 32
    %v2438 = vld [vmem:[%s2437] sm:$0xf]
    %v2439 = vld [vmem:[%s2437 + $0x4] sm:$0xf]
    %v2440 = vld [vmem:[%s2437 + $0x8] sm:$0xf]
    %v2441 = vld [vmem:[%s2437 + $0xc] sm:$0xf]
    %s2442 = scalar_lea.vmem %s12, 2
    %v2443 = vld [vmem:[%s2442] sm:$0x1]
    %v2445 = vlaneseq
    %v2446 = vshrl.u32 %v2445, 7
    %v2447 = vsub.s32 0, %v2446
    %v2448 = vrot.slane %v2443, %v2447
    %v2454 = vunpack.c.l.b16 %v2438
    %v2455 = vunpack.c.l.b16 %v2439
    %v2456 = vunpack.c.l.b16 %v2440
    %v2457 = vunpack.c.l.b16 %v2441
    %v2458 = vpack.c.b16 %v2455, %v2454
    %v2459 = vpack.c.b16 %v2457, %v2456
    %v2463 = vsel %vm88, %v2436, 0
    %2465 = vmatprep.subr.bf16.mxu0 0
    %2466 = vmatpush1.bf16.msra.mxu0 %v2458
    %2467 = vmatprep.subr.bf16.mxu0 0
    %2468 = vmatpush1.bf16.msra.mxu0 %v2459
    %2469 = vmatprep.subr.bf16.mxu0 0
    %2470 = vmatpush1.bf16.msra.mxu0 0
    %2471 = vmatprep.subr.bf16.mxu0 0
    %2472 = vmatpush1.bf16.msra.mxu0 0
    %2473 = vmatprep.subr.bf16.mxu0 0
    %2474 = vmatpush1.bf16.msra.mxu0 0
    %2475 = vmatprep.subr.bf16.mxu0 0
    %2476 = vmatpush1.bf16.msra.mxu0 0
    %2477 = vmatprep.subr.bf16.mxu0 0
    %2478 = vmatpush1.bf16.msra.mxu0 0
    %2479 = vmatprep.subr.bf16.mxu0 0
    %2480 = vmatpush1.bf16.msra.mxu0 0
    %2481 = vmatprep.subr.bf16.mxu0 0
    %2482 = vmatpush1.bf16.msra.mxu0 0
    %2483 = vmatprep.subr.bf16.mxu0 0
    %2484 = vmatpush1.bf16.msra.mxu0 0
    %2485 = vmatprep.subr.bf16.mxu0 0
    %2486 = vmatpush1.bf16.msra.mxu0 0
    %2487 = vmatprep.subr.bf16.mxu0 0
    %2488 = vmatpush1.bf16.msra.mxu0 0
    %2489 = vmatprep.subr.bf16.mxu0 0
    %2490 = vmatpush1.bf16.msra.mxu0 0
    %2491 = vmatprep.subr.bf16.mxu0 0
    %2492 = vmatpush1.bf16.msra.mxu0 0
    %2493 = vmatprep.subr.bf16.mxu0 0
    %2494 = vmatpush1.bf16.msra.mxu0 0
    %2495 = vmatprep.subr.bf16.mxu0 0
    %2496 = vmatpush1.bf16.msra.mxu0 0
    %2497 = vmatprep.mubr.bf16.mxu0 0
    %2498 = vmatmul.mubr.bf16.gmra.mrb[0].mxu0 %v2463
    %v2499 = vpop.f32.mrb[0].mxu0
    %v2500 = vadd.f32 %v2448, %v2499
    %v2501 = vpop.f32.mrb[0].mxu0
    %v2502 = vpop.f32.mrb[0].mxu0
    %v2503 = vadd.f32 %v2448, %v2502
    %v2504 = vpop.f32.mrb[0].mxu0
    %2505 = vdwg.mxu0
    %v2506 = vmax.f32 %v2500, 0.0
    %v2507 = vmax.f32 %v2503, 0.0
    %v2508 = vpack.c.bf16 %v2507, %v2506
    %s2509 = scalar_lea.vmem %s13, 16
    %v2510 = vld [vmem:[%s2509] sm:$0xf]
    %v2511 = vld [vmem:[%s2509 + $0x4] sm:$0xf]
    %s2512 = scalar_lea.vmem %s14, 6
    %v2513 = vld [vmem:[%s2512] sm:$0x1]
    %v2515 = vlaneseq
    %v2516 = vshrl.u32 %v2515, 7
    %v2517 = vsub.s32 0, %v2516
    %v2518 = vrot.slane %v2513, %v2517
    %v2522 = vunpack.c.l.b16 %v2510
    %v2523 = vunpack.c.l.b16 %v2511
    %v2524 = vpack.c.b16 %v2523, %v2522
    %v2527 = vsel %vm316, %v2508, 0
    %2529 = vmatprep.subr.bf16.mxu0 0
    %2530 = vmatpush1.bf16.msra.mxu0 %v2524
    %2531 = vmatprep.subr.bf16.mxu0 0
    %2532 = vmatpush1.bf16.msra.mxu0 0
    %2533 = vmatprep.subr.bf16.mxu0 0
    %2534 = vmatpush1.bf16.msra.mxu0 0
    %2535 = vmatprep.subr.bf16.mxu0 0
    %2536 = vmatpush1.bf16.msra.mxu0 0
    %2537 = vmatprep.subr.bf16.mxu0 0
    %2538 = vmatpush1.bf16.msra.mxu0 0
    %2539 = vmatprep.subr.bf16.mxu0 0
    %2540 = vmatpush1.bf16.msra.mxu0 0
    %2541 = vmatprep.subr.bf16.mxu0 0
    %2542 = vmatpush1.bf16.msra.mxu0 0
    %2543 = vmatprep.subr.bf16.mxu0 0
    %2544 = vmatpush1.bf16.msra.mxu0 0
    %2545 = vmatprep.subr.bf16.mxu0 0
    %2546 = vmatpush1.bf16.msra.mxu0 0
    %2547 = vmatprep.subr.bf16.mxu0 0
    %2548 = vmatpush1.bf16.msra.mxu0 0
    %2549 = vmatprep.subr.bf16.mxu0 0
    %2550 = vmatpush1.bf16.msra.mxu0 0
    %2551 = vmatprep.subr.bf16.mxu0 0
    %2552 = vmatpush1.bf16.msra.mxu0 0
    %2553 = vmatprep.subr.bf16.mxu0 0
    %2554 = vmatpush1.bf16.msra.mxu0 0
    %2555 = vmatprep.subr.bf16.mxu0 0
    %2556 = vmatpush1.bf16.msra.mxu0 0
    %2557 = vmatprep.subr.bf16.mxu0 0
    %2558 = vmatpush1.bf16.msra.mxu0 0
    %2559 = vmatprep.subr.bf16.mxu0 0
    %2560 = vmatpush1.bf16.msra.mxu0 0
    %2561 = vmatprep.mubr.bf16.mxu0 0
    %2562 = vmatmul.mubr.bf16.gmra.mrb[0].mxu0 %v2527
    %v2563 = vpop.f32.mrb[0].mxu0
    %v2564 = vadd.f32 %v2518, %v2563
    %v2565 = vpop.f32.mrb[0].mxu0
    %v2566 = vpop.f32.mrb[0].mxu0
    %v2567 = vadd.f32 %v2518, %v2566
    %v2568 = vpop.f32.mrb[0].mxu0
    %2569 = vdwg.mxu0
    %v2570 = vadd.f32 %v2564, %v2430
    %v2571 = vadd.f32 %v2567, %v2433
    %v2572 = vadd.f32 %v2279, %v2570
    %v2573 = vadd.f32 %v2280, %v2571
    %v2574 = vsel %vm88, %v2572, 0.0
    %2575 = vadd.xlane.f32.xlu0 %v2574
    %v2576 = vpop.xlane.xlu0 %2575
    %v2577 = vsel %vm88, %v2573, 0.0
    %2578 = vadd.xlane.f32.xlu0 %v2577
    %v2579 = vpop.xlane.xlu0 %2578
    %v2580 = vmul.f32 %v2576, %v1104
    %v2581 = vmul.f32 %v2579, %v1104
    %v2582 = vsub.f32 %v2572, %v2580
    %v2583 = vsub.f32 %v2573, %v2581
    %v2584 = vmul.f32 %v2582, %v2582
    %v2585 = vmul.f32 %v2583, %v2583
    %v2586 = vsel %vm88, %v2584, 0.0
    %2587 = vadd.xlane.f32.xlu0 %v2586
    %v2588 = vpop.xlane.xlu0 %2587
    %v2589 = vsel %vm88, %v2585, 0.0
    %2590 = vadd.xlane.f32.xlu0 %v2589
    %v2591 = vpop.xlane.xlu0 %2590
    %v2592 = vmul.f32 %v2588, %v1104
    %v2593 = vmul.f32 %v2591, %v1104
    %v2594 = vadd.f32 %v2592, 1e-05
    %v2595 = vadd.f32 %v2593, 1e-05
    %v2596 = vrsqrt.pop %v2594
    %v2597 = vrsqrt.pop %v2595
    %v2598 = vmul.f32 %v2582, %v2596
    %v2599 = vmul.f32 %v2583, %v2597
    %s2600 = scalar_lea.vmem %s14, 7
    %v2601 = vld [vmem:[%s2600] sm:$0x1]
    %v2603 = vlaneseq
    %v2604 = vshrl.u32 %v2603, 7
    %v2605 = vsub.s32 0, %v2604
    %v2606 = vrot.slane %v2601, %v2605
    %v2608 = vmul.f32 %v2598, %v2606
    %v2609 = vmul.f32 %v2599, %v2606
    %s2610 = scalar_lea.vmem %s14, 8
    %v2611 = vld [vmem:[%s2610] sm:$0x1]
    %v2613 = vlaneseq
    %v2614 = vshrl.u32 %v2613, 7
    %v2615 = vsub.s32 0, %v2614
    %v2616 = vrot.slane %v2611, %v2615
    %v2618 = vadd.f32 %v2608, %v2616
    %v2619 = vadd.f32 %v2609, %v2616
    %2620 = vst.msk [vmem:[#allocation2] sm:$0xff] %vm88, %v2618
    %2621 = vst.msk [vmem:[#allocation2 + $0x8] sm:$0xff] %vm88, %v2619
    // Predicated region
    $region62: #{pallas_forward.1} parent=1 // pred_check
      _
    $region63: #{pallas_forward.1} parent=1 // pred_check_branch
      %2623 = sbr.rel (0) target = $region65
    $region64: #{pallas_forward.1} parent=1 // pred_region
      %s2625 = ssub.s32 256, 256
      %2626 = vsyncadd [#allocation3], %s2625
      %s2627 = sshll.u32 [#allocation2], 4
      %s2628 = int_to_ptr.vmem [resolvable:$true] %s2627
      %2633 = dma.vmem_to_hbm [thread:$0]  %s2628, 256, %s15, [#allocation3], 128, 128, 8
    $region65: #{pallas_forward.1} parent=1 // pred_fallthru
      _
    // Predicated region
    $region66: #{pallas_forward.1} parent=1 // pred_check
      _
    $region67: #{pallas_forward.1} parent=1 // pred_check_branch
      %2635 = sbr.rel (0) target = $region69
    $region68: #{pallas_forward.1} parent=1 // pred_region
      %2636 = dma.done [#allocation3], 256
    $region69: #{pallas_forward.1} parent=1 // pred_fallthru
      _
    %2637 = vsyncpa [#allocation3], 1

</llo_original>
